<compile_context>
chip_gen: v7x
topology: tpu7x:2x2x1
jax: 0.10.0
libtpu: 0.0.40
codegen_flags: <defaults>
</compile_context>

<pallas_src>
import jax
import jax.numpy as jnp
import numpy as np
from jax.experimental import pallas as pl
from jax.experimental.pallas import tpu as pltpu

B = 2                 # batch (test size)
H, W = 16, 8          # spatial size fixed by the module: 256*H*W must equal 128*256
HW = H * W            # 128 spatial positions
C1 = 256              # conv1 / conv2 output channels
KIN = HW * C1         # 32768 = Linear in_features
OUT = 128             # Linear out_features
TP = 32               # spatial positions per grid step -> (32,256,128) bf16 = 2 MiB tile
KT = HW // TP         # 4 grid steps (reduction axis)


def prepare_weights(w_conv1, w_conv2, w_fc):
    """One-time weight preprocessing (weight-load time, NOT per forward).

    w_conv1 (256,1,3,3), w_conv2 (256,256,1,1), w_fc (128, 32768) in PyTorch layouts.
    Returns:
      w_comb : (9, 256) bf16      conv1 folded with conv2 (exact linear composition)
      w_fc_r : (128, 256, 128) bf16 fc weight as [p, c, out]; torch flat index is
               c*HW + p, so w_fc_r[p, c, n] = w_fc[n, c*HW + p].
    """
    w1r = w_conv1.reshape(C1, 9).T.astype(jnp.float32)        # (9, 256), tap t = dh*3+dw
    w2t = w_conv2.reshape(C1, C1).T.astype(jnp.float32)       # (c_in, c_out)
    w_comb = (w1r @ w2t).astype(jnp.bfloat16)                 # (9, 256)
    w_fc_r = (w_fc.reshape(OUT, C1, HW).transpose(2, 1, 0)    # (HW, C1, OUT)
              .astype(jnp.bfloat16))
    return w_comb, w_fc_r


def _make_kernel(b):
    def kernel(patches_ref, wcomb_ref, wfc_ref, out_ref, acc_ref):
        # patches_ref: (TP*b, 9)  bf16 im2col rows for this step, row order p*b + bi
        # wcomb_ref  : (9, C1)    bf16 fused conv1@conv2 weight (DMA'd once)
        # wfc_ref    : (TP, C1, OUT) bf16 fc-weight tile for these TP spatial rows
        # out_ref    : (b, OUT)   f32 final sigmoid output (written at last step)
        # acc_ref    : (b, OUT)   f32 logit accumulator (resident across steps)
        k = pl.program_id(0)

        @pl.when(k == 0)
        def _():
            acc_ref[...] = jnp.zeros_like(acc_ref)

        # conv1∘conv2 for this step's TP spatial positions (both batches at once).
        h2 = jnp.dot(patches_ref[...], wcomb_ref[...],
                     preferred_element_type=jnp.float32).astype(jnp.bfloat16)  # (TP*b, C1)

        # fc contribution of these TP positions: for each p, (b, C1) @ (C1, OUT).
        # (The MXU cost is dominated by weight ingestion, identical to one big dot.)
        partial = jnp.zeros((b, OUT), jnp.float32)
        for p in range(TP):
            lhs = h2[p * b:(p + 1) * b, :]                     # (b, C1) static slice
            partial = partial + jnp.dot(lhs, wfc_ref[p],
                                        preferred_element_type=jnp.float32)
        acc_ref[...] += partial

        @pl.when(k == pl.num_programs(0) - 1)
        def _():
            logits = acc_ref[...]
            out_ref[...] = (1.0 / (1.0 + jnp.exp(-logits))).astype(out_ref.dtype)

    return kernel


@jax.jit
def channel_attention_forward(x, w_comb, w_fc_r):
    """x: (B,1,16,8) NCHW f32; w_comb/w_fc_r from prepare_weights()."""
    b = x.shape[0]

    # --- im2col for the 3x3 / pad=1, single-input-channel conv (tiny; done in XLA) ---
    xp = jnp.pad(x[:, 0].astype(jnp.float32), ((0, 0), (1, 1), (1, 1)))   # (b, 18, 10)
    patches = jnp.stack(
        [xp[:, dh:dh + H, dw:dw + W] for dh in range(3) for dw in range(3)],
        axis=-1)                                                          # (b, 16, 8, 9)
    # Row order p*b + bi so each spatial position's b rows are contiguous per K-tile.
    patches = (patches.reshape(b, HW, 9).transpose(1, 0, 2)
               .reshape(HW * b, 9).astype(jnp.bfloat16))                  # (HW*b, 9)

    out = pl.pallas_call(
        _make_kernel(b),
        out_shape=jax.ShapeDtypeStruct((b, OUT), jnp.float32),
        grid_spec=pltpu.PrefetchScalarGridSpec(
            num_scalar_prefetch=0,
            grid=(KT,),
            in_specs=[
                pl.BlockSpec((TP * b, 9), lambda k: (k, 0)),       # patch rows of tile k
                pl.BlockSpec((9, C1), lambda k: (0, 0)),           # fused conv weight
                pl.BlockSpec((TP, C1, OUT), lambda k: (k, 0, 0)),  # 2 MiB fc weight tile
            ],
            out_specs=pl.BlockSpec((b, OUT), lambda k: (0, 0)),
            scratch_shapes=[pltpu.VMEM((b, OUT), jnp.float32)],
        ),
        compiler_params=pltpu.CompilerParams(
            dimension_semantics=("arbitrary",)),
    )(patches, w_comb, w_fc_r)

    return out.reshape(b, OUT, 1)


def _reference(x, w_conv1, w_conv2, w_fc):
    # pure-JAX f32 reference using the original (unprocessed) PyTorch-layout weights
    b = x.shape[0]
    xp = jnp.pad(x[:, 0], ((0, 0), (1, 1), (1, 1)))
    patches = jnp.stack(
        [xp[:, dh:dh + H, dw:dw + W] for dh in range(3) for dw in range(3)],
        axis=-1).reshape(b, HW, 9)
    h1 = jnp.einsum('bpk,ck->bpc', patches, w_conv1.reshape(C1, 9))
    h2 = jnp.einsum('bpc,dc->bpd', h1, w_conv2.reshape(C1, C1))
    flat = h2.transpose(0, 2, 1).reshape(b, KIN)        # torch NCHW flatten
    logits = flat @ w_fc.T
    return jax.nn.sigmoid(logits).reshape(b, OUT, 1)


if __name__ == "__main__":
    key = jax.random.PRNGKey(0)
    k1, k2, k3, k4 = jax.random.split(key, 4)

    # deterministic synthetic parameters at the shapes fixed by the module __init__
    x = jax.random.normal(k1, (B, 1, H, W), dtype=jnp.float32)
    w_conv1 = jax.random.normal(k2, (C1, 1, 3, 3), jnp.float32) * np.sqrt(2.0 / (C1 * 9))
    w_conv2 = jax.random.normal(k3, (C1, C1, 1, 1), jnp.float32) * np.sqrt(2.0 / C1)
    w_fc = jax.random.normal(k4, (OUT, KIN), jnp.float32) * np.sqrt(2.0 / KIN)

    # one-time weight preprocessing (outside the per-call forward)
    w_comb, w_fc_r = prepare_weights(w_conv1, w_conv2, w_fc)
    w_comb = jax.block_until_ready(w_comb)
    w_fc_r = jax.block_until_ready(w_fc_r)

    out = jax.block_until_ready(channel_attention_forward(x, w_comb, w_fc_r))
    ref = _reference(x, w_conv1, w_conv2, w_fc)

    assert out.shape == (B, OUT, 1)
    np.testing.assert_allclose(np.asarray(out), np.asarray(ref), rtol=1e-2, atol=1e-2)
    # NOTE: avg_pool/max_pool/fc1/fc2/bn1/bn2/bn3/softmax/relu/tanh are constructed in
    # __init__ but never executed in forward(layer=0), so they are intentionally omitted.
    print("KERNEL_OK")
</pallas_src>

<mosaic_0001>
module attributes {stable_mosaic.version = 11 : i64} {
  func.func @kernel(%arg0: i32, %arg1: memref<64x9xbf16, #tpu.memory_space<vmem>>, %arg2: memref<9x256xbf16, #tpu.memory_space<vmem>>, %arg3: memref<32x256x128xbf16, #tpu.memory_space<vmem>>, %arg4: memref<2x128xf32, #tpu.memory_space<vmem>>, %arg5: memref<2x128xf32, #tpu.memory_space<vmem>>) attributes {dimension_semantics = [#tpu.dimension_semantics<arbitrary>], iteration_bounds = array<i64: 4>, scalar_prefetch = 0 : i64, scratch_operands = 1 : i64, tpu.core_type = #tpu.core_type<tc>, window_params = [{transform_indices = @transform_0, window_bounds = array<i64: 64, 9>}, {pipeline_mode = #tpu.pipeline_mode<synchronous>, transform_indices = @transform_1, window_bounds = array<i64: 9, 256>}, {transform_indices = @transform_2, window_bounds = array<i64: 32, 256, 128>}, {pipeline_mode = #tpu.pipeline_mode<synchronous>, transform_indices = @transform_3, window_bounds = array<i64: 2, 128>}]} {
    %c0_i32 = arith.constant 0 : i32
    %0 = arith.cmpi eq, %arg0, %c0_i32 : i32
    %1 = arith.extui %0 : i1 to i32
    %c0_i32_0 = arith.constant 0 : i32
    %2 = arith.cmpi ne, %1, %c0_i32_0 : i32
    scf.if %2 {
      %cst_107 = arith.constant 0.000000e+00 : f32
      %174 = vector.broadcast %cst_107 : f32 to vector<2x128xf32>
      %c0_108 = arith.constant 0 : index
      %c0_109 = arith.constant 0 : index
      %175 = vector.load %arg5[%c0_108, %c0_109] : memref<2x128xf32, #tpu.memory_space<vmem>>, vector<2x128xf32>
      tpu.vector_store %arg5[%c0_108, %c0_109], %174 {strides = array<i32>} : memref<2x128xf32, #tpu.memory_space<vmem>>, vector<2x128xf32>,
    } else {
    }
    %c0 = arith.constant 0 : index
    %c0_1 = arith.constant 0 : index
    %3 = vector.load %arg1[%c0, %c0_1] : memref<64x9xbf16, #tpu.memory_space<vmem>>, vector<64x9xbf16>
    %c0_2 = arith.constant 0 : index
    %c0_3 = arith.constant 0 : index
    %4 = vector.load %arg2[%c0_2, %c0_3] : memref<9x256xbf16, #tpu.memory_space<vmem>>, vector<9x256xbf16>
    %cst = arith.constant dense<0.000000e+00> : vector<64x256xf32>
    %5 = tpu.matmul %3, %4, %cst {dimension_numbers = #tpu.dot_dimension_numbers<[1], [0], [0], [1], [0, 0, 1, 1], [], []>} : vector<64x9xbf16>, vector<9x256xbf16>, vector<64x256xf32> -> vector<64x256xf32>
    %6 = arith.truncf %5 : vector<64x256xf32> to vector<64x256xbf16>
    %cst_4 = arith.constant 0.000000e+00 : f32
    %7 = vector.broadcast %cst_4 : f32 to vector<2x128xf32>
    %8 = vector.extract_strided_slice %6 {offsets = [0, 0], sizes = [2, 256], strides = [1, 1]} : vector<64x256xbf16> to vector<2x256xbf16>
    %c0_5 = arith.constant 0 : index
    %c0_6 = arith.constant 0 : index
    %c0_7 = arith.constant 0 : index
    %9 = vector.load %arg3[%c0_5, %c0_6, %c0_7] : memref<32x256x128xbf16, #tpu.memory_space<vmem>>, vector<1x256x128xbf16>
    %10 = vector.shape_cast %9 : vector<1x256x128xbf16> to vector<256x128xbf16>
    %cst_8 = arith.constant dense<0.000000e+00> : vector<2x128xf32>
    %11 = tpu.matmul %8, %10, %cst_8 {dimension_numbers = #tpu.dot_dimension_numbers<[1], [0], [0], [1], [0, 0, 1, 1], [], []>} : vector<2x256xbf16>, vector<256x128xbf16>, vector<2x128xf32> -> vector<2x128xf32>
    %12 = arith.addf %7, %11 : vector<2x128xf32>
    %13 = vector.extract_strided_slice %6 {offsets = [2, 0], sizes = [2, 256], strides = [1, 1]} : vector<64x256xbf16> to vector<2x256xbf16>
    %c1 = arith.constant 1 : index
    %c0_9 = arith.constant 0 : index
    %c0_10 = arith.constant 0 : index
    %14 = vector.load %arg3[%c1, %c0_9, %c0_10] : memref<32x256x128xbf16, #tpu.memory_space<vmem>>, vector<1x256x128xbf16>
    %15 = vector.shape_cast %14 : vector<1x256x128xbf16> to vector<256x128xbf16>
    %cst_11 = arith.constant dense<0.000000e+00> : vector<2x128xf32>
    %16 = tpu.matmul %13, %15, %cst_11 {dimension_numbers = #tpu.dot_dimension_numbers<[1], [0], [0], [1], [0, 0, 1, 1], [], []>} : vector<2x256xbf16>, vector<256x128xbf16>, vector<2x128xf32> -> vector<2x128xf32>
    %17 = arith.addf %12, %16 : vector<2x128xf32>
    %18 = vector.extract_strided_slice %6 {offsets = [4, 0], sizes = [2, 256], strides = [1, 1]} : vector<64x256xbf16> to vector<2x256xbf16>
    %c2 = arith.constant 2 : index
    %c0_12 = arith.constant 0 : index
    %c0_13 = arith.constant 0 : index
    %19 = vector.load %arg3[%c2, %c0_12, %c0_13] : memref<32x256x128xbf16, #tpu.memory_space<vmem>>, vector<1x256x128xbf16>
    %20 = vector.shape_cast %19 : vector<1x256x128xbf16> to vector<256x128xbf16>
    %cst_14 = arith.constant dense<0.000000e+00> : vector<2x128xf32>
    %21 = tpu.matmul %18, %20, %cst_14 {dimension_numbers = #tpu.dot_dimension_numbers<[1], [0], [0], [1], [0, 0, 1, 1], [], []>} : vector<2x256xbf16>, vector<256x128xbf16>, vector<2x128xf32> -> vector<2x128xf32>
    %22 = arith.addf %17, %21 : vector<2x128xf32>
    %23 = vector.extract_strided_slice %6 {offsets = [6, 0], sizes = [2, 256], strides = [1, 1]} : vector<64x256xbf16> to vector<2x256xbf16>
    %c3 = arith.constant 3 : index
    %c0_15 = arith.constant 0 : index
    %c0_16 = arith.constant 0 : index
    %24 = vector.load %arg3[%c3, %c0_15, %c0_16] : memref<32x256x128xbf16, #tpu.memory_space<vmem>>, vector<1x256x128xbf16>
    %25 = vector.shape_cast %24 : vector<1x256x128xbf16> to vector<256x128xbf16>
    %cst_17 = arith.constant dense<0.000000e+00> : vector<2x128xf32>
    %26 = tpu.matmul %23, %25, %cst_17 {dimension_numbers = #tpu.dot_dimension_numbers<[1], [0], [0], [1], [0, 0, 1, 1], [], []>} : vector<2x256xbf16>, vector<256x128xbf16>, vector<2x128xf32> -> vector<2x128xf32>
    %27 = arith.addf %22, %26 : vector<2x128xf32>
    %28 = vector.extract_strided_slice %6 {offsets = [8, 0], sizes = [2, 256], strides = [1, 1]} : vector<64x256xbf16> to vector<2x256xbf16>
    %c4 = arith.constant 4 : index
    %c0_18 = arith.constant 0 : index
    %c0_19 = arith.constant 0 : index
    %29 = vector.load %arg3[%c4, %c0_18, %c0_19] : memref<32x256x128xbf16, #tpu.memory_space<vmem>>, vector<1x256x128xbf16>
    %30 = vector.shape_cast %29 : vector<1x256x128xbf16> to vector<256x128xbf16>
    %cst_20 = arith.constant dense<0.000000e+00> : vector<2x128xf32>
    %31 = tpu.matmul %28, %30, %cst_20 {dimension_numbers = #tpu.dot_dimension_numbers<[1], [0], [0], [1], [0, 0, 1, 1], [], []>} : vector<2x256xbf16>, vector<256x128xbf16>, vector<2x128xf32> -> vector<2x128xf32>
    %32 = arith.addf %27, %31 : vector<2x128xf32>
    %33 = vector.extract_strided_slice %6 {offsets = [10, 0], sizes = [2, 256], strides = [1, 1]} : vector<64x256xbf16> to vector<2x256xbf16>
    %c5 = arith.constant 5 : index
    %c0_21 = arith.constant 0 : index
    %c0_22 = arith.constant 0 : index
    %34 = vector.load %arg3[%c5, %c0_21, %c0_22] : memref<32x256x128xbf16, #tpu.memory_space<vmem>>, vector<1x256x128xbf16>
    %35 = vector.shape_cast %34 : vector<1x256x128xbf16> to vector<256x128xbf16>
    %cst_23 = arith.constant dense<0.000000e+00> : vector<2x128xf32>
    %36 = tpu.matmul %33, %35, %cst_23 {dimension_numbers = #tpu.dot_dimension_numbers<[1], [0], [0], [1], [0, 0, 1, 1], [], []>} : vector<2x256xbf16>, vector<256x128xbf16>, vector<2x128xf32> -> vector<2x128xf32>
    %37 = arith.addf %32, %36 : vector<2x128xf32>
    %38 = vector.extract_strided_slice %6 {offsets = [12, 0], sizes = [2, 256], strides = [1, 1]} : vector<64x256xbf16> to vector<2x256xbf16>
    %c6 = arith.constant 6 : index
    %c0_24 = arith.constant 0 : index
    %c0_25 = arith.constant 0 : index
    %39 = vector.load %arg3[%c6, %c0_24, %c0_25] : memref<32x256x128xbf16, #tpu.memory_space<vmem>>, vector<1x256x128xbf16>
    %40 = vector.shape_cast %39 : vector<1x256x128xbf16> to vector<256x128xbf16>
    %cst_26 = arith.constant dense<0.000000e+00> : vector<2x128xf32>
    %41 = tpu.matmul %38, %40, %cst_26 {dimension_numbers = #tpu.dot_dimension_numbers<[1], [0], [0], [1], [0, 0, 1, 1], [], []>} : vector<2x256xbf16>, vector<256x128xbf16>, vector<2x128xf32> -> vector<2x128xf32>
    %42 = arith.addf %37, %41 : vector<2x128xf32>
    %43 = vector.extract_strided_slice %6 {offsets = [14, 0], sizes = [2, 256], strides = [1, 1]} : vector<64x256xbf16> to vector<2x256xbf16>
    %c7 = arith.constant 7 : index
    %c0_27 = arith.constant 0 : index
    %c0_28 = arith.constant 0 : index
    %44 = vector.load %arg3[%c7, %c0_27, %c0_28] : memref<32x256x128xbf16, #tpu.memory_space<vmem>>, vector<1x256x128xbf16>
    %45 = vector.shape_cast %44 : vector<1x256x128xbf16> to vector<256x128xbf16>
    %cst_29 = arith.constant dense<0.000000e+00> : vector<2x128xf32>
    %46 = tpu.matmul %43, %45, %cst_29 {dimension_numbers = #tpu.dot_dimension_numbers<[1], [0], [0], [1], [0, 0, 1, 1], [], []>} : vector<2x256xbf16>, vector<256x128xbf16>, vector<2x128xf32> -> vector<2x128xf32>
    %47 = arith.addf %42, %46 : vector<2x128xf32>
    %48 = vector.extract_strided_slice %6 {offsets = [16, 0], sizes = [2, 256], strides = [1, 1]} : vector<64x256xbf16> to vector<2x256xbf16>
    %c8 = arith.constant 8 : index
    %c0_30 = arith.constant 0 : index
    %c0_31 = arith.constant 0 : index
    %49 = vector.load %arg3[%c8, %c0_30, %c0_31] : memref<32x256x128xbf16, #tpu.memory_space<vmem>>, vector<1x256x128xbf16>
    %50 = vector.shape_cast %49 : vector<1x256x128xbf16> to vector<256x128xbf16>
    %cst_32 = arith.constant dense<0.000000e+00> : vector<2x128xf32>
    %51 = tpu.matmul %48, %50, %cst_32 {dimension_numbers = #tpu.dot_dimension_numbers<[1], [0], [0], [1], [0, 0, 1, 1], [], []>} : vector<2x256xbf16>, vector<256x128xbf16>, vector<2x128xf32> -> vector<2x128xf32>
    %52 = arith.addf %47, %51 : vector<2x128xf32>
    %53 = vector.extract_strided_slice %6 {offsets = [18, 0], sizes = [2, 256], strides = [1, 1]} : vector<64x256xbf16> to vector<2x256xbf16>
    %c9 = arith.constant 9 : index
    %c0_33 = arith.constant 0 : index
    %c0_34 = arith.constant 0 : index
    %54 = vector.load %arg3[%c9, %c0_33, %c0_34] : memref<32x256x128xbf16, #tpu.memory_space<vmem>>, vector<1x256x128xbf16>
    %55 = vector.shape_cast %54 : vector<1x256x128xbf16> to vector<256x128xbf16>
    %cst_35 = arith.constant dense<0.000000e+00> : vector<2x128xf32>
    %56 = tpu.matmul %53, %55, %cst_35 {dimension_numbers = #tpu.dot_dimension_numbers<[1], [0], [0], [1], [0, 0, 1, 1], [], []>} : vector<2x256xbf16>, vector<256x128xbf16>, vector<2x128xf32> -> vector<2x128xf32>
    %57 = arith.addf %52, %56 : vector<2x128xf32>
    %58 = vector.extract_strided_slice %6 {offsets = [20, 0], sizes = [2, 256], strides = [1, 1]} : vector<64x256xbf16> to vector<2x256xbf16>
    %c10 = arith.constant 10 : index
    %c0_36 = arith.constant 0 : index
    %c0_37 = arith.constant 0 : index
    %59 = vector.load %arg3[%c10, %c0_36, %c0_37] : memref<32x256x128xbf16, #tpu.memory_space<vmem>>, vector<1x256x128xbf16>
    %60 = vector.shape_cast %59 : vector<1x256x128xbf16> to vector<256x128xbf16>
    %cst_38 = arith.constant dense<0.000000e+00> : vector<2x128xf32>
    %61 = tpu.matmul %58, %60, %cst_38 {dimension_numbers = #tpu.dot_dimension_numbers<[1], [0], [0], [1], [0, 0, 1, 1], [], []>} : vector<2x256xbf16>, vector<256x128xbf16>, vector<2x128xf32> -> vector<2x128xf32>
    %62 = arith.addf %57, %61 : vector<2x128xf32>
    %63 = vector.extract_strided_slice %6 {offsets = [22, 0], sizes = [2, 256], strides = [1, 1]} : vector<64x256xbf16> to vector<2x256xbf16>
    %c11 = arith.constant 11 : index
    %c0_39 = arith.constant 0 : index
    %c0_40 = arith.constant 0 : index
    %64 = vector.load %arg3[%c11, %c0_39, %c0_40] : memref<32x256x128xbf16, #tpu.memory_space<vmem>>, vector<1x256x128xbf16>
    %65 = vector.shape_cast %64 : vector<1x256x128xbf16> to vector<256x128xbf16>
    %cst_41 = arith.constant dense<0.000000e+00> : vector<2x128xf32>
    %66 = tpu.matmul %63, %65, %cst_41 {dimension_numbers = #tpu.dot_dimension_numbers<[1], [0], [0], [1], [0, 0, 1, 1], [], []>} : vector<2x256xbf16>, vector<256x128xbf16>, vector<2x128xf32> -> vector<2x128xf32>
    %67 = arith.addf %62, %66 : vector<2x128xf32>
    %68 = vector.extract_strided_slice %6 {offsets = [24, 0], sizes = [2, 256], strides = [1, 1]} : vector<64x256xbf16> to vector<2x256xbf16>
    %c12 = arith.constant 12 : index
    %c0_42 = arith.constant 0 : index
    %c0_43 = arith.constant 0 : index
    %69 = vector.load %arg3[%c12, %c0_42, %c0_43] : memref<32x256x128xbf16, #tpu.memory_space<vmem>>, vector<1x256x128xbf16>
    %70 = vector.shape_cast %69 : vector<1x256x128xbf16> to vector<256x128xbf16>
    %cst_44 = arith.constant dense<0.000000e+00> : vector<2x128xf32>
    %71 = tpu.matmul %68, %70, %cst_44 {dimension_numbers = #tpu.dot_dimension_numbers<[1], [0], [0], [1], [0, 0, 1, 1], [], []>} : vector<2x256xbf16>, vector<256x128xbf16>, vector<2x128xf32> -> vector<2x128xf32>
    %72 = arith.addf %67, %71 : vector<2x128xf32>
    %73 = vector.extract_strided_slice %6 {offsets = [26, 0], sizes = [2, 256], strides = [1, 1]} : vector<64x256xbf16> to vector<2x256xbf16>
    %c13 = arith.constant 13 : index
    %c0_45 = arith.constant 0 : index
    %c0_46 = arith.constant 0 : index
    %74 = vector.load %arg3[%c13, %c0_45, %c0_46] : memref<32x256x128xbf16, #tpu.memory_space<vmem>>, vector<1x256x128xbf16>
    %75 = vector.shape_cast %74 : vector<1x256x128xbf16> to vector<256x128xbf16>
    %cst_47 = arith.constant dense<0.000000e+00> : vector<2x128xf32>
    %76 = tpu.matmul %73, %75, %cst_47 {dimension_numbers = #tpu.dot_dimension_numbers<[1], [0], [0], [1], [0, 0, 1, 1], [], []>} : vector<2x256xbf16>, vector<256x128xbf16>, vector<2x128xf32> -> vector<2x128xf32>
    %77 = arith.addf %72, %76 : vector<2x128xf32>
    %78 = vector.extract_strided_slice %6 {offsets = [28, 0], sizes = [2, 256], strides = [1, 1]} : vector<64x256xbf16> to vector<2x256xbf16>
    %c14 = arith.constant 14 : index
    %c0_48 = arith.constant 0 : index
    %c0_49 = arith.constant 0 : index
    %79 = vector.load %arg3[%c14, %c0_48, %c0_49] : memref<32x256x128xbf16, #tpu.memory_space<vmem>>, vector<1x256x128xbf16>
    %80 = vector.shape_cast %79 : vector<1x256x128xbf16> to vector<256x128xbf16>
    %cst_50 = arith.constant dense<0.000000e+00> : vector<2x128xf32>
    %81 = tpu.matmul %78, %80, %cst_50 {dimension_numbers = #tpu.dot_dimension_numbers<[1], [0], [0], [1], [0, 0, 1, 1], [], []>} : vector<2x256xbf16>, vector<256x128xbf16>, vector<2x128xf32> -> vector<2x128xf32>
    %82 = arith.addf %77, %81 : vector<2x128xf32>
    %83 = vector.extract_strided_slice %6 {offsets = [30, 0], sizes = [2, 256], strides = [1, 1]} : vector<64x256xbf16> to vector<2x256xbf16>
    %c15 = arith.constant 15 : index
    %c0_51 = arith.constant 0 : index
    %c0_52 = arith.constant 0 : index
    %84 = vector.load %arg3[%c15, %c0_51, %c0_52] : memref<32x256x128xbf16, #tpu.memory_space<vmem>>, vector<1x256x128xbf16>
    %85 = vector.shape_cast %84 : vector<1x256x128xbf16> to vector<256x128xbf16>
    %cst_53 = arith.constant dense<0.000000e+00> : vector<2x128xf32>
    %86 = tpu.matmul %83, %85, %cst_53 {dimension_numbers = #tpu.dot_dimension_numbers<[1], [0], [0], [1], [0, 0, 1, 1], [], []>} : vector<2x256xbf16>, vector<256x128xbf16>, vector<2x128xf32> -> vector<2x128xf32>
    %87 = arith.addf %82, %86 : vector<2x128xf32>
    %88 = vector.extract_strided_slice %6 {offsets = [32, 0], sizes = [2, 256], strides = [1, 1]} : vector<64x256xbf16> to vector<2x256xbf16>
    %c16 = arith.constant 16 : index
    %c0_54 = arith.constant 0 : index
    %c0_55 = arith.constant 0 : index
    %89 = vector.load %arg3[%c16, %c0_54, %c0_55] : memref<32x256x128xbf16, #tpu.memory_space<vmem>>, vector<1x256x128xbf16>
    %90 = vector.shape_cast %89 : vector<1x256x128xbf16> to vector<256x128xbf16>
    %cst_56 = arith.constant dense<0.000000e+00> : vector<2x128xf32>
    %91 = tpu.matmul %88, %90, %cst_56 {dimension_numbers = #tpu.dot_dimension_numbers<[1], [0], [0], [1], [0, 0, 1, 1], [], []>} : vector<2x256xbf16>, vector<256x128xbf16>, vector<2x128xf32> -> vector<2x128xf32>
    %92 = arith.addf %87, %91 : vector<2x128xf32>
    %93 = vector.extract_strided_slice %6 {offsets = [34, 0], sizes = [2, 256], strides = [1, 1]} : vector<64x256xbf16> to vector<2x256xbf16>
    %c17 = arith.constant 17 : index
    %c0_57 = arith.constant 0 : index
    %c0_58 = arith.constant 0 : index
    %94 = vector.load %arg3[%c17, %c0_57, %c0_58] : memref<32x256x128xbf16, #tpu.memory_space<vmem>>, vector<1x256x128xbf16>
    %95 = vector.shape_cast %94 : vector<1x256x128xbf16> to vector<256x128xbf16>
    %cst_59 = arith.constant dense<0.000000e+00> : vector<2x128xf32>
    %96 = tpu.matmul %93, %95, %cst_59 {dimension_numbers = #tpu.dot_dimension_numbers<[1], [0], [0], [1], [0, 0, 1, 1], [], []>} : vector<2x256xbf16>, vector<256x128xbf16>, vector<2x128xf32> -> vector<2x128xf32>
    %97 = arith.addf %92, %96 : vector<2x128xf32>
    %98 = vector.extract_strided_slice %6 {offsets = [36, 0], sizes = [2, 256], strides = [1, 1]} : vector<64x256xbf16> to vector<2x256xbf16>
    %c18 = arith.constant 18 : index
    %c0_60 = arith.constant 0 : index
    %c0_61 = arith.constant 0 : index
    %99 = vector.load %arg3[%c18, %c0_60, %c0_61] : memref<32x256x128xbf16, #tpu.memory_space<vmem>>, vector<1x256x128xbf16>
    %100 = vector.shape_cast %99 : vector<1x256x128xbf16> to vector<256x128xbf16>
    %cst_62 = arith.constant dense<0.000000e+00> : vector<2x128xf32>
    %101 = tpu.matmul %98, %100, %cst_62 {dimension_numbers = #tpu.dot_dimension_numbers<[1], [0], [0], [1], [0, 0, 1, 1], [], []>} : vector<2x256xbf16>, vector<256x128xbf16>, vector<2x128xf32> -> vector<2x128xf32>
    %102 = arith.addf %97, %101 : vector<2x128xf32>
    %103 = vector.extract_strided_slice %6 {offsets = [38, 0], sizes = [2, 256], strides = [1, 1]} : vector<64x256xbf16> to vector<2x256xbf16>
    %c19 = arith.constant 19 : index
    %c0_63 = arith.constant 0 : index
    %c0_64 = arith.constant 0 : index
    %104 = vector.load %arg3[%c19, %c0_63, %c0_64] : memref<32x256x128xbf16, #tpu.memory_space<vmem>>, vector<1x256x128xbf16>
    %105 = vector.shape_cast %104 : vector<1x256x128xbf16> to vector<256x128xbf16>
    %cst_65 = arith.constant dense<0.000000e+00> : vector<2x128xf32>
    %106 = tpu.matmul %103, %105, %cst_65 {dimension_numbers = #tpu.dot_dimension_numbers<[1], [0], [0], [1], [0, 0, 1, 1], [], []>} : vector<2x256xbf16>, vector<256x128xbf16>, vector<2x128xf32> -> vector<2x128xf32>
    %107 = arith.addf %102, %106 : vector<2x128xf32>
    %108 = vector.extract_strided_slice %6 {offsets = [40, 0], sizes = [2, 256], strides = [1, 1]} : vector<64x256xbf16> to vector<2x256xbf16>
    %c20 = arith.constant 20 : index
    %c0_66 = arith.constant 0 : index
    %c0_67 = arith.constant 0 : index
    %109 = vector.load %arg3[%c20, %c0_66, %c0_67] : memref<32x256x128xbf16, #tpu.memory_space<vmem>>, vector<1x256x128xbf16>
    %110 = vector.shape_cast %109 : vector<1x256x128xbf16> to vector<256x128xbf16>
    %cst_68 = arith.constant dense<0.000000e+00> : vector<2x128xf32>
    %111 = tpu.matmul %108, %110, %cst_68 {dimension_numbers = #tpu.dot_dimension_numbers<[1], [0], [0], [1], [0, 0, 1, 1], [], []>} : vector<2x256xbf16>, vector<256x128xbf16>, vector<2x128xf32> -> vector<2x128xf32>
    %112 = arith.addf %107, %111 : vector<2x128xf32>
    %113 = vector.extract_strided_slice %6 {offsets = [42, 0], sizes = [2, 256], strides = [1, 1]} : vector<64x256xbf16> to vector<2x256xbf16>
    %c21 = arith.constant 21 : index
    %c0_69 = arith.constant 0 : index
    %c0_70 = arith.constant 0 : index
    %114 = vector.load %arg3[%c21, %c0_69, %c0_70] : memref<32x256x128xbf16, #tpu.memory_space<vmem>>, vector<1x256x128xbf16>
    %115 = vector.shape_cast %114 : vector<1x256x128xbf16> to vector<256x128xbf16>
    %cst_71 = arith.constant dense<0.000000e+00> : vector<2x128xf32>
    %116 = tpu.matmul %113, %115, %cst_71 {dimension_numbers = #tpu.dot_dimension_numbers<[1], [0], [0], [1], [0, 0, 1, 1], [], []>} : vector<2x256xbf16>, vector<256x128xbf16>, vector<2x128xf32> -> vector<2x128xf32>
    %117 = arith.addf %112, %116 : vector<2x128xf32>
    %118 = vector.extract_strided_slice %6 {offsets = [44, 0], sizes = [2, 256], strides = [1, 1]} : vector<64x256xbf16> to vector<2x256xbf16>
    %c22 = arith.constant 22 : index
    %c0_72 = arith.constant 0 : index
    %c0_73 = arith.constant 0 : index
    %119 = vector.load %arg3[%c22, %c0_72, %c0_73] : memref<32x256x128xbf16, #tpu.memory_space<vmem>>, vector<1x256x128xbf16>
    %120 = vector.shape_cast %119 : vector<1x256x128xbf16> to vector<256x128xbf16>
    %cst_74 = arith.constant dense<0.000000e+00> : vector<2x128xf32>
    %121 = tpu.matmul %118, %120, %cst_74 {dimension_numbers = #tpu.dot_dimension_numbers<[1], [0], [0], [1], [0, 0, 1, 1], [], []>} : vector<2x256xbf16>, vector<256x128xbf16>, vector<2x128xf32> -> vector<2x128xf32>
    %122 = arith.addf %117, %121 : vector<2x128xf32>
    %123 = vector.extract_strided_slice %6 {offsets = [46, 0], sizes = [2, 256], strides = [1, 1]} : vector<64x256xbf16> to vector<2x256xbf16>
    %c23 = arith.constant 23 : index
    %c0_75 = arith.constant 0 : index
    %c0_76 = arith.constant 0 : index
    %124 = vector.load %arg3[%c23, %c0_75, %c0_76] : memref<32x256x128xbf16, #tpu.memory_space<vmem>>, vector<1x256x128xbf16>
    %125 = vector.shape_cast %124 : vector<1x256x128xbf16> to vector<256x128xbf16>
    %cst_77 = arith.constant dense<0.000000e+00> : vector<2x128xf32>
    %126 = tpu.matmul %123, %125, %cst_77 {dimension_numbers = #tpu.dot_dimension_numbers<[1], [0], [0], [1], [0, 0, 1, 1], [], []>} : vector<2x256xbf16>, vector<256x128xbf16>, vector<2x128xf32> -> vector<2x128xf32>
    %127 = arith.addf %122, %126 : vector<2x128xf32>
    %128 = vector.extract_strided_slice %6 {offsets = [48, 0], sizes = [2, 256], strides = [1, 1]} : vector<64x256xbf16> to vector<2x256xbf16>
    %c24 = arith.constant 24 : index
    %c0_78 = arith.constant 0 : index
    %c0_79 = arith.constant 0 : index
    %129 = vector.load %arg3[%c24, %c0_78, %c0_79] : memref<32x256x128xbf16, #tpu.memory_space<vmem>>, vector<1x256x128xbf16>
    %130 = vector.shape_cast %129 : vector<1x256x128xbf16> to vector<256x128xbf16>
    %cst_80 = arith.constant dense<0.000000e+00> : vector<2x128xf32>
    %131 = tpu.matmul %128, %130, %cst_80 {dimension_numbers = #tpu.dot_dimension_numbers<[1], [0], [0], [1], [0, 0, 1, 1], [], []>} : vector<2x256xbf16>, vector<256x128xbf16>, vector<2x128xf32> -> vector<2x128xf32>
    %132 = arith.addf %127, %131 : vector<2x128xf32>
    %133 = vector.extract_strided_slice %6 {offsets = [50, 0], sizes = [2, 256], strides = [1, 1]} : vector<64x256xbf16> to vector<2x256xbf16>
    %c25 = arith.constant 25 : index
    %c0_81 = arith.constant 0 : index
    %c0_82 = arith.constant 0 : index
    %134 = vector.load %arg3[%c25, %c0_81, %c0_82] : memref<32x256x128xbf16, #tpu.memory_space<vmem>>, vector<1x256x128xbf16>
    %135 = vector.shape_cast %134 : vector<1x256x128xbf16> to vector<256x128xbf16>
    %cst_83 = arith.constant dense<0.000000e+00> : vector<2x128xf32>
    %136 = tpu.matmul %133, %135, %cst_83 {dimension_numbers = #tpu.dot_dimension_numbers<[1], [0], [0], [1], [0, 0, 1, 1], [], []>} : vector<2x256xbf16>, vector<256x128xbf16>, vector<2x128xf32> -> vector<2x128xf32>
    %137 = arith.addf %132, %136 : vector<2x128xf32>
    %138 = vector.extract_strided_slice %6 {offsets = [52, 0], sizes = [2, 256], strides = [1, 1]} : vector<64x256xbf16> to vector<2x256xbf16>
    %c26 = arith.constant 26 : index
    %c0_84 = arith.constant 0 : index
    %c0_85 = arith.constant 0 : index
    %139 = vector.load %arg3[%c26, %c0_84, %c0_85] : memref<32x256x128xbf16, #tpu.memory_space<vmem>>, vector<1x256x128xbf16>
    %140 = vector.shape_cast %139 : vector<1x256x128xbf16> to vector<256x128xbf16>
    %cst_86 = arith.constant dense<0.000000e+00> : vector<2x128xf32>
    %141 = tpu.matmul %138, %140, %cst_86 {dimension_numbers = #tpu.dot_dimension_numbers<[1], [0], [0], [1], [0, 0, 1, 1], [], []>} : vector<2x256xbf16>, vector<256x128xbf16>, vector<2x128xf32> -> vector<2x128xf32>
    %142 = arith.addf %137, %141 : vector<2x128xf32>
    %143 = vector.extract_strided_slice %6 {offsets = [54, 0], sizes = [2, 256], strides = [1, 1]} : vector<64x256xbf16> to vector<2x256xbf16>
    %c27 = arith.constant 27 : index
    %c0_87 = arith.constant 0 : index
    %c0_88 = arith.constant 0 : index
    %144 = vector.load %arg3[%c27, %c0_87, %c0_88] : memref<32x256x128xbf16, #tpu.memory_space<vmem>>, vector<1x256x128xbf16>
    %145 = vector.shape_cast %144 : vector<1x256x128xbf16> to vector<256x128xbf16>
    %cst_89 = arith.constant dense<0.000000e+00> : vector<2x128xf32>
    %146 = tpu.matmul %143, %145, %cst_89 {dimension_numbers = #tpu.dot_dimension_numbers<[1], [0], [0], [1], [0, 0, 1, 1], [], []>} : vector<2x256xbf16>, vector<256x128xbf16>, vector<2x128xf32> -> vector<2x128xf32>
    %147 = arith.addf %142, %146 : vector<2x128xf32>
    %148 = vector.extract_strided_slice %6 {offsets = [56, 0], sizes = [2, 256], strides = [1, 1]} : vector<64x256xbf16> to vector<2x256xbf16>
    %c28 = arith.constant 28 : index
    %c0_90 = arith.constant 0 : index
    %c0_91 = arith.constant 0 : index
    %149 = vector.load %arg3[%c28, %c0_90, %c0_91] : memref<32x256x128xbf16, #tpu.memory_space<vmem>>, vector<1x256x128xbf16>
    %150 = vector.shape_cast %149 : vector<1x256x128xbf16> to vector<256x128xbf16>
    %cst_92 = arith.constant dense<0.000000e+00> : vector<2x128xf32>
    %151 = tpu.matmul %148, %150, %cst_92 {dimension_numbers = #tpu.dot_dimension_numbers<[1], [0], [0], [1], [0, 0, 1, 1], [], []>} : vector<2x256xbf16>, vector<256x128xbf16>, vector<2x128xf32> -> vector<2x128xf32>
    %152 = arith.addf %147, %151 : vector<2x128xf32>
    %153 = vector.extract_strided_slice %6 {offsets = [58, 0], sizes = [2, 256], strides = [1, 1]} : vector<64x256xbf16> to vector<2x256xbf16>
    %c29 = arith.constant 29 : index
    %c0_93 = arith.constant 0 : index
    %c0_94 = arith.constant 0 : index
    %154 = vector.load %arg3[%c29, %c0_93, %c0_94] : memref<32x256x128xbf16, #tpu.memory_space<vmem>>, vector<1x256x128xbf16>
    %155 = vector.shape_cast %154 : vector<1x256x128xbf16> to vector<256x128xbf16>
    %cst_95 = arith.constant dense<0.000000e+00> : vector<2x128xf32>
    %156 = tpu.matmul %153, %155, %cst_95 {dimension_numbers = #tpu.dot_dimension_numbers<[1], [0], [0], [1], [0, 0, 1, 1], [], []>} : vector<2x256xbf16>, vector<256x128xbf16>, vector<2x128xf32> -> vector<2x128xf32>
    %157 = arith.addf %152, %156 : vector<2x128xf32>
    %158 = vector.extract_strided_slice %6 {offsets = [60, 0], sizes = [2, 256], strides = [1, 1]} : vector<64x256xbf16> to vector<2x256xbf16>
    %c30 = arith.constant 30 : index
    %c0_96 = arith.constant 0 : index
    %c0_97 = arith.constant 0 : index
    %159 = vector.load %arg3[%c30, %c0_96, %c0_97] : memref<32x256x128xbf16, #tpu.memory_space<vmem>>, vector<1x256x128xbf16>
    %160 = vector.shape_cast %159 : vector<1x256x128xbf16> to vector<256x128xbf16>
    %cst_98 = arith.constant dense<0.000000e+00> : vector<2x128xf32>
    %161 = tpu.matmul %158, %160, %cst_98 {dimension_numbers = #tpu.dot_dimension_numbers<[1], [0], [0], [1], [0, 0, 1, 1], [], []>} : vector<2x256xbf16>, vector<256x128xbf16>, vector<2x128xf32> -> vector<2x128xf32>
    %162 = arith.addf %157, %161 : vector<2x128xf32>
    %163 = vector.extract_strided_slice %6 {offsets = [62, 0], sizes = [2, 256], strides = [1, 1]} : vector<64x256xbf16> to vector<2x256xbf16>
    %c31 = arith.constant 31 : index
    %c0_99 = arith.constant 0 : index
    %c0_100 = arith.constant 0 : index
    %164 = vector.load %arg3[%c31, %c0_99, %c0_100] : memref<32x256x128xbf16, #tpu.memory_space<vmem>>, vector<1x256x128xbf16>
    %165 = vector.shape_cast %164 : vector<1x256x128xbf16> to vector<256x128xbf16>
    %cst_101 = arith.constant dense<0.000000e+00> : vector<2x128xf32>
    %166 = tpu.matmul %163, %165, %cst_101 {dimension_numbers = #tpu.dot_dimension_numbers<[1], [0], [0], [1], [0, 0, 1, 1], [], []>} : vector<2x256xbf16>, vector<256x128xbf16>, vector<2x128xf32> -> vector<2x128xf32>
    %167 = arith.addf %162, %166 : vector<2x128xf32>
    %c0_102 = arith.constant 0 : index
    %c0_103 = arith.constant 0 : index
    %168 = vector.load %arg5[%c0_102, %c0_103] : memref<2x128xf32, #tpu.memory_space<vmem>>, vector<2x128xf32>
    %169 = arith.addf %168, %167 : vector<2x128xf32>
    %c0_104 = arith.constant 0 : index
    %c0_105 = arith.constant 0 : index
    %170 = vector.load %arg5[%c0_104, %c0_105] : memref<2x128xf32, #tpu.memory_space<vmem>>, vector<2x128xf32>
    tpu.vector_store %arg5[%c0_104, %c0_105], %169 {strides = array<i32>} : memref<2x128xf32, #tpu.memory_space<vmem>>, vector<2x128xf32>,
    %c3_i32 = arith.constant 3 : i32
    %171 = arith.cmpi eq, %arg0, %c3_i32 : i32
    %172 = arith.extui %171 : i1 to i32
    %c0_i32_106 = arith.constant 0 : i32
    %173 = arith.cmpi ne, %172, %c0_i32_106 : i32
    scf.if %173 {
      %c0_107 = arith.constant 0 : index
      %c0_108 = arith.constant 0 : index
      %174 = vector.load %arg5[%c0_107, %c0_108] : memref<2x128xf32, #tpu.memory_space<vmem>>, vector<2x128xf32>
      %cst_109 = arith.constant 0.000000e+00 : f32
      %175 = vector.broadcast %cst_109 : f32 to vector<2x128xf32>
      %176 = arith.subf %175, %174 : vector<2x128xf32>
      %177 = math.exp %176 : vector<2x128xf32>
      %cst_110 = arith.constant 1.000000e+00 : f32
      %178 = vector.broadcast %cst_110 : f32 to vector<2x128xf32>
      %179 = arith.addf %178, %177 : vector<2x128xf32>
      %cst_111 = arith.constant 1.000000e+00 : f32
      %180 = vector.broadcast %cst_111 : f32 to vector<2x128xf32>
      %181 = arith.divf %180, %179 : vector<2x128xf32>
      %c0_112 = arith.constant 0 : index
      %c0_113 = arith.constant 0 : index
      %182 = vector.load %arg4[%c0_112, %c0_113] : memref<2x128xf32, #tpu.memory_space<vmem>>, vector<2x128xf32>
      tpu.vector_store %arg4[%c0_112, %c0_113], %181 {strides = array<i32>} : memref<2x128xf32, #tpu.memory_space<vmem>>, vector<2x128xf32>,
    } else {
    }
    return
  }
  func.func @transform_0(%arg0: i32) -> (i32, i32) {
    %c0_i32 = arith.constant 0 : i32
    %c0_i32_0 = arith.constant 0 : i32
    return %arg0, %c0_i32 : i32, i32
  }
  func.func @transform_1(%arg0: i32) -> (i32, i32) {
    %c0_i32 = arith.constant 0 : i32
    %c0_i32_0 = arith.constant 0 : i32
    %c0_i32_1 = arith.constant 0 : i32
    return %c0_i32, %c0_i32_0 : i32, i32
  }
  func.func @transform_2(%arg0: i32) -> (i32, i32, i32) {
    %c0_i32 = arith.constant 0 : i32
    %c0_i32_0 = arith.constant 0 : i32
    %c0_i32_1 = arith.constant 0 : i32
    return %arg0, %c0_i32, %c0_i32_0 : i32, i32, i32
  }
  func.func @transform_3(%arg0: i32) -> (i32, i32) {
    %c0_i32 = arith.constant 0 : i32
    %c0_i32_0 = arith.constant 0 : i32
    %c0_i32_1 = arith.constant 0 : i32
    return %c0_i32, %c0_i32_0 : i32, i32
  }
}

</mosaic_0001>

<llo_original>
// kernel: channel_attention_forward.1
$region0: #{channel_attention_forward.1}
  #allocation0 [shape = 'u32[]', space=smem, size = 0x4, offset = 0x4, fixed_abs, tag = 'smem constant byte address 0x4 - core index']
  #allocation1 [shape = 'u32[144,128]{1,0:T(1,128)}', space=vmem, size = 0x12000, scoped, tag = 'internal scratch']
  #allocation2 [shape = 'f32[2,128]{1,0:T(2,128)}', space=vmem, size = 0x400, scoped, tag = 'scratch operand']
  %s0 = inlined_call_operand.vmem [shape: bf16[256,9], index: 0, kind: input, shape index: {}]
  %s1 = inlined_call_operand.hbm [shape: bf16[9,256], index: 1, kind: input, shape index: {}]
  %s2 = inlined_call_operand.hbm [shape: bf16[128,256,128], index: 2, kind: input, shape index: {}]
  %s3 = inlined_call_operand.hbm [shape: f32[2,128], index: 3, kind: output, shape index: {}]
  %s4 = sld [smem:[#allocation0]]
  $region61: #{channel_attention_forward.1} parent=0
    _
  %s6 = ssub.s32 1, %s4
  %s7 = scalar_select 0, %s6, %s4
  $region1: #{channel_attention_forward.1} parent=0
    #allocation3 [shape = 'u8[8192]{0}', space=vmem, size = 0x2000, scoped, tag = 'input window, operand 1, single buffered']
    #allocation4 [shape = 's32[2]{0}', space=sflag, size = 0x8, scoped, tag = 'scoped memory for channel_attention_forward.1']
    #allocation5 [shape = 's32[2]{0}', space=sflag, size = 0x8, scoped, tag = 'scoped memory for channel_attention_forward.1']
    #allocation6 [shape = 'u8[4194304]{0}', space=vmem, size = 0x400000, scoped, tag = 'input window, operand 2']
    #allocation7 [shape = 's32[2]{0}', space=sflag, size = 0x8, scoped, tag = 'scoped memory for channel_attention_forward.1']
    #allocation8 [shape = 'u8[1024]{0}', space=vmem, size = 0x400, scoped, tag = 'output window, operand 0, single buffered']
    %8 = vsyncpa [#allocation4], 0
    %9 = vsyncpa [#allocation7], 0
    %s10 = scalar_lea.sflag [#allocation7], 1
    %11 = vsyncpa %s10, 0
    %12 = vsyncpa [#allocation5], 0
    loop: start=0, step=1, limit=6
    $region2: #{channel_attention_forward.1} parent=1 // loop_pre_header
      _
    $region3: #{channel_attention_forward.1} parent=1 // loop_header
      %s14 = sphi 0, %s18
      %p15 = scmp.ge.s32.totalorder %s14, 6
      %s24 = sphi 0, %s26
      %s27 = sphi 0, %s24
      %s28 = sphi 0, %s27
      %s44 = sphi 0, %s28
      %s48 = sphi 0, %s48
      %s50 = sphi 0, %s48
      %s51 = sphi 0, %s50
      %s65 = sphi 0, %s51
      %s71 = sphi 0, %s73
      %s74 = sphi 0, %s71
      %s75 = sphi 0, %s74
      %s91 = sphi 0, %s75
      %s95 = sphi 0, %s95
      %s97 = sphi 0, %s95
      %s98 = sphi 0, %s97
      %s112 = sphi 0, %s98
    $region4: #{channel_attention_forward.1} parent=1 // loop_header_branch
      %17 = sbr.rel (%p15) target = $region8
    $region5: #{channel_attention_forward.1} parent=1 // loop_body
      %s19 = ssub.s32 %s14, 1
      %s20 = ssub.s32 %s14, 2
      %s21 = sadd.s32 %s14, 1
      %s22 = ssub.s32 %s14, %s21
      %p23 = scmp.eq.s32.totalorder %s22, 0
      %s25 = sadd.s32 %s24, 1
      %s26 = scalar_select %p23, %s24, %s25
      %p29 = pneg %p23
      %p30 = scmp.eq.s32.totalorder %s14, 3
      %p31 = por %p29, %p30
      %p32 = scmp.ne.s32.totalorder %s24, %s27
      %p33 = scmp.eq.s32.totalorder %s14, 0
      %p34 = por %p32, %p33
      %p35 = scmp.ne.s32.totalorder %s24, %s27
      %p36 = scmp.eq.s32.totalorder %s19, 3
      %p37 = por %p35, %p36
      %p38 = scmp.ne.s32.totalorder %s27, %s28
      %p39 = scmp.eq.s32.totalorder %s19, 0
      %p40 = por %p38, %p39
      %p41 = scmp.ne.s32.totalorder %s27, %s28
      %p42 = scmp.eq.s32.totalorder %s20, 3
      %p43 = por %p41, %p42
      %p45 = scmp.ne.s32.totalorder %s28, %s44
      %p46 = scmp.eq.s32.totalorder %s20, 0
      %p47 = por %p45, %p46
      %s49 = sadd.s32 %s48, 1
      %p52 = scmp.eq.s32.totalorder %s14, 3
      %p53 = scmp.ne.s32.totalorder %s48, %s50
      %p54 = scmp.eq.s32.totalorder %s14, 0
      %p55 = por %p53, %p54
      %p56 = scmp.ne.s32.totalorder %s48, %s50
      %p57 = scmp.eq.s32.totalorder %s19, 3
      %p58 = por %p56, %p57
      %p59 = scmp.ne.s32.totalorder %s50, %s51
      %p60 = scmp.eq.s32.totalorder %s19, 0
      %p61 = por %p59, %p60
      %p62 = scmp.ne.s32.totalorder %s50, %s51
      %p63 = scmp.eq.s32.totalorder %s20, 3
      %p64 = por %p62, %p63
      %p66 = scmp.ne.s32.totalorder %s51, %s65
      %p67 = scmp.eq.s32.totalorder %s20, 0
      %p68 = por %p66, %p67
      %s69 = ssub.s32 %s14, %s21
      %p70 = scmp.eq.s32.totalorder %s69, 0
      %s72 = sadd.s32 %s71, 1
      %s73 = scalar_select %p70, %s71, %s72
      %p76 = pneg %p70
      %p77 = scmp.eq.s32.totalorder %s14, 3
      %p78 = por %p76, %p77
      %p79 = scmp.ne.s32.totalorder %s71, %s74
      %p80 = scmp.eq.s32.totalorder %s14, 0
      %p81 = por %p79, %p80
      %p82 = scmp.ne.s32.totalorder %s71, %s74
      %p83 = scmp.eq.s32.totalorder %s19, 3
      %p84 = por %p82, %p83
      %p85 = scmp.ne.s32.totalorder %s74, %s75
      %p86 = scmp.eq.s32.totalorder %s19, 0
      %p87 = por %p85, %p86
      %p88 = scmp.ne.s32.totalorder %s74, %s75
      %p89 = scmp.eq.s32.totalorder %s20, 3
      %p90 = por %p88, %p89
      %p92 = scmp.ne.s32.totalorder %s75, %s91
      %p93 = scmp.eq.s32.totalorder %s20, 0
      %p94 = por %p92, %p93
      %s96 = sadd.s32 %s95, 1
      %p99 = scmp.eq.s32.totalorder %s14, 3
      %p100 = scmp.ne.s32.totalorder %s95, %s97
      %p101 = scmp.eq.s32.totalorder %s14, 0
      %p102 = por %p100, %p101
      %p103 = scmp.ne.s32.totalorder %s95, %s97
      %p104 = scmp.eq.s32.totalorder %s19, 3
      %p105 = por %p103, %p104
      %p106 = scmp.ne.s32.totalorder %s97, %s98
      %p107 = scmp.eq.s32.totalorder %s19, 0
      %p108 = por %p106, %p107
      %p109 = scmp.ne.s32.totalorder %s97, %s98
      %p110 = scmp.eq.s32.totalorder %s20, 3
      %p111 = por %p109, %p110
      %p113 = scmp.ne.s32.totalorder %s98, %s112
      %p114 = scmp.eq.s32.totalorder %s20, 0
      %p115 = por %p113, %p114
      %p116 = scmp.le.s32.totalorder 1, %s14
      %p117 = scmp.lt.s32.totalorder %s14, 5
      %p118 = pnand %p116, %p117
      %p119 = pneg %p118
      // Predicated region
      $region9: #{channel_attention_forward.1} parent=5 // pred_check
        _
      $region10: #{channel_attention_forward.1} parent=5 // pred_check_branch
        %121 = sbr.rel (%p118) target = $region12
      $region11: #{channel_attention_forward.1} parent=5 // pred_region
        %s122 = ssub.s32 %s14, 1
        // Predicated region
        $region13: #{channel_attention_forward.1} parent=11 // pred_check
          %p123 = pneg %p61
        $region14: #{channel_attention_forward.1} parent=11 // pred_check_branch
          %125 = sbr.rel (%p123) target = $region16
        $region15: #{channel_attention_forward.1} parent=11 // pred_region
          %s127 = ssub.s32 256, 256
          %128 = vsyncadd [#allocation4], %s127
          %s129 = sshll.u32 [#allocation3], 4
          %s130 = int_to_ptr.vmem [resolvable:$true] %s129
          %135 = dma.hbm_to_vmem [thread:$0]  %s1, 256, %s130, [#allocation4], 128, 128, 8
        $region16: #{channel_attention_forward.1} parent=11 // pred_fallthru
          _
      $region12: #{channel_attention_forward.1} parent=5 // pred_fallthru
        _
      %p136 = scmp.lt.s32.totalorder %s14, 4
      // Predicated region
      $region17: #{channel_attention_forward.1} parent=5 // pred_check
        %p137 = pneg %p136
      $region18: #{channel_attention_forward.1} parent=5 // pred_check_branch
        %139 = sbr.rel (%p137) target = $region20
      $region19: #{channel_attention_forward.1} parent=5 // pred_region
        // Predicated region
        $region21: #{channel_attention_forward.1} parent=19 // pred_check
          %p140 = pneg %p34
        $region22: #{channel_attention_forward.1} parent=19 // pred_check_branch
          %142 = sbr.rel (%p140) target = $region24
        $region23: #{channel_attention_forward.1} parent=19 // pred_region
          %s143 = smul.u32 8, %s14
          %p144 = scmp.lt.s32.totalorder %s143, 31
          %s145 = scalar_select %p144, %s143, 31
          %s146 = smul.addr %s145, 4
          %s147 = scalar_lea.vmem %s0, %s146
          %s148 = smul.u32 8, %s14
        $region24: #{channel_attention_forward.1} parent=19 // pred_fallthru
          _
        // Predicated region
        $region25: #{channel_attention_forward.1} parent=19 // pred_check
          %p149 = pneg %p81
        $region26: #{channel_attention_forward.1} parent=19 // pred_check_branch
          %151 = sbr.rel (%p149) target = $region28
        $region27: #{channel_attention_forward.1} parent=19 // pred_region
          %s152 = sand.u32 %s71, 1
          %s153 = scalar_lea.sflag [#allocation7], %s152
          %s154 = sand.u32 %s71, 1
          %s155 = smul.addr %s154, 4096
          %s156 = scalar_lea.vmem [#allocation6], %s155
          %s157 = smul.u32 32, %s14
          %s159 = ssub.s32 65536, 65536
          %160 = vsyncadd %s153, %s159
          %s161 = smul.addr %s157, 32
          %s162 = smul.addr %s161, 64
          %s163 = scalar_lea.hbm %s2, %s162
          %s164 = sshll.u32 %s156, 4
          %s165 = int_to_ptr.vmem [resolvable:$true] %s164
          %170 = dma.hbm_to_vmem [thread:$0]  %s163, 65536, %s165, %s153, 64, 64, 4
        $region28: #{channel_attention_forward.1} parent=19 // pred_fallthru
          _
      $region20: #{channel_attention_forward.1} parent=5 // pred_fallthru
        _
      %p171 = scmp.le.s32.totalorder 1, %s14
      %p172 = scmp.lt.s32.totalorder %s14, 5
      %p173 = pnand %p171, %p172
      %p174 = pneg %p173
      // Predicated region
      $region29: #{channel_attention_forward.1} parent=5 // pred_check
        _
      $region30: #{channel_attention_forward.1} parent=5 // pred_check_branch
        %176 = sbr.rel (%p173) target = $region32
      $region31: #{channel_attention_forward.1} parent=5 // pred_region
        %s177 = ssub.s32 %s14, 1
        // Predicated region
        $region33: #{channel_attention_forward.1} parent=31 // pred_check
          %p178 = pneg %p61
        $region34: #{channel_attention_forward.1} parent=31 // pred_check_branch
          %180 = sbr.rel (%p178) target = $region36
        $region35: #{channel_attention_forward.1} parent=31 // pred_region
          %181 = dma.done [#allocation4], 256
        $region36: #{channel_attention_forward.1} parent=31 // pred_fallthru
          _
        %s182 = sand.u32 %s74, 1
        %s183 = scalar_lea.sflag [#allocation7], %s182
        %s184 = sand.u32 %s74, 1
        %s185 = smul.addr %s184, 4096
        %s186 = scalar_lea.vmem [#allocation6], %s185
        // Predicated region
        $region37: #{channel_attention_forward.1} parent=31 // pred_check
          %p187 = pneg %p87
        $region38: #{channel_attention_forward.1} parent=31 // pred_check_branch
          %189 = sbr.rel (%p187) target = $region40
        $region39: #{channel_attention_forward.1} parent=31 // pred_region
          %190 = dma.done %s183, 65536
        $region40: #{channel_attention_forward.1} parent=31 // pred_fallthru
          _
        %s191 = smul.u32 8, %s19
        %p192 = scmp.lt.s32.totalorder %s191, 31
        %s193 = scalar_select %p192, %s191, 31
        %s194 = smul.addr %s193, 4
        %s195 = scalar_lea.vmem %s0, %s194
        %p196 = pneg %p40
        %p197 = pneg %p37
        %p198 = pneg %p61
        %p199 = pneg %p58
        %s200 = sand.u32 %s74, 1
        %s201 = scalar_lea.sflag [#allocation7], %s200
        %s202 = sand.u32 %s74, 1
        %s203 = smul.addr %s202, 4096
        %s204 = scalar_lea.vmem [#allocation6], %s203
        %p205 = pneg %p87
        %p206 = pneg %p84
        %p207 = pneg %p108
        %p208 = pneg %p105
        %s209 = smul.u32 8, %s19
        %p210 = scmp.lt.s32.totalorder %s209, 31
        %s211 = scalar_select %p210, %s209, 31
        %s212 = smul.addr %s211, 4
        %s213 = scalar_lea.vmem %s0, %s212
        %s214 = smul.u32 8, %s19
        %s215 = smul.u32 32, %s19
        %p217 = scmp.eq.s32.totalorder %s19, 0
        // Predicated region
        $region41: #{channel_attention_forward.1} parent=31 // pred_check
          %p218 = pneg %p217
        $region42: #{channel_attention_forward.1} parent=31 // pred_check_branch
          %220 = sbr.rel (%p218) target = $region44
        $region43: #{channel_attention_forward.1} parent=31 // pred_region
          %221 = vst [vmem:[#allocation2] sm:$0x3] 0.0
        $region44: #{channel_attention_forward.1} parent=31 // pred_fallthru
          _
        %v222 = vld [vmem:[%s213] sm:$0xf]
        %v223 = vld [vmem:[%s213 + $0x4] sm:$0xf]
        %v224 = vld [vmem:[%s213 + $0x8] sm:$0xf]
        %v225 = vld [vmem:[%s213 + $0xc] sm:$0xf]
        %v226 = vld [vmem:[%s213 + $0x10] sm:$0xf]
        %v227 = vld [vmem:[%s213 + $0x14] sm:$0xf]
        %v228 = vld [vmem:[%s213 + $0x18] sm:$0xf]
        %v229 = vld [vmem:[%s213 + $0x1c] sm:$0xf]
        %v230 = vld [vmem:[#allocation3] sm:$0xff]
        %v231 = vld [vmem:[#allocation3 + $0x8] sm:$0x11]
        %v240 = vunpack.c.l.b16 %v222
        %v241 = vunpack.c.l.b16 %v223
        %v242 = vunpack.c.l.b16 %v224
        %v243 = vunpack.c.l.b16 %v225
        %v244 = vunpack.c.l.b16 %v226
        %v245 = vunpack.c.l.b16 %v227
        %v246 = vunpack.c.l.b16 %v228
        %v247 = vunpack.c.l.b16 %v229
        %v248 = vpack.c.b16 %v241, %v240
        %v249 = vpack.c.b16 %v243, %v242
        %v250 = vpack.c.b16 %v245, %v244
        %v251 = vpack.c.b16 %v247, %v246
        %v254 = vunpack.c.l.b16 %v230
        %v255 = vunpack.c.h.b16 %v230
        %v256 = vunpack.c.l.b16 %v231
        %v257 = vunpack.c.h.b16 %v231
        %v258 = vpack.c.b16 %v256, %v254
        %v259 = vpack.c.b16 %v257, %v255
        %vm260 = vcmask 72704
        %v262 = vsel %vm260, %v248, 0
        %v265 = vsel %vm260, %v249, 0
        %v268 = vsel %vm260, %v250, 0
        %v271 = vsel %vm260, %v251, 0
        %vm273 = vcmask 1043456
        %vm274 = vcmask 1044480
        %v275 = vsel %vm273, 4294967295, 65535
        %v276 = vsel %vm274, %v275, 0
        %v278 = vand.u32 %v258, %v276
        %v281 = vand.u32 %v259, %v276
        %283 = vmatprep.subr.bf16.mxu0 %v281
        %284 = vmatpush1.bf16.msra.mxu0 %v278
        %285 = vmatprep.subr.bf16.mxu0 0
        %286 = vmatpush1.bf16.msra.mxu0 0
        %287 = vmatprep.subr.bf16.mxu0 0
        %288 = vmatpush1.bf16.msra.mxu0 0
        %289 = vmatprep.subr.bf16.mxu0 0
        %290 = vmatpush1.bf16.msra.mxu0 0
        %291 = vmatprep.subr.bf16.mxu0 0
        %292 = vmatpush1.bf16.msra.mxu0 0
        %293 = vmatprep.subr.bf16.mxu0 0
        %294 = vmatpush1.bf16.msra.mxu0 0
        %295 = vmatprep.subr.bf16.mxu0 0
        %296 = vmatpush1.bf16.msra.mxu0 0
        %297 = vmatprep.subr.bf16.mxu0 0
        %298 = vmatpush1.bf16.msra.mxu0 0
        %299 = vmatprep.subr.bf16.mxu0 0
        %300 = vmatpush1.bf16.msra.mxu0 0
        %301 = vmatprep.subr.bf16.mxu0 0
        %302 = vmatpush1.bf16.msra.mxu0 0
        %303 = vmatprep.subr.bf16.mxu0 0
        %304 = vmatpush1.bf16.msra.mxu0 0
        %305 = vmatprep.subr.bf16.mxu0 0
        %306 = vmatpush1.bf16.msra.mxu0 0
        %307 = vmatprep.subr.bf16.mxu0 0
        %308 = vmatpush1.bf16.msra.mxu0 0
        %309 = vmatprep.subr.bf16.mxu0 0
        %310 = vmatpush1.bf16.msra.mxu0 0
        %311 = vmatprep.subr.bf16.mxu0 0
        %312 = vmatpush1.bf16.msra.mxu0 0
        %313 = vmatprep.subr.bf16.mxu0 0
        %314 = vmatpush1.bf16.msra.mxu0 0
        %315 = vmatprep.mubr.bf16.mxu0 0
        %316 = vmatmul.mubr.bf16.gmra.mrb[0].mxu0 %v262
        %v317 = vpop.f32.mrb[0].mxu0
        %v318 = vadd.f32 0.0, %v317
        %v319 = vpop.f32.mrb[0].mxu0
        %v320 = vadd.f32 0.0, %v319
        %v321 = vpop.f32.mrb[0].mxu0
        %v322 = vadd.f32 0.0, %v321
        %v323 = vpop.f32.mrb[0].mxu0
        %v324 = vadd.f32 0.0, %v323
        %325 = vmatprep.mubr.bf16.mxu0 0
        %326 = vmatmul.mubr.bf16.gmra.mrb[0].mxu0 %v265
        %v327 = vpop.f32.mrb[0].mxu0
        %v328 = vadd.f32 0.0, %v327
        %v329 = vpop.f32.mrb[0].mxu0
        %v330 = vadd.f32 0.0, %v329
        %v331 = vpop.f32.mrb[0].mxu0
        %v332 = vadd.f32 0.0, %v331
        %v333 = vpop.f32.mrb[0].mxu0
        %v334 = vadd.f32 0.0, %v333
        %335 = vmatprep.mubr.bf16.mxu0 0
        %336 = vmatmul.mubr.bf16.gmra.mrb[0].mxu0 %v268
        %v337 = vpop.f32.mrb[0].mxu0
        %v338 = vadd.f32 0.0, %v337
        %v339 = vpop.f32.mrb[0].mxu0
        %v340 = vadd.f32 0.0, %v339
        %v341 = vpop.f32.mrb[0].mxu0
        %v342 = vadd.f32 0.0, %v341
        %v343 = vpop.f32.mrb[0].mxu0
        %v344 = vadd.f32 0.0, %v343
        %345 = vmatprep.mubr.bf16.mxu0 0
        %346 = vmatmul.mubr.bf16.gmra.mrb[0].mxu0 %v271
        %v347 = vpop.f32.mrb[0].mxu0
        %v348 = vadd.f32 0.0, %v347
        %v349 = vpop.f32.mrb[0].mxu0
        %v350 = vadd.f32 0.0, %v349
        %v351 = vpop.f32.mrb[0].mxu0
        %v352 = vadd.f32 0.0, %v351
        %v353 = vpop.f32.mrb[0].mxu0
        %v354 = vadd.f32 0.0, %v353
        %355 = vdwg.mxu0
        %v356 = vpack.c.bf16 %v322, %v318
        %v357 = vpack.c.bf16 %v324, %v320
        %v358 = vpack.c.bf16 %v332, %v328
        %v359 = vpack.c.bf16 %v334, %v330
        %v360 = vpack.c.bf16 %v342, %v338
        %v361 = vpack.c.bf16 %v344, %v340
        %v362 = vpack.c.bf16 %v352, %v348
        %v363 = vpack.c.bf16 %v354, %v350
        %v364 = vld [vmem:[%s186] sm:$0xf]
        %v365 = vld [vmem:[%s186 + $0x4] sm:$0xf]
        %v366 = vld [vmem:[%s186 + $0x8] sm:$0xf]
        %v367 = vld [vmem:[%s186 + $0xc] sm:$0xf]
        %v368 = vld [vmem:[%s186 + $0x10] sm:$0xf]
        %v369 = vld [vmem:[%s186 + $0x14] sm:$0xf]
        %v370 = vld [vmem:[%s186 + $0x18] sm:$0xf]
        %v371 = vld [vmem:[%s186 + $0x1c] sm:$0xf]
        %v372 = vld [vmem:[%s186 + $0x20] sm:$0xf]
        %v373 = vld [vmem:[%s186 + $0x24] sm:$0xf]
        %v374 = vld [vmem:[%s186 + $0x28] sm:$0xf]
        %v375 = vld [vmem:[%s186 + $0x2c] sm:$0xf]
        %v376 = vld [vmem:[%s186 + $0x30] sm:$0xf]
        %v377 = vld [vmem:[%s186 + $0x34] sm:$0xf]
        %v378 = vld [vmem:[%s186 + $0x38] sm:$0xf]
        %v379 = vld [vmem:[%s186 + $0x3c] sm:$0xf]
        %v380 = vld [vmem:[%s186 + $0x40] sm:$0xf]
        %v381 = vld [vmem:[%s186 + $0x44] sm:$0xf]
        %v382 = vld [vmem:[%s186 + $0x48] sm:$0xf]
        %v383 = vld [vmem:[%s186 + $0x4c] sm:$0xf]
        %v384 = vld [vmem:[%s186 + $0x50] sm:$0xf]
        %v385 = vld [vmem:[%s186 + $0x54] sm:$0xf]
        %v386 = vld [vmem:[%s186 + $0x58] sm:$0xf]
        %v387 = vld [vmem:[%s186 + $0x5c] sm:$0xf]
        %v388 = vld [vmem:[%s186 + $0x60] sm:$0xf]
        %v389 = vld [vmem:[%s186 + $0x64] sm:$0xf]
        %v390 = vld [vmem:[%s186 + $0x68] sm:$0xf]
        %v391 = vld [vmem:[%s186 + $0x6c] sm:$0xf]
        %v392 = vld [vmem:[%s186 + $0x70] sm:$0xf]
        %v393 = vld [vmem:[%s186 + $0x74] sm:$0xf]
        %v394 = vld [vmem:[%s186 + $0x78] sm:$0xf]
        %v395 = vld [vmem:[%s186 + $0x7c] sm:$0xf]
        %s396 = scalar_lea.vmem %s186, 128 [#allocation6]
        %v397 = vld [vmem:[%s396] sm:$0xf]
        %v398 = vld [vmem:[%s396 + $0x4] sm:$0xf]
        %v399 = vld [vmem:[%s396 + $0x8] sm:$0xf]
        %v400 = vld [vmem:[%s396 + $0xc] sm:$0xf]
        %v401 = vld [vmem:[%s396 + $0x10] sm:$0xf]
        %v402 = vld [vmem:[%s396 + $0x14] sm:$0xf]
        %v403 = vld [vmem:[%s396 + $0x18] sm:$0xf]
        %v404 = vld [vmem:[%s396 + $0x1c] sm:$0xf]
        %v405 = vld [vmem:[%s396 + $0x20] sm:$0xf]
        %v406 = vld [vmem:[%s396 + $0x24] sm:$0xf]
        %v407 = vld [vmem:[%s396 + $0x28] sm:$0xf]
        %v408 = vld [vmem:[%s396 + $0x2c] sm:$0xf]
        %v409 = vld [vmem:[%s396 + $0x30] sm:$0xf]
        %v410 = vld [vmem:[%s396 + $0x34] sm:$0xf]
        %v411 = vld [vmem:[%s396 + $0x38] sm:$0xf]
        %v412 = vld [vmem:[%s396 + $0x3c] sm:$0xf]
        %v413 = vld [vmem:[%s396 + $0x40] sm:$0xf]
        %v414 = vld [vmem:[%s396 + $0x44] sm:$0xf]
        %v415 = vld [vmem:[%s396 + $0x48] sm:$0xf]
        %v416 = vld [vmem:[%s396 + $0x4c] sm:$0xf]
        %v417 = vld [vmem:[%s396 + $0x50] sm:$0xf]
        %v418 = vld [vmem:[%s396 + $0x54] sm:$0xf]
        %v419 = vld [vmem:[%s396 + $0x58] sm:$0xf]
        %v420 = vld [vmem:[%s396 + $0x5c] sm:$0xf]
        %v421 = vld [vmem:[%s396 + $0x60] sm:$0xf]
        %v422 = vld [vmem:[%s396 + $0x64] sm:$0xf]
        %v423 = vld [vmem:[%s396 + $0x68] sm:$0xf]
        %v424 = vld [vmem:[%s396 + $0x6c] sm:$0xf]
        %v425 = vld [vmem:[%s396 + $0x70] sm:$0xf]
        %v426 = vld [vmem:[%s396 + $0x74] sm:$0xf]
        %v427 = vld [vmem:[%s396 + $0x78] sm:$0xf]
        %v428 = vld [vmem:[%s396 + $0x7c] sm:$0xf]
        %v431 = vrot.slane %v356, 1
        %v432 = vrot.slane %v357, 1
        %v467 = vunpack.c.l.b16 %v397
        %v468 = vunpack.c.l.b16 %v398
        %v469 = vunpack.c.l.b16 %v399
        %v470 = vunpack.c.l.b16 %v400
        %v471 = vunpack.c.l.b16 %v401
        %v472 = vunpack.c.l.b16 %v402
        %v473 = vunpack.c.l.b16 %v403
        %v474 = vunpack.c.l.b16 %v404
        %v475 = vunpack.c.l.b16 %v405
        %v476 = vunpack.c.l.b16 %v406
        %v477 = vunpack.c.l.b16 %v407
        %v478 = vunpack.c.l.b16 %v408
        %v479 = vunpack.c.l.b16 %v409
        %v480 = vunpack.c.l.b16 %v410
        %v481 = vunpack.c.l.b16 %v411
        %v482 = vunpack.c.l.b16 %v412
        %v483 = vunpack.c.l.b16 %v413
        %v484 = vunpack.c.l.b16 %v414
        %v485 = vunpack.c.l.b16 %v415
        %v486 = vunpack.c.l.b16 %v416
        %v487 = vunpack.c.l.b16 %v417
        %v488 = vunpack.c.l.b16 %v418
        %v489 = vunpack.c.l.b16 %v419
        %v490 = vunpack.c.l.b16 %v420
        %v491 = vunpack.c.l.b16 %v421
        %v492 = vunpack.c.l.b16 %v422
        %v493 = vunpack.c.l.b16 %v423
        %v494 = vunpack.c.l.b16 %v424
        %v495 = vunpack.c.l.b16 %v425
        %v496 = vunpack.c.l.b16 %v426
        %v497 = vunpack.c.l.b16 %v427
        %v498 = vunpack.c.l.b16 %v428
        %v499 = vpack.c.b16 %v468, %v467
        %v500 = vpack.c.b16 %v470, %v469
        %v501 = vpack.c.b16 %v472, %v471
        %v502 = vpack.c.b16 %v474, %v473
        %v503 = vpack.c.b16 %v476, %v475
        %v504 = vpack.c.b16 %v478, %v477
        %v505 = vpack.c.b16 %v480, %v479
        %v506 = vpack.c.b16 %v482, %v481
        %v507 = vpack.c.b16 %v484, %v483
        %v508 = vpack.c.b16 %v486, %v485
        %v509 = vpack.c.b16 %v488, %v487
        %v510 = vpack.c.b16 %v490, %v489
        %v511 = vpack.c.b16 %v492, %v491
        %v512 = vpack.c.b16 %v494, %v493
        %v513 = vpack.c.b16 %v496, %v495
        %v514 = vpack.c.b16 %v498, %v497
        %531 = vmatprep.subr.bf16.mxu0 0
        %532 = vmatpush1.bf16.msra.mxu0 %v499
        %533 = vmatprep.subr.bf16.mxu0 0
        %534 = vmatpush1.bf16.msra.mxu0 %v500
        %535 = vmatprep.subr.bf16.mxu0 0
        %536 = vmatpush1.bf16.msra.mxu0 %v501
        %537 = vmatprep.subr.bf16.mxu0 0
        %538 = vmatpush1.bf16.msra.mxu0 %v502
        %539 = vmatprep.subr.bf16.mxu0 0
        %540 = vmatpush1.bf16.msra.mxu0 %v503
        %541 = vmatprep.subr.bf16.mxu0 0
        %542 = vmatpush1.bf16.msra.mxu0 %v504
        %543 = vmatprep.subr.bf16.mxu0 0
        %544 = vmatpush1.bf16.msra.mxu0 %v505
        %545 = vmatprep.subr.bf16.mxu0 0
        %546 = vmatpush1.bf16.msra.mxu0 %v506
        %547 = vmatprep.subr.bf16.mxu0 0
        %548 = vmatpush1.bf16.msra.mxu0 %v507
        %549 = vmatprep.subr.bf16.mxu0 0
        %550 = vmatpush1.bf16.msra.mxu0 %v508
        %551 = vmatprep.subr.bf16.mxu0 0
        %552 = vmatpush1.bf16.msra.mxu0 %v509
        %553 = vmatprep.subr.bf16.mxu0 0
        %554 = vmatpush1.bf16.msra.mxu0 %v510
        %555 = vmatprep.subr.bf16.mxu0 0
        %556 = vmatpush1.bf16.msra.mxu0 %v511
        %557 = vmatprep.subr.bf16.mxu0 0
        %558 = vmatpush1.bf16.msra.mxu0 %v512
        %559 = vmatprep.subr.bf16.mxu0 0
        %560 = vmatpush1.bf16.msra.mxu0 %v513
        %561 = vmatprep.subr.bf16.mxu0 0
        %562 = vmatpush1.bf16.msra.mxu0 %v514
        %563 = vmatprep.mubr.bf16.mxu0 %v432
        %564 = vmatmul.mubr.bf16.gmra.mrb[0].mxu0 %v431
        %v565 = vpop.f32.mrb[0].mxu0
        %v566 = vadd.f32 0.0, %v565
        %v567 = vpop.f32.mrb[0].mxu0
        %v568 = vpop.f32.mrb[0].mxu0
        %v569 = vpop.f32.mrb[0].mxu0
        %570 = vdwg.mxu0
        %v603 = vunpack.c.l.b16 %v364
        %v604 = vunpack.c.l.b16 %v365
        %v605 = vunpack.c.l.b16 %v366
        %v606 = vunpack.c.l.b16 %v367
        %v607 = vunpack.c.l.b16 %v368
        %v608 = vunpack.c.l.b16 %v369
        %v609 = vunpack.c.l.b16 %v370
        %v610 = vunpack.c.l.b16 %v371
        %v611 = vunpack.c.l.b16 %v372
        %v612 = vunpack.c.l.b16 %v373
        %v613 = vunpack.c.l.b16 %v374
        %v614 = vunpack.c.l.b16 %v375
        %v615 = vunpack.c.l.b16 %v376
        %v616 = vunpack.c.l.b16 %v377
        %v617 = vunpack.c.l.b16 %v378
        %v618 = vunpack.c.l.b16 %v379
        %v619 = vunpack.c.l.b16 %v380
        %v620 = vunpack.c.l.b16 %v381
        %v621 = vunpack.c.l.b16 %v382
        %v622 = vunpack.c.l.b16 %v383
        %v623 = vunpack.c.l.b16 %v384
        %v624 = vunpack.c.l.b16 %v385
        %v625 = vunpack.c.l.b16 %v386
        %v626 = vunpack.c.l.b16 %v387
        %v627 = vunpack.c.l.b16 %v388
        %v628 = vunpack.c.l.b16 %v389
        %v629 = vunpack.c.l.b16 %v390
        %v630 = vunpack.c.l.b16 %v391
        %v631 = vunpack.c.l.b16 %v392
        %v632 = vunpack.c.l.b16 %v393
        %v633 = vunpack.c.l.b16 %v394
        %v634 = vunpack.c.l.b16 %v395
        %v635 = vpack.c.b16 %v604, %v603
        %v636 = vpack.c.b16 %v606, %v605
        %v637 = vpack.c.b16 %v608, %v607
        %v638 = vpack.c.b16 %v610, %v609
        %v639 = vpack.c.b16 %v612, %v611
        %v640 = vpack.c.b16 %v614, %v613
        %v641 = vpack.c.b16 %v616, %v615
        %v642 = vpack.c.b16 %v618, %v617
        %v643 = vpack.c.b16 %v620, %v619
        %v644 = vpack.c.b16 %v622, %v621
        %v645 = vpack.c.b16 %v624, %v623
        %v646 = vpack.c.b16 %v626, %v625
        %v647 = vpack.c.b16 %v628, %v627
        %v648 = vpack.c.b16 %v630, %v629
        %v649 = vpack.c.b16 %v632, %v631
        %v650 = vpack.c.b16 %v634, %v633
        %667 = vmatprep.subr.bf16.mxu0 0
        %668 = vmatpush1.bf16.msra.mxu0 %v635
        %669 = vmatprep.subr.bf16.mxu0 0
        %670 = vmatpush1.bf16.msra.mxu0 %v636
        %671 = vmatprep.subr.bf16.mxu0 0
        %672 = vmatpush1.bf16.msra.mxu0 %v637
        %673 = vmatprep.subr.bf16.mxu0 0
        %674 = vmatpush1.bf16.msra.mxu0 %v638
        %675 = vmatprep.subr.bf16.mxu0 0
        %676 = vmatpush1.bf16.msra.mxu0 %v639
        %677 = vmatprep.subr.bf16.mxu0 0
        %678 = vmatpush1.bf16.msra.mxu0 %v640
        %679 = vmatprep.subr.bf16.mxu0 0
        %680 = vmatpush1.bf16.msra.mxu0 %v641
        %681 = vmatprep.subr.bf16.mxu0 0
        %682 = vmatpush1.bf16.msra.mxu0 %v642
        %683 = vmatprep.subr.bf16.mxu0 0
        %684 = vmatpush1.bf16.msra.mxu0 %v643
        %685 = vmatprep.subr.bf16.mxu0 0
        %686 = vmatpush1.bf16.msra.mxu0 %v644
        %687 = vmatprep.subr.bf16.mxu0 0
        %688 = vmatpush1.bf16.msra.mxu0 %v645
        %689 = vmatprep.subr.bf16.mxu0 0
        %690 = vmatpush1.bf16.msra.mxu0 %v646
        %691 = vmatprep.subr.bf16.mxu0 0
        %692 = vmatpush1.bf16.msra.mxu0 %v647
        %693 = vmatprep.subr.bf16.mxu0 0
        %694 = vmatpush1.bf16.msra.mxu0 %v648
        %695 = vmatprep.subr.bf16.mxu0 0
        %696 = vmatpush1.bf16.msra.mxu0 %v649
        %697 = vmatprep.subr.bf16.mxu0 0
        %698 = vmatpush1.bf16.msra.mxu0 %v650
        %699 = vmatprep.mubr.bf16.mxu0 %v357
        %700 = vmatmul.mubr.bf16.gmra.mrb[0].mxu0 %v356
        %v701 = vpop.f32.mrb[0].mxu0
        %v702 = vadd.f32 %v566, %v701
        %v703 = vpop.f32.mrb[0].mxu0
        %v704 = vpop.f32.mrb[0].mxu0
        %v705 = vpop.f32.mrb[0].mxu0
        %706 = vdwg.mxu0
        %s707 = scalar_lea.vmem %s186, 256 [#allocation6]
        %v708 = vld [vmem:[%s707] sm:$0xf]
        %v709 = vld [vmem:[%s707 + $0x4] sm:$0xf]
        %v710 = vld [vmem:[%s707 + $0x8] sm:$0xf]
        %v711 = vld [vmem:[%s707 + $0xc] sm:$0xf]
        %v712 = vld [vmem:[%s707 + $0x10] sm:$0xf]
        %v713 = vld [vmem:[%s707 + $0x14] sm:$0xf]
        %v714 = vld [vmem:[%s707 + $0x18] sm:$0xf]
        %v715 = vld [vmem:[%s707 + $0x1c] sm:$0xf]
        %v716 = vld [vmem:[%s707 + $0x20] sm:$0xf]
        %v717 = vld [vmem:[%s707 + $0x24] sm:$0xf]
        %v718 = vld [vmem:[%s707 + $0x28] sm:$0xf]
        %v719 = vld [vmem:[%s707 + $0x2c] sm:$0xf]
        %v720 = vld [vmem:[%s707 + $0x30] sm:$0xf]
        %v721 = vld [vmem:[%s707 + $0x34] sm:$0xf]
        %v722 = vld [vmem:[%s707 + $0x38] sm:$0xf]
        %v723 = vld [vmem:[%s707 + $0x3c] sm:$0xf]
        %v724 = vld [vmem:[%s707 + $0x40] sm:$0xf]
        %v725 = vld [vmem:[%s707 + $0x44] sm:$0xf]
        %v726 = vld [vmem:[%s707 + $0x48] sm:$0xf]
        %v727 = vld [vmem:[%s707 + $0x4c] sm:$0xf]
        %v728 = vld [vmem:[%s707 + $0x50] sm:$0xf]
        %v729 = vld [vmem:[%s707 + $0x54] sm:$0xf]
        %v730 = vld [vmem:[%s707 + $0x58] sm:$0xf]
        %v731 = vld [vmem:[%s707 + $0x5c] sm:$0xf]
        %v732 = vld [vmem:[%s707 + $0x60] sm:$0xf]
        %v733 = vld [vmem:[%s707 + $0x64] sm:$0xf]
        %v734 = vld [vmem:[%s707 + $0x68] sm:$0xf]
        %v735 = vld [vmem:[%s707 + $0x6c] sm:$0xf]
        %v736 = vld [vmem:[%s707 + $0x70] sm:$0xf]
        %v737 = vld [vmem:[%s707 + $0x74] sm:$0xf]
        %v738 = vld [vmem:[%s707 + $0x78] sm:$0xf]
        %v739 = vld [vmem:[%s707 + $0x7c] sm:$0xf]
        %v740 = vrot.slane %v356, 2
        %v741 = vrot.slane %v357, 2
        %v776 = vunpack.c.l.b16 %v708
        %v777 = vunpack.c.l.b16 %v709
        %v778 = vunpack.c.l.b16 %v710
        %v779 = vunpack.c.l.b16 %v711
        %v780 = vunpack.c.l.b16 %v712
        %v781 = vunpack.c.l.b16 %v713
        %v782 = vunpack.c.l.b16 %v714
        %v783 = vunpack.c.l.b16 %v715
        %v784 = vunpack.c.l.b16 %v716
        %v785 = vunpack.c.l.b16 %v717
        %v786 = vunpack.c.l.b16 %v718
        %v787 = vunpack.c.l.b16 %v719
        %v788 = vunpack.c.l.b16 %v720
        %v789 = vunpack.c.l.b16 %v721
        %v790 = vunpack.c.l.b16 %v722
        %v791 = vunpack.c.l.b16 %v723
        %v792 = vunpack.c.l.b16 %v724
        %v793 = vunpack.c.l.b16 %v725
        %v794 = vunpack.c.l.b16 %v726
        %v795 = vunpack.c.l.b16 %v727
        %v796 = vunpack.c.l.b16 %v728
        %v797 = vunpack.c.l.b16 %v729
        %v798 = vunpack.c.l.b16 %v730
        %v799 = vunpack.c.l.b16 %v731
        %v800 = vunpack.c.l.b16 %v732
        %v801 = vunpack.c.l.b16 %v733
        %v802 = vunpack.c.l.b16 %v734
        %v803 = vunpack.c.l.b16 %v735
        %v804 = vunpack.c.l.b16 %v736
        %v805 = vunpack.c.l.b16 %v737
        %v806 = vunpack.c.l.b16 %v738
        %v807 = vunpack.c.l.b16 %v739
        %v808 = vpack.c.b16 %v777, %v776
        %v809 = vpack.c.b16 %v779, %v778
        %v810 = vpack.c.b16 %v781, %v780
        %v811 = vpack.c.b16 %v783, %v782
        %v812 = vpack.c.b16 %v785, %v784
        %v813 = vpack.c.b16 %v787, %v786
        %v814 = vpack.c.b16 %v789, %v788
        %v815 = vpack.c.b16 %v791, %v790
        %v816 = vpack.c.b16 %v793, %v792
        %v817 = vpack.c.b16 %v795, %v794
        %v818 = vpack.c.b16 %v797, %v796
        %v819 = vpack.c.b16 %v799, %v798
        %v820 = vpack.c.b16 %v801, %v800
        %v821 = vpack.c.b16 %v803, %v802
        %v822 = vpack.c.b16 %v805, %v804
        %v823 = vpack.c.b16 %v807, %v806
        %840 = vmatprep.subr.bf16.mxu0 0
        %841 = vmatpush1.bf16.msra.mxu0 %v808
        %842 = vmatprep.subr.bf16.mxu0 0
        %843 = vmatpush1.bf16.msra.mxu0 %v809
        %844 = vmatprep.subr.bf16.mxu0 0
        %845 = vmatpush1.bf16.msra.mxu0 %v810
        %846 = vmatprep.subr.bf16.mxu0 0
        %847 = vmatpush1.bf16.msra.mxu0 %v811
        %848 = vmatprep.subr.bf16.mxu0 0
        %849 = vmatpush1.bf16.msra.mxu0 %v812
        %850 = vmatprep.subr.bf16.mxu0 0
        %851 = vmatpush1.bf16.msra.mxu0 %v813
        %852 = vmatprep.subr.bf16.mxu0 0
        %853 = vmatpush1.bf16.msra.mxu0 %v814
        %854 = vmatprep.subr.bf16.mxu0 0
        %855 = vmatpush1.bf16.msra.mxu0 %v815
        %856 = vmatprep.subr.bf16.mxu0 0
        %857 = vmatpush1.bf16.msra.mxu0 %v816
        %858 = vmatprep.subr.bf16.mxu0 0
        %859 = vmatpush1.bf16.msra.mxu0 %v817
        %860 = vmatprep.subr.bf16.mxu0 0
        %861 = vmatpush1.bf16.msra.mxu0 %v818
        %862 = vmatprep.subr.bf16.mxu0 0
        %863 = vmatpush1.bf16.msra.mxu0 %v819
        %864 = vmatprep.subr.bf16.mxu0 0
        %865 = vmatpush1.bf16.msra.mxu0 %v820
        %866 = vmatprep.subr.bf16.mxu0 0
        %867 = vmatpush1.bf16.msra.mxu0 %v821
        %868 = vmatprep.subr.bf16.mxu0 0
        %869 = vmatpush1.bf16.msra.mxu0 %v822
        %870 = vmatprep.subr.bf16.mxu0 0
        %871 = vmatpush1.bf16.msra.mxu0 %v823
        %872 = vmatprep.mubr.bf16.mxu0 %v741
        %873 = vmatmul.mubr.bf16.gmra.mrb[0].mxu0 %v740
        %v874 = vpop.f32.mrb[0].mxu0
        %v875 = vadd.f32 0.0, %v874
        %v876 = vpop.f32.mrb[0].mxu0
        %v877 = vpop.f32.mrb[0].mxu0
        %v878 = vpop.f32.mrb[0].mxu0
        %879 = vdwg.mxu0
        %v880 = vadd.f32 %v702, %v875
        %s881 = scalar_lea.vmem %s186, 384 [#allocation6]
        %v882 = vld [vmem:[%s881] sm:$0xf]
        %v883 = vld [vmem:[%s881 + $0x4] sm:$0xf]
        %v884 = vld [vmem:[%s881 + $0x8] sm:$0xf]
        %v885 = vld [vmem:[%s881 + $0xc] sm:$0xf]
        %v886 = vld [vmem:[%s881 + $0x10] sm:$0xf]
        %v887 = vld [vmem:[%s881 + $0x14] sm:$0xf]
        %v888 = vld [vmem:[%s881 + $0x18] sm:$0xf]
        %v889 = vld [vmem:[%s881 + $0x1c] sm:$0xf]
        %v890 = vld [vmem:[%s881 + $0x20] sm:$0xf]
        %v891 = vld [vmem:[%s881 + $0x24] sm:$0xf]
        %v892 = vld [vmem:[%s881 + $0x28] sm:$0xf]
        %v893 = vld [vmem:[%s881 + $0x2c] sm:$0xf]
        %v894 = vld [vmem:[%s881 + $0x30] sm:$0xf]
        %v895 = vld [vmem:[%s881 + $0x34] sm:$0xf]
        %v896 = vld [vmem:[%s881 + $0x38] sm:$0xf]
        %v897 = vld [vmem:[%s881 + $0x3c] sm:$0xf]
        %v898 = vld [vmem:[%s881 + $0x40] sm:$0xf]
        %v899 = vld [vmem:[%s881 + $0x44] sm:$0xf]
        %v900 = vld [vmem:[%s881 + $0x48] sm:$0xf]
        %v901 = vld [vmem:[%s881 + $0x4c] sm:$0xf]
        %v902 = vld [vmem:[%s881 + $0x50] sm:$0xf]
        %v903 = vld [vmem:[%s881 + $0x54] sm:$0xf]
        %v904 = vld [vmem:[%s881 + $0x58] sm:$0xf]
        %v905 = vld [vmem:[%s881 + $0x5c] sm:$0xf]
        %v906 = vld [vmem:[%s881 + $0x60] sm:$0xf]
        %v907 = vld [vmem:[%s881 + $0x64] sm:$0xf]
        %v908 = vld [vmem:[%s881 + $0x68] sm:$0xf]
        %v909 = vld [vmem:[%s881 + $0x6c] sm:$0xf]
        %v910 = vld [vmem:[%s881 + $0x70] sm:$0xf]
        %v911 = vld [vmem:[%s881 + $0x74] sm:$0xf]
        %v912 = vld [vmem:[%s881 + $0x78] sm:$0xf]
        %v913 = vld [vmem:[%s881 + $0x7c] sm:$0xf]
        %v914 = vrot.slane %v356, 3
        %v915 = vrot.slane %v357, 3
        %v950 = vunpack.c.l.b16 %v882
        %v951 = vunpack.c.l.b16 %v883
        %v952 = vunpack.c.l.b16 %v884
        %v953 = vunpack.c.l.b16 %v885
        %v954 = vunpack.c.l.b16 %v886
        %v955 = vunpack.c.l.b16 %v887
        %v956 = vunpack.c.l.b16 %v888
        %v957 = vunpack.c.l.b16 %v889
        %v958 = vunpack.c.l.b16 %v890
        %v959 = vunpack.c.l.b16 %v891
        %v960 = vunpack.c.l.b16 %v892
        %v961 = vunpack.c.l.b16 %v893
        %v962 = vunpack.c.l.b16 %v894
        %v963 = vunpack.c.l.b16 %v895
        %v964 = vunpack.c.l.b16 %v896
        %v965 = vunpack.c.l.b16 %v897
        %v966 = vunpack.c.l.b16 %v898
        %v967 = vunpack.c.l.b16 %v899
        %v968 = vunpack.c.l.b16 %v900
        %v969 = vunpack.c.l.b16 %v901
        %v970 = vunpack.c.l.b16 %v902
        %v971 = vunpack.c.l.b16 %v903
        %v972 = vunpack.c.l.b16 %v904
        %v973 = vunpack.c.l.b16 %v905
        %v974 = vunpack.c.l.b16 %v906
        %v975 = vunpack.c.l.b16 %v907
        %v976 = vunpack.c.l.b16 %v908
        %v977 = vunpack.c.l.b16 %v909
        %v978 = vunpack.c.l.b16 %v910
        %v979 = vunpack.c.l.b16 %v911
        %v980 = vunpack.c.l.b16 %v912
        %v981 = vunpack.c.l.b16 %v913
        %v982 = vpack.c.b16 %v951, %v950
        %v983 = vpack.c.b16 %v953, %v952
        %v984 = vpack.c.b16 %v955, %v954
        %v985 = vpack.c.b16 %v957, %v956
        %v986 = vpack.c.b16 %v959, %v958
        %v987 = vpack.c.b16 %v961, %v960
        %v988 = vpack.c.b16 %v963, %v962
        %v989 = vpack.c.b16 %v965, %v964
        %v990 = vpack.c.b16 %v967, %v966
        %v991 = vpack.c.b16 %v969, %v968
        %v992 = vpack.c.b16 %v971, %v970
        %v993 = vpack.c.b16 %v973, %v972
        %v994 = vpack.c.b16 %v975, %v974
        %v995 = vpack.c.b16 %v977, %v976
        %v996 = vpack.c.b16 %v979, %v978
        %v997 = vpack.c.b16 %v981, %v980
        %1014 = vmatprep.subr.bf16.mxu0 0
        %1015 = vmatpush1.bf16.msra.mxu0 %v982
        %1016 = vmatprep.subr.bf16.mxu0 0
        %1017 = vmatpush1.bf16.msra.mxu0 %v983
        %1018 = vmatprep.subr.bf16.mxu0 0
        %1019 = vmatpush1.bf16.msra.mxu0 %v984
        %1020 = vmatprep.subr.bf16.mxu0 0
        %1021 = vmatpush1.bf16.msra.mxu0 %v985
        %1022 = vmatprep.subr.bf16.mxu0 0
        %1023 = vmatpush1.bf16.msra.mxu0 %v986
        %1024 = vmatprep.subr.bf16.mxu0 0
        %1025 = vmatpush1.bf16.msra.mxu0 %v987
        %1026 = vmatprep.subr.bf16.mxu0 0
        %1027 = vmatpush1.bf16.msra.mxu0 %v988
        %1028 = vmatprep.subr.bf16.mxu0 0
        %1029 = vmatpush1.bf16.msra.mxu0 %v989
        %1030 = vmatprep.subr.bf16.mxu0 0
        %1031 = vmatpush1.bf16.msra.mxu0 %v990
        %1032 = vmatprep.subr.bf16.mxu0 0
        %1033 = vmatpush1.bf16.msra.mxu0 %v991
        %1034 = vmatprep.subr.bf16.mxu0 0
        %1035 = vmatpush1.bf16.msra.mxu0 %v992
        %1036 = vmatprep.subr.bf16.mxu0 0
        %1037 = vmatpush1.bf16.msra.mxu0 %v993
        %1038 = vmatprep.subr.bf16.mxu0 0
        %1039 = vmatpush1.bf16.msra.mxu0 %v994
        %1040 = vmatprep.subr.bf16.mxu0 0
        %1041 = vmatpush1.bf16.msra.mxu0 %v995
        %1042 = vmatprep.subr.bf16.mxu0 0
        %1043 = vmatpush1.bf16.msra.mxu0 %v996
        %1044 = vmatprep.subr.bf16.mxu0 0
        %1045 = vmatpush1.bf16.msra.mxu0 %v997
        %1046 = vmatprep.mubr.bf16.mxu0 %v915
        %1047 = vmatmul.mubr.bf16.gmra.mrb[0].mxu0 %v914
        %v1048 = vpop.f32.mrb[0].mxu0
        %v1049 = vadd.f32 0.0, %v1048
        %v1050 = vpop.f32.mrb[0].mxu0
        %v1051 = vpop.f32.mrb[0].mxu0
        %v1052 = vpop.f32.mrb[0].mxu0
        %1053 = vdwg.mxu0
        %v1054 = vadd.f32 %v880, %v1049
        %s1055 = scalar_lea.vmem %s186, 512 [#allocation6]
        %v1056 = vld [vmem:[%s1055] sm:$0xf]
        %v1057 = vld [vmem:[%s1055 + $0x4] sm:$0xf]
        %v1058 = vld [vmem:[%s1055 + $0x8] sm:$0xf]
        %v1059 = vld [vmem:[%s1055 + $0xc] sm:$0xf]
        %v1060 = vld [vmem:[%s1055 + $0x10] sm:$0xf]
        %v1061 = vld [vmem:[%s1055 + $0x14] sm:$0xf]
        %v1062 = vld [vmem:[%s1055 + $0x18] sm:$0xf]
        %v1063 = vld [vmem:[%s1055 + $0x1c] sm:$0xf]
        %v1064 = vld [vmem:[%s1055 + $0x20] sm:$0xf]
        %v1065 = vld [vmem:[%s1055 + $0x24] sm:$0xf]
        %v1066 = vld [vmem:[%s1055 + $0x28] sm:$0xf]
        %v1067 = vld [vmem:[%s1055 + $0x2c] sm:$0xf]
        %v1068 = vld [vmem:[%s1055 + $0x30] sm:$0xf]
        %v1069 = vld [vmem:[%s1055 + $0x34] sm:$0xf]
        %v1070 = vld [vmem:[%s1055 + $0x38] sm:$0xf]
        %v1071 = vld [vmem:[%s1055 + $0x3c] sm:$0xf]
        %v1072 = vld [vmem:[%s1055 + $0x40] sm:$0xf]
        %v1073 = vld [vmem:[%s1055 + $0x44] sm:$0xf]
        %v1074 = vld [vmem:[%s1055 + $0x48] sm:$0xf]
        %v1075 = vld [vmem:[%s1055 + $0x4c] sm:$0xf]
        %v1076 = vld [vmem:[%s1055 + $0x50] sm:$0xf]
        %v1077 = vld [vmem:[%s1055 + $0x54] sm:$0xf]
        %v1078 = vld [vmem:[%s1055 + $0x58] sm:$0xf]
        %v1079 = vld [vmem:[%s1055 + $0x5c] sm:$0xf]
        %v1080 = vld [vmem:[%s1055 + $0x60] sm:$0xf]
        %v1081 = vld [vmem:[%s1055 + $0x64] sm:$0xf]
        %v1082 = vld [vmem:[%s1055 + $0x68] sm:$0xf]
        %v1083 = vld [vmem:[%s1055 + $0x6c] sm:$0xf]
        %v1084 = vld [vmem:[%s1055 + $0x70] sm:$0xf]
        %v1085 = vld [vmem:[%s1055 + $0x74] sm:$0xf]
        %v1086 = vld [vmem:[%s1055 + $0x78] sm:$0xf]
        %v1087 = vld [vmem:[%s1055 + $0x7c] sm:$0xf]
        %v1088 = vrot.slane %v356, 4
        %v1089 = vrot.slane %v357, 4
        %v1124 = vunpack.c.l.b16 %v1056
        %v1125 = vunpack.c.l.b16 %v1057
        %v1126 = vunpack.c.l.b16 %v1058
        %v1127 = vunpack.c.l.b16 %v1059
        %v1128 = vunpack.c.l.b16 %v1060
        %v1129 = vunpack.c.l.b16 %v1061
        %v1130 = vunpack.c.l.b16 %v1062
        %v1131 = vunpack.c.l.b16 %v1063
        %v1132 = vunpack.c.l.b16 %v1064
        %v1133 = vunpack.c.l.b16 %v1065
        %v1134 = vunpack.c.l.b16 %v1066
        %v1135 = vunpack.c.l.b16 %v1067
        %v1136 = vunpack.c.l.b16 %v1068
        %v1137 = vunpack.c.l.b16 %v1069
        %v1138 = vunpack.c.l.b16 %v1070
        %v1139 = vunpack.c.l.b16 %v1071
        %v1140 = vunpack.c.l.b16 %v1072
        %v1141 = vunpack.c.l.b16 %v1073
        %v1142 = vunpack.c.l.b16 %v1074
        %v1143 = vunpack.c.l.b16 %v1075
        %v1144 = vunpack.c.l.b16 %v1076
        %v1145 = vunpack.c.l.b16 %v1077
        %v1146 = vunpack.c.l.b16 %v1078
        %v1147 = vunpack.c.l.b16 %v1079
        %v1148 = vunpack.c.l.b16 %v1080
        %v1149 = vunpack.c.l.b16 %v1081
        %v1150 = vunpack.c.l.b16 %v1082
        %v1151 = vunpack.c.l.b16 %v1083
        %v1152 = vunpack.c.l.b16 %v1084
        %v1153 = vunpack.c.l.b16 %v1085
        %v1154 = vunpack.c.l.b16 %v1086
        %v1155 = vunpack.c.l.b16 %v1087
        %v1156 = vpack.c.b16 %v1125, %v1124
        %v1157 = vpack.c.b16 %v1127, %v1126
        %v1158 = vpack.c.b16 %v1129, %v1128
        %v1159 = vpack.c.b16 %v1131, %v1130
        %v1160 = vpack.c.b16 %v1133, %v1132
        %v1161 = vpack.c.b16 %v1135, %v1134
        %v1162 = vpack.c.b16 %v1137, %v1136
        %v1163 = vpack.c.b16 %v1139, %v1138
        %v1164 = vpack.c.b16 %v1141, %v1140
        %v1165 = vpack.c.b16 %v1143, %v1142
        %v1166 = vpack.c.b16 %v1145, %v1144
        %v1167 = vpack.c.b16 %v1147, %v1146
        %v1168 = vpack.c.b16 %v1149, %v1148
        %v1169 = vpack.c.b16 %v1151, %v1150
        %v1170 = vpack.c.b16 %v1153, %v1152
        %v1171 = vpack.c.b16 %v1155, %v1154
        %1188 = vmatprep.subr.bf16.mxu0 0
        %1189 = vmatpush1.bf16.msra.mxu0 %v1156
        %1190 = vmatprep.subr.bf16.mxu0 0
        %1191 = vmatpush1.bf16.msra.mxu0 %v1157
        %1192 = vmatprep.subr.bf16.mxu0 0
        %1193 = vmatpush1.bf16.msra.mxu0 %v1158
        %1194 = vmatprep.subr.bf16.mxu0 0
        %1195 = vmatpush1.bf16.msra.mxu0 %v1159
        %1196 = vmatprep.subr.bf16.mxu0 0
        %1197 = vmatpush1.bf16.msra.mxu0 %v1160
        %1198 = vmatprep.subr.bf16.mxu0 0
        %1199 = vmatpush1.bf16.msra.mxu0 %v1161
        %1200 = vmatprep.subr.bf16.mxu0 0
        %1201 = vmatpush1.bf16.msra.mxu0 %v1162
        %1202 = vmatprep.subr.bf16.mxu0 0
        %1203 = vmatpush1.bf16.msra.mxu0 %v1163
        %1204 = vmatprep.subr.bf16.mxu0 0
        %1205 = vmatpush1.bf16.msra.mxu0 %v1164
        %1206 = vmatprep.subr.bf16.mxu0 0
        %1207 = vmatpush1.bf16.msra.mxu0 %v1165
        %1208 = vmatprep.subr.bf16.mxu0 0
        %1209 = vmatpush1.bf16.msra.mxu0 %v1166
        %1210 = vmatprep.subr.bf16.mxu0 0
        %1211 = vmatpush1.bf16.msra.mxu0 %v1167
        %1212 = vmatprep.subr.bf16.mxu0 0
        %1213 = vmatpush1.bf16.msra.mxu0 %v1168
        %1214 = vmatprep.subr.bf16.mxu0 0
        %1215 = vmatpush1.bf16.msra.mxu0 %v1169
        %1216 = vmatprep.subr.bf16.mxu0 0
        %1217 = vmatpush1.bf16.msra.mxu0 %v1170
        %1218 = vmatprep.subr.bf16.mxu0 0
        %1219 = vmatpush1.bf16.msra.mxu0 %v1171
        %1220 = vmatprep.mubr.bf16.mxu0 %v1089
        %1221 = vmatmul.mubr.bf16.gmra.mrb[0].mxu0 %v1088
        %v1222 = vpop.f32.mrb[0].mxu0
        %v1223 = vadd.f32 0.0, %v1222
        %v1224 = vpop.f32.mrb[0].mxu0
        %v1225 = vpop.f32.mrb[0].mxu0
        %v1226 = vpop.f32.mrb[0].mxu0
        %1227 = vdwg.mxu0
        %v1228 = vadd.f32 %v1054, %v1223
        %s1229 = scalar_lea.vmem %s186, 640 [#allocation6]
        %v1230 = vld [vmem:[%s1229] sm:$0xf]
        %v1231 = vld [vmem:[%s1229 + $0x4] sm:$0xf]
        %v1232 = vld [vmem:[%s1229 + $0x8] sm:$0xf]
        %v1233 = vld [vmem:[%s1229 + $0xc] sm:$0xf]
        %v1234 = vld [vmem:[%s1229 + $0x10] sm:$0xf]
        %v1235 = vld [vmem:[%s1229 + $0x14] sm:$0xf]
        %v1236 = vld [vmem:[%s1229 + $0x18] sm:$0xf]
        %v1237 = vld [vmem:[%s1229 + $0x1c] sm:$0xf]
        %v1238 = vld [vmem:[%s1229 + $0x20] sm:$0xf]
        %v1239 = vld [vmem:[%s1229 + $0x24] sm:$0xf]
        %v1240 = vld [vmem:[%s1229 + $0x28] sm:$0xf]
        %v1241 = vld [vmem:[%s1229 + $0x2c] sm:$0xf]
        %v1242 = vld [vmem:[%s1229 + $0x30] sm:$0xf]
        %v1243 = vld [vmem:[%s1229 + $0x34] sm:$0xf]
        %v1244 = vld [vmem:[%s1229 + $0x38] sm:$0xf]
        %v1245 = vld [vmem:[%s1229 + $0x3c] sm:$0xf]
        %v1246 = vld [vmem:[%s1229 + $0x40] sm:$0xf]
        %v1247 = vld [vmem:[%s1229 + $0x44] sm:$0xf]
        %v1248 = vld [vmem:[%s1229 + $0x48] sm:$0xf]
        %v1249 = vld [vmem:[%s1229 + $0x4c] sm:$0xf]
        %v1250 = vld [vmem:[%s1229 + $0x50] sm:$0xf]
        %v1251 = vld [vmem:[%s1229 + $0x54] sm:$0xf]
        %v1252 = vld [vmem:[%s1229 + $0x58] sm:$0xf]
        %v1253 = vld [vmem:[%s1229 + $0x5c] sm:$0xf]
        %v1254 = vld [vmem:[%s1229 + $0x60] sm:$0xf]
        %v1255 = vld [vmem:[%s1229 + $0x64] sm:$0xf]
        %v1256 = vld [vmem:[%s1229 + $0x68] sm:$0xf]
        %v1257 = vld [vmem:[%s1229 + $0x6c] sm:$0xf]
        %v1258 = vld [vmem:[%s1229 + $0x70] sm:$0xf]
        %v1259 = vld [vmem:[%s1229 + $0x74] sm:$0xf]
        %v1260 = vld [vmem:[%s1229 + $0x78] sm:$0xf]
        %v1261 = vld [vmem:[%s1229 + $0x7c] sm:$0xf]
        %v1262 = vrot.slane %v356, 5
        %v1263 = vrot.slane %v357, 5
        %v1298 = vunpack.c.l.b16 %v1230
        %v1299 = vunpack.c.l.b16 %v1231
        %v1300 = vunpack.c.l.b16 %v1232
        %v1301 = vunpack.c.l.b16 %v1233
        %v1302 = vunpack.c.l.b16 %v1234
        %v1303 = vunpack.c.l.b16 %v1235
        %v1304 = vunpack.c.l.b16 %v1236
        %v1305 = vunpack.c.l.b16 %v1237
        %v1306 = vunpack.c.l.b16 %v1238
        %v1307 = vunpack.c.l.b16 %v1239
        %v1308 = vunpack.c.l.b16 %v1240
        %v1309 = vunpack.c.l.b16 %v1241
        %v1310 = vunpack.c.l.b16 %v1242
        %v1311 = vunpack.c.l.b16 %v1243
        %v1312 = vunpack.c.l.b16 %v1244
        %v1313 = vunpack.c.l.b16 %v1245
        %v1314 = vunpack.c.l.b16 %v1246
        %v1315 = vunpack.c.l.b16 %v1247
        %v1316 = vunpack.c.l.b16 %v1248
        %v1317 = vunpack.c.l.b16 %v1249
        %v1318 = vunpack.c.l.b16 %v1250
        %v1319 = vunpack.c.l.b16 %v1251
        %v1320 = vunpack.c.l.b16 %v1252
        %v1321 = vunpack.c.l.b16 %v1253
        %v1322 = vunpack.c.l.b16 %v1254
        %v1323 = vunpack.c.l.b16 %v1255
        %v1324 = vunpack.c.l.b16 %v1256
        %v1325 = vunpack.c.l.b16 %v1257
        %v1326 = vunpack.c.l.b16 %v1258
        %v1327 = vunpack.c.l.b16 %v1259
        %v1328 = vunpack.c.l.b16 %v1260
        %v1329 = vunpack.c.l.b16 %v1261
        %v1330 = vpack.c.b16 %v1299, %v1298
        %v1331 = vpack.c.b16 %v1301, %v1300
        %v1332 = vpack.c.b16 %v1303, %v1302
        %v1333 = vpack.c.b16 %v1305, %v1304
        %v1334 = vpack.c.b16 %v1307, %v1306
        %v1335 = vpack.c.b16 %v1309, %v1308
        %v1336 = vpack.c.b16 %v1311, %v1310
        %v1337 = vpack.c.b16 %v1313, %v1312
        %v1338 = vpack.c.b16 %v1315, %v1314
        %v1339 = vpack.c.b16 %v1317, %v1316
        %v1340 = vpack.c.b16 %v1319, %v1318
        %v1341 = vpack.c.b16 %v1321, %v1320
        %v1342 = vpack.c.b16 %v1323, %v1322
        %v1343 = vpack.c.b16 %v1325, %v1324
        %v1344 = vpack.c.b16 %v1327, %v1326
        %v1345 = vpack.c.b16 %v1329, %v1328
        %1362 = vmatprep.subr.bf16.mxu0 0
        %1363 = vmatpush1.bf16.msra.mxu0 %v1330
        %1364 = vmatprep.subr.bf16.mxu0 0
        %1365 = vmatpush1.bf16.msra.mxu0 %v1331
        %1366 = vmatprep.subr.bf16.mxu0 0
        %1367 = vmatpush1.bf16.msra.mxu0 %v1332
        %1368 = vmatprep.subr.bf16.mxu0 0
        %1369 = vmatpush1.bf16.msra.mxu0 %v1333
        %1370 = vmatprep.subr.bf16.mxu0 0
        %1371 = vmatpush1.bf16.msra.mxu0 %v1334
        %1372 = vmatprep.subr.bf16.mxu0 0
        %1373 = vmatpush1.bf16.msra.mxu0 %v1335
        %1374 = vmatprep.subr.bf16.mxu0 0
        %1375 = vmatpush1.bf16.msra.mxu0 %v1336
        %1376 = vmatprep.subr.bf16.mxu0 0
        %1377 = vmatpush1.bf16.msra.mxu0 %v1337
        %1378 = vmatprep.subr.bf16.mxu0 0
        %1379 = vmatpush1.bf16.msra.mxu0 %v1338
        %1380 = vmatprep.subr.bf16.mxu0 0
        %1381 = vmatpush1.bf16.msra.mxu0 %v1339
        %1382 = vmatprep.subr.bf16.mxu0 0
        %1383 = vmatpush1.bf16.msra.mxu0 %v1340
        %1384 = vmatprep.subr.bf16.mxu0 0
        %1385 = vmatpush1.bf16.msra.mxu0 %v1341
        %1386 = vmatprep.subr.bf16.mxu0 0
        %1387 = vmatpush1.bf16.msra.mxu0 %v1342
        %1388 = vmatprep.subr.bf16.mxu0 0
        %1389 = vmatpush1.bf16.msra.mxu0 %v1343
        %1390 = vmatprep.subr.bf16.mxu0 0
        %1391 = vmatpush1.bf16.msra.mxu0 %v1344
        %1392 = vmatprep.subr.bf16.mxu0 0
        %1393 = vmatpush1.bf16.msra.mxu0 %v1345
        %1394 = vmatprep.mubr.bf16.mxu0 %v1263
        %1395 = vmatmul.mubr.bf16.gmra.mrb[0].mxu0 %v1262
        %v1396 = vpop.f32.mrb[0].mxu0
        %v1397 = vadd.f32 0.0, %v1396
        %v1398 = vpop.f32.mrb[0].mxu0
        %v1399 = vpop.f32.mrb[0].mxu0
        %v1400 = vpop.f32.mrb[0].mxu0
        %1401 = vdwg.mxu0
        %v1402 = vadd.f32 %v1228, %v1397
        %s1403 = scalar_lea.vmem %s186, 768 [#allocation6]
        %v1404 = vld [vmem:[%s1403] sm:$0xf]
        %v1405 = vld [vmem:[%s1403 + $0x4] sm:$0xf]
        %v1406 = vld [vmem:[%s1403 + $0x8] sm:$0xf]
        %v1407 = vld [vmem:[%s1403 + $0xc] sm:$0xf]
        %v1408 = vld [vmem:[%s1403 + $0x10] sm:$0xf]
        %v1409 = vld [vmem:[%s1403 + $0x14] sm:$0xf]
        %v1410 = vld [vmem:[%s1403 + $0x18] sm:$0xf]
        %v1411 = vld [vmem:[%s1403 + $0x1c] sm:$0xf]
        %v1412 = vld [vmem:[%s1403 + $0x20] sm:$0xf]
        %v1413 = vld [vmem:[%s1403 + $0x24] sm:$0xf]
        %v1414 = vld [vmem:[%s1403 + $0x28] sm:$0xf]
        %v1415 = vld [vmem:[%s1403 + $0x2c] sm:$0xf]
        %v1416 = vld [vmem:[%s1403 + $0x30] sm:$0xf]
        %v1417 = vld [vmem:[%s1403 + $0x34] sm:$0xf]
        %v1418 = vld [vmem:[%s1403 + $0x38] sm:$0xf]
        %v1419 = vld [vmem:[%s1403 + $0x3c] sm:$0xf]
        %v1420 = vld [vmem:[%s1403 + $0x40] sm:$0xf]
        %v1421 = vld [vmem:[%s1403 + $0x44] sm:$0xf]
        %v1422 = vld [vmem:[%s1403 + $0x48] sm:$0xf]
        %v1423 = vld [vmem:[%s1403 + $0x4c] sm:$0xf]
        %v1424 = vld [vmem:[%s1403 + $0x50] sm:$0xf]
        %v1425 = vld [vmem:[%s1403 + $0x54] sm:$0xf]
        %v1426 = vld [vmem:[%s1403 + $0x58] sm:$0xf]
        %v1427 = vld [vmem:[%s1403 + $0x5c] sm:$0xf]
        %v1428 = vld [vmem:[%s1403 + $0x60] sm:$0xf]
        %v1429 = vld [vmem:[%s1403 + $0x64] sm:$0xf]
        %v1430 = vld [vmem:[%s1403 + $0x68] sm:$0xf]
        %v1431 = vld [vmem:[%s1403 + $0x6c] sm:$0xf]
        %v1432 = vld [vmem:[%s1403 + $0x70] sm:$0xf]
        %v1433 = vld [vmem:[%s1403 + $0x74] sm:$0xf]
        %v1434 = vld [vmem:[%s1403 + $0x78] sm:$0xf]
        %v1435 = vld [vmem:[%s1403 + $0x7c] sm:$0xf]
        %v1436 = vrot.slane %v356, 6
        %v1437 = vrot.slane %v357, 6
        %v1472 = vunpack.c.l.b16 %v1404
        %v1473 = vunpack.c.l.b16 %v1405
        %v1474 = vunpack.c.l.b16 %v1406
        %v1475 = vunpack.c.l.b16 %v1407
        %v1476 = vunpack.c.l.b16 %v1408
        %v1477 = vunpack.c.l.b16 %v1409
        %v1478 = vunpack.c.l.b16 %v1410
        %v1479 = vunpack.c.l.b16 %v1411
        %v1480 = vunpack.c.l.b16 %v1412
        %v1481 = vunpack.c.l.b16 %v1413
        %v1482 = vunpack.c.l.b16 %v1414
        %v1483 = vunpack.c.l.b16 %v1415
        %v1484 = vunpack.c.l.b16 %v1416
        %v1485 = vunpack.c.l.b16 %v1417
        %v1486 = vunpack.c.l.b16 %v1418
        %v1487 = vunpack.c.l.b16 %v1419
        %v1488 = vunpack.c.l.b16 %v1420
        %v1489 = vunpack.c.l.b16 %v1421
        %v1490 = vunpack.c.l.b16 %v1422
        %v1491 = vunpack.c.l.b16 %v1423
        %v1492 = vunpack.c.l.b16 %v1424
        %v1493 = vunpack.c.l.b16 %v1425
        %v1494 = vunpack.c.l.b16 %v1426
        %v1495 = vunpack.c.l.b16 %v1427
        %v1496 = vunpack.c.l.b16 %v1428
        %v1497 = vunpack.c.l.b16 %v1429
        %v1498 = vunpack.c.l.b16 %v1430
        %v1499 = vunpack.c.l.b16 %v1431
        %v1500 = vunpack.c.l.b16 %v1432
        %v1501 = vunpack.c.l.b16 %v1433
        %v1502 = vunpack.c.l.b16 %v1434
        %v1503 = vunpack.c.l.b16 %v1435
        %v1504 = vpack.c.b16 %v1473, %v1472
        %v1505 = vpack.c.b16 %v1475, %v1474
        %v1506 = vpack.c.b16 %v1477, %v1476
        %v1507 = vpack.c.b16 %v1479, %v1478
        %v1508 = vpack.c.b16 %v1481, %v1480
        %v1509 = vpack.c.b16 %v1483, %v1482
        %v1510 = vpack.c.b16 %v1485, %v1484
        %v1511 = vpack.c.b16 %v1487, %v1486
        %v1512 = vpack.c.b16 %v1489, %v1488
        %v1513 = vpack.c.b16 %v1491, %v1490
        %v1514 = vpack.c.b16 %v1493, %v1492
        %v1515 = vpack.c.b16 %v1495, %v1494
        %v1516 = vpack.c.b16 %v1497, %v1496
        %v1517 = vpack.c.b16 %v1499, %v1498
        %v1518 = vpack.c.b16 %v1501, %v1500
        %v1519 = vpack.c.b16 %v1503, %v1502
        %1536 = vmatprep.subr.bf16.mxu0 0
        %1537 = vmatpush1.bf16.msra.mxu0 %v1504
        %1538 = vmatprep.subr.bf16.mxu0 0
        %1539 = vmatpush1.bf16.msra.mxu0 %v1505
        %1540 = vmatprep.subr.bf16.mxu0 0
        %1541 = vmatpush1.bf16.msra.mxu0 %v1506
        %1542 = vmatprep.subr.bf16.mxu0 0
        %1543 = vmatpush1.bf16.msra.mxu0 %v1507
        %1544 = vmatprep.subr.bf16.mxu0 0
        %1545 = vmatpush1.bf16.msra.mxu0 %v1508
        %1546 = vmatprep.subr.bf16.mxu0 0
        %1547 = vmatpush1.bf16.msra.mxu0 %v1509
        %1548 = vmatprep.subr.bf16.mxu0 0
        %1549 = vmatpush1.bf16.msra.mxu0 %v1510
        %1550 = vmatprep.subr.bf16.mxu0 0
        %1551 = vmatpush1.bf16.msra.mxu0 %v1511
        %1552 = vmatprep.subr.bf16.mxu0 0
        %1553 = vmatpush1.bf16.msra.mxu0 %v1512
        %1554 = vmatprep.subr.bf16.mxu0 0
        %1555 = vmatpush1.bf16.msra.mxu0 %v1513
        %1556 = vmatprep.subr.bf16.mxu0 0
        %1557 = vmatpush1.bf16.msra.mxu0 %v1514
        %1558 = vmatprep.subr.bf16.mxu0 0
        %1559 = vmatpush1.bf16.msra.mxu0 %v1515
        %1560 = vmatprep.subr.bf16.mxu0 0
        %1561 = vmatpush1.bf16.msra.mxu0 %v1516
        %1562 = vmatprep.subr.bf16.mxu0 0
        %1563 = vmatpush1.bf16.msra.mxu0 %v1517
        %1564 = vmatprep.subr.bf16.mxu0 0
        %1565 = vmatpush1.bf16.msra.mxu0 %v1518
        %1566 = vmatprep.subr.bf16.mxu0 0
        %1567 = vmatpush1.bf16.msra.mxu0 %v1519
        %1568 = vmatprep.mubr.bf16.mxu0 %v1437
        %1569 = vmatmul.mubr.bf16.gmra.mrb[0].mxu0 %v1436
        %v1570 = vpop.f32.mrb[0].mxu0
        %v1571 = vadd.f32 0.0, %v1570
        %v1572 = vpop.f32.mrb[0].mxu0
        %v1573 = vpop.f32.mrb[0].mxu0
        %v1574 = vpop.f32.mrb[0].mxu0
        %1575 = vdwg.mxu0
        %v1576 = vadd.f32 %v1402, %v1571
        %s1577 = scalar_lea.vmem %s186, 896 [#allocation6]
        %v1578 = vld [vmem:[%s1577] sm:$0xf]
        %v1579 = vld [vmem:[%s1577 + $0x4] sm:$0xf]
        %v1580 = vld [vmem:[%s1577 + $0x8] sm:$0xf]
        %v1581 = vld [vmem:[%s1577 + $0xc] sm:$0xf]
        %v1582 = vld [vmem:[%s1577 + $0x10] sm:$0xf]
        %v1583 = vld [vmem:[%s1577 + $0x14] sm:$0xf]
        %v1584 = vld [vmem:[%s1577 + $0x18] sm:$0xf]
        %v1585 = vld [vmem:[%s1577 + $0x1c] sm:$0xf]
        %v1586 = vld [vmem:[%s1577 + $0x20] sm:$0xf]
        %v1587 = vld [vmem:[%s1577 + $0x24] sm:$0xf]
        %v1588 = vld [vmem:[%s1577 + $0x28] sm:$0xf]
        %v1589 = vld [vmem:[%s1577 + $0x2c] sm:$0xf]
        %v1590 = vld [vmem:[%s1577 + $0x30] sm:$0xf]
        %v1591 = vld [vmem:[%s1577 + $0x34] sm:$0xf]
        %v1592 = vld [vmem:[%s1577 + $0x38] sm:$0xf]
        %v1593 = vld [vmem:[%s1577 + $0x3c] sm:$0xf]
        %v1594 = vld [vmem:[%s1577 + $0x40] sm:$0xf]
        %v1595 = vld [vmem:[%s1577 + $0x44] sm:$0xf]
        %v1596 = vld [vmem:[%s1577 + $0x48] sm:$0xf]
        %v1597 = vld [vmem:[%s1577 + $0x4c] sm:$0xf]
        %v1598 = vld [vmem:[%s1577 + $0x50] sm:$0xf]
        %v1599 = vld [vmem:[%s1577 + $0x54] sm:$0xf]
        %v1600 = vld [vmem:[%s1577 + $0x58] sm:$0xf]
        %v1601 = vld [vmem:[%s1577 + $0x5c] sm:$0xf]
        %v1602 = vld [vmem:[%s1577 + $0x60] sm:$0xf]
        %v1603 = vld [vmem:[%s1577 + $0x64] sm:$0xf]
        %v1604 = vld [vmem:[%s1577 + $0x68] sm:$0xf]
        %v1605 = vld [vmem:[%s1577 + $0x6c] sm:$0xf]
        %v1606 = vld [vmem:[%s1577 + $0x70] sm:$0xf]
        %v1607 = vld [vmem:[%s1577 + $0x74] sm:$0xf]
        %v1608 = vld [vmem:[%s1577 + $0x78] sm:$0xf]
        %v1609 = vld [vmem:[%s1577 + $0x7c] sm:$0xf]
        %v1610 = vrot.slane %v356, 7
        %v1611 = vrot.slane %v357, 7
        %v1646 = vunpack.c.l.b16 %v1578
        %v1647 = vunpack.c.l.b16 %v1579
        %v1648 = vunpack.c.l.b16 %v1580
        %v1649 = vunpack.c.l.b16 %v1581
        %v1650 = vunpack.c.l.b16 %v1582
        %v1651 = vunpack.c.l.b16 %v1583
        %v1652 = vunpack.c.l.b16 %v1584
        %v1653 = vunpack.c.l.b16 %v1585
        %v1654 = vunpack.c.l.b16 %v1586
        %v1655 = vunpack.c.l.b16 %v1587
        %v1656 = vunpack.c.l.b16 %v1588
        %v1657 = vunpack.c.l.b16 %v1589
        %v1658 = vunpack.c.l.b16 %v1590
        %v1659 = vunpack.c.l.b16 %v1591
        %v1660 = vunpack.c.l.b16 %v1592
        %v1661 = vunpack.c.l.b16 %v1593
        %v1662 = vunpack.c.l.b16 %v1594
        %v1663 = vunpack.c.l.b16 %v1595
        %v1664 = vunpack.c.l.b16 %v1596
        %v1665 = vunpack.c.l.b16 %v1597
        %v1666 = vunpack.c.l.b16 %v1598
        %v1667 = vunpack.c.l.b16 %v1599
        %v1668 = vunpack.c.l.b16 %v1600
        %v1669 = vunpack.c.l.b16 %v1601
        %v1670 = vunpack.c.l.b16 %v1602
        %v1671 = vunpack.c.l.b16 %v1603
        %v1672 = vunpack.c.l.b16 %v1604
        %v1673 = vunpack.c.l.b16 %v1605
        %v1674 = vunpack.c.l.b16 %v1606
        %v1675 = vunpack.c.l.b16 %v1607
        %v1676 = vunpack.c.l.b16 %v1608
        %v1677 = vunpack.c.l.b16 %v1609
        %v1678 = vpack.c.b16 %v1647, %v1646
        %v1679 = vpack.c.b16 %v1649, %v1648
        %v1680 = vpack.c.b16 %v1651, %v1650
        %v1681 = vpack.c.b16 %v1653, %v1652
        %v1682 = vpack.c.b16 %v1655, %v1654
        %v1683 = vpack.c.b16 %v1657, %v1656
        %v1684 = vpack.c.b16 %v1659, %v1658
        %v1685 = vpack.c.b16 %v1661, %v1660
        %v1686 = vpack.c.b16 %v1663, %v1662
        %v1687 = vpack.c.b16 %v1665, %v1664
        %v1688 = vpack.c.b16 %v1667, %v1666
        %v1689 = vpack.c.b16 %v1669, %v1668
        %v1690 = vpack.c.b16 %v1671, %v1670
        %v1691 = vpack.c.b16 %v1673, %v1672
        %v1692 = vpack.c.b16 %v1675, %v1674
        %v1693 = vpack.c.b16 %v1677, %v1676
        %1710 = vmatprep.subr.bf16.mxu0 0
        %1711 = vmatpush1.bf16.msra.mxu0 %v1678
        %1712 = vmatprep.subr.bf16.mxu0 0
        %1713 = vmatpush1.bf16.msra.mxu0 %v1679
        %1714 = vmatprep.subr.bf16.mxu0 0
        %1715 = vmatpush1.bf16.msra.mxu0 %v1680
        %1716 = vmatprep.subr.bf16.mxu0 0
        %1717 = vmatpush1.bf16.msra.mxu0 %v1681
        %1718 = vmatprep.subr.bf16.mxu0 0
        %1719 = vmatpush1.bf16.msra.mxu0 %v1682
        %1720 = vmatprep.subr.bf16.mxu0 0
        %1721 = vmatpush1.bf16.msra.mxu0 %v1683
        %1722 = vmatprep.subr.bf16.mxu0 0
        %1723 = vmatpush1.bf16.msra.mxu0 %v1684
        %1724 = vmatprep.subr.bf16.mxu0 0
        %1725 = vmatpush1.bf16.msra.mxu0 %v1685
        %1726 = vmatprep.subr.bf16.mxu0 0
        %1727 = vmatpush1.bf16.msra.mxu0 %v1686
        %1728 = vmatprep.subr.bf16.mxu0 0
        %1729 = vmatpush1.bf16.msra.mxu0 %v1687
        %1730 = vmatprep.subr.bf16.mxu0 0
        %1731 = vmatpush1.bf16.msra.mxu0 %v1688
        %1732 = vmatprep.subr.bf16.mxu0 0
        %1733 = vmatpush1.bf16.msra.mxu0 %v1689
        %1734 = vmatprep.subr.bf16.mxu0 0
        %1735 = vmatpush1.bf16.msra.mxu0 %v1690
        %1736 = vmatprep.subr.bf16.mxu0 0
        %1737 = vmatpush1.bf16.msra.mxu0 %v1691
        %1738 = vmatprep.subr.bf16.mxu0 0
        %1739 = vmatpush1.bf16.msra.mxu0 %v1692
        %1740 = vmatprep.subr.bf16.mxu0 0
        %1741 = vmatpush1.bf16.msra.mxu0 %v1693
        %1742 = vmatprep.mubr.bf16.mxu0 %v1611
        %1743 = vmatmul.mubr.bf16.gmra.mrb[0].mxu0 %v1610
        %v1744 = vpop.f32.mrb[0].mxu0
        %v1745 = vadd.f32 0.0, %v1744
        %v1746 = vpop.f32.mrb[0].mxu0
        %v1747 = vpop.f32.mrb[0].mxu0
        %v1748 = vpop.f32.mrb[0].mxu0
        %1749 = vdwg.mxu0
        %v1750 = vadd.f32 %v1576, %v1745
        %s1751 = scalar_lea.vmem %s186, 1024 [#allocation6]
        %v1752 = vld [vmem:[%s1751] sm:$0xf]
        %v1753 = vld [vmem:[%s1751 + $0x4] sm:$0xf]
        %v1754 = vld [vmem:[%s1751 + $0x8] sm:$0xf]
        %v1755 = vld [vmem:[%s1751 + $0xc] sm:$0xf]
        %v1756 = vld [vmem:[%s1751 + $0x10] sm:$0xf]
        %v1757 = vld [vmem:[%s1751 + $0x14] sm:$0xf]
        %v1758 = vld [vmem:[%s1751 + $0x18] sm:$0xf]
        %v1759 = vld [vmem:[%s1751 + $0x1c] sm:$0xf]
        %v1760 = vld [vmem:[%s1751 + $0x20] sm:$0xf]
        %v1761 = vld [vmem:[%s1751 + $0x24] sm:$0xf]
        %v1762 = vld [vmem:[%s1751 + $0x28] sm:$0xf]
        %v1763 = vld [vmem:[%s1751 + $0x2c] sm:$0xf]
        %v1764 = vld [vmem:[%s1751 + $0x30] sm:$0xf]
        %v1765 = vld [vmem:[%s1751 + $0x34] sm:$0xf]
        %v1766 = vld [vmem:[%s1751 + $0x38] sm:$0xf]
        %v1767 = vld [vmem:[%s1751 + $0x3c] sm:$0xf]
        %v1768 = vld [vmem:[%s1751 + $0x40] sm:$0xf]
        %v1769 = vld [vmem:[%s1751 + $0x44] sm:$0xf]
        %v1770 = vld [vmem:[%s1751 + $0x48] sm:$0xf]
        %v1771 = vld [vmem:[%s1751 + $0x4c] sm:$0xf]
        %v1772 = vld [vmem:[%s1751 + $0x50] sm:$0xf]
        %v1773 = vld [vmem:[%s1751 + $0x54] sm:$0xf]
        %v1774 = vld [vmem:[%s1751 + $0x58] sm:$0xf]
        %v1775 = vld [vmem:[%s1751 + $0x5c] sm:$0xf]
        %v1776 = vld [vmem:[%s1751 + $0x60] sm:$0xf]
        %v1777 = vld [vmem:[%s1751 + $0x64] sm:$0xf]
        %v1778 = vld [vmem:[%s1751 + $0x68] sm:$0xf]
        %v1779 = vld [vmem:[%s1751 + $0x6c] sm:$0xf]
        %v1780 = vld [vmem:[%s1751 + $0x70] sm:$0xf]
        %v1781 = vld [vmem:[%s1751 + $0x74] sm:$0xf]
        %v1782 = vld [vmem:[%s1751 + $0x78] sm:$0xf]
        %v1783 = vld [vmem:[%s1751 + $0x7c] sm:$0xf]
        %v1816 = vunpack.c.l.b16 %v1752
        %v1817 = vunpack.c.l.b16 %v1753
        %v1818 = vunpack.c.l.b16 %v1754
        %v1819 = vunpack.c.l.b16 %v1755
        %v1820 = vunpack.c.l.b16 %v1756
        %v1821 = vunpack.c.l.b16 %v1757
        %v1822 = vunpack.c.l.b16 %v1758
        %v1823 = vunpack.c.l.b16 %v1759
        %v1824 = vunpack.c.l.b16 %v1760
        %v1825 = vunpack.c.l.b16 %v1761
        %v1826 = vunpack.c.l.b16 %v1762
        %v1827 = vunpack.c.l.b16 %v1763
        %v1828 = vunpack.c.l.b16 %v1764
        %v1829 = vunpack.c.l.b16 %v1765
        %v1830 = vunpack.c.l.b16 %v1766
        %v1831 = vunpack.c.l.b16 %v1767
        %v1832 = vunpack.c.l.b16 %v1768
        %v1833 = vunpack.c.l.b16 %v1769
        %v1834 = vunpack.c.l.b16 %v1770
        %v1835 = vunpack.c.l.b16 %v1771
        %v1836 = vunpack.c.l.b16 %v1772
        %v1837 = vunpack.c.l.b16 %v1773
        %v1838 = vunpack.c.l.b16 %v1774
        %v1839 = vunpack.c.l.b16 %v1775
        %v1840 = vunpack.c.l.b16 %v1776
        %v1841 = vunpack.c.l.b16 %v1777
        %v1842 = vunpack.c.l.b16 %v1778
        %v1843 = vunpack.c.l.b16 %v1779
        %v1844 = vunpack.c.l.b16 %v1780
        %v1845 = vunpack.c.l.b16 %v1781
        %v1846 = vunpack.c.l.b16 %v1782
        %v1847 = vunpack.c.l.b16 %v1783
        %v1848 = vpack.c.b16 %v1817, %v1816
        %v1849 = vpack.c.b16 %v1819, %v1818
        %v1850 = vpack.c.b16 %v1821, %v1820
        %v1851 = vpack.c.b16 %v1823, %v1822
        %v1852 = vpack.c.b16 %v1825, %v1824
        %v1853 = vpack.c.b16 %v1827, %v1826
        %v1854 = vpack.c.b16 %v1829, %v1828
        %v1855 = vpack.c.b16 %v1831, %v1830
        %v1856 = vpack.c.b16 %v1833, %v1832
        %v1857 = vpack.c.b16 %v1835, %v1834
        %v1858 = vpack.c.b16 %v1837, %v1836
        %v1859 = vpack.c.b16 %v1839, %v1838
        %v1860 = vpack.c.b16 %v1841, %v1840
        %v1861 = vpack.c.b16 %v1843, %v1842
        %v1862 = vpack.c.b16 %v1845, %v1844
        %v1863 = vpack.c.b16 %v1847, %v1846
        %1880 = vmatprep.subr.bf16.mxu0 0
        %1881 = vmatpush1.bf16.msra.mxu0 %v1848
        %1882 = vmatprep.subr.bf16.mxu0 0
        %1883 = vmatpush1.bf16.msra.mxu0 %v1849
        %1884 = vmatprep.subr.bf16.mxu0 0
        %1885 = vmatpush1.bf16.msra.mxu0 %v1850
        %1886 = vmatprep.subr.bf16.mxu0 0
        %1887 = vmatpush1.bf16.msra.mxu0 %v1851
        %1888 = vmatprep.subr.bf16.mxu0 0
        %1889 = vmatpush1.bf16.msra.mxu0 %v1852
        %1890 = vmatprep.subr.bf16.mxu0 0
        %1891 = vmatpush1.bf16.msra.mxu0 %v1853
        %1892 = vmatprep.subr.bf16.mxu0 0
        %1893 = vmatpush1.bf16.msra.mxu0 %v1854
        %1894 = vmatprep.subr.bf16.mxu0 0
        %1895 = vmatpush1.bf16.msra.mxu0 %v1855
        %1896 = vmatprep.subr.bf16.mxu0 0
        %1897 = vmatpush1.bf16.msra.mxu0 %v1856
        %1898 = vmatprep.subr.bf16.mxu0 0
        %1899 = vmatpush1.bf16.msra.mxu0 %v1857
        %1900 = vmatprep.subr.bf16.mxu0 0
        %1901 = vmatpush1.bf16.msra.mxu0 %v1858
        %1902 = vmatprep.subr.bf16.mxu0 0
        %1903 = vmatpush1.bf16.msra.mxu0 %v1859
        %1904 = vmatprep.subr.bf16.mxu0 0
        %1905 = vmatpush1.bf16.msra.mxu0 %v1860
        %1906 = vmatprep.subr.bf16.mxu0 0
        %1907 = vmatpush1.bf16.msra.mxu0 %v1861
        %1908 = vmatprep.subr.bf16.mxu0 0
        %1909 = vmatpush1.bf16.msra.mxu0 %v1862
        %1910 = vmatprep.subr.bf16.mxu0 0
        %1911 = vmatpush1.bf16.msra.mxu0 %v1863
        %1912 = vmatprep.mubr.bf16.mxu0 %v359
        %1913 = vmatmul.mubr.bf16.gmra.mrb[0].mxu0 %v358
        %v1914 = vpop.f32.mrb[0].mxu0
        %v1915 = vadd.f32 0.0, %v1914
        %v1916 = vpop.f32.mrb[0].mxu0
        %v1917 = vpop.f32.mrb[0].mxu0
        %v1918 = vpop.f32.mrb[0].mxu0
        %1919 = vdwg.mxu0
        %v1920 = vadd.f32 %v1750, %v1915
        %s1921 = scalar_lea.vmem %s186, 1152 [#allocation6]
        %v1922 = vld [vmem:[%s1921] sm:$0xf]
        %v1923 = vld [vmem:[%s1921 + $0x4] sm:$0xf]
        %v1924 = vld [vmem:[%s1921 + $0x8] sm:$0xf]
        %v1925 = vld [vmem:[%s1921 + $0xc] sm:$0xf]
        %v1926 = vld [vmem:[%s1921 + $0x10] sm:$0xf]
        %v1927 = vld [vmem:[%s1921 + $0x14] sm:$0xf]
        %v1928 = vld [vmem:[%s1921 + $0x18] sm:$0xf]
        %v1929 = vld [vmem:[%s1921 + $0x1c] sm:$0xf]
        %v1930 = vld [vmem:[%s1921 + $0x20] sm:$0xf]
        %v1931 = vld [vmem:[%s1921 + $0x24] sm:$0xf]
        %v1932 = vld [vmem:[%s1921 + $0x28] sm:$0xf]
        %v1933 = vld [vmem:[%s1921 + $0x2c] sm:$0xf]
        %v1934 = vld [vmem:[%s1921 + $0x30] sm:$0xf]
        %v1935 = vld [vmem:[%s1921 + $0x34] sm:$0xf]
        %v1936 = vld [vmem:[%s1921 + $0x38] sm:$0xf]
        %v1937 = vld [vmem:[%s1921 + $0x3c] sm:$0xf]
        %v1938 = vld [vmem:[%s1921 + $0x40] sm:$0xf]
        %v1939 = vld [vmem:[%s1921 + $0x44] sm:$0xf]
        %v1940 = vld [vmem:[%s1921 + $0x48] sm:$0xf]
        %v1941 = vld [vmem:[%s1921 + $0x4c] sm:$0xf]
        %v1942 = vld [vmem:[%s1921 + $0x50] sm:$0xf]
        %v1943 = vld [vmem:[%s1921 + $0x54] sm:$0xf]
        %v1944 = vld [vmem:[%s1921 + $0x58] sm:$0xf]
        %v1945 = vld [vmem:[%s1921 + $0x5c] sm:$0xf]
        %v1946 = vld [vmem:[%s1921 + $0x60] sm:$0xf]
        %v1947 = vld [vmem:[%s1921 + $0x64] sm:$0xf]
        %v1948 = vld [vmem:[%s1921 + $0x68] sm:$0xf]
        %v1949 = vld [vmem:[%s1921 + $0x6c] sm:$0xf]
        %v1950 = vld [vmem:[%s1921 + $0x70] sm:$0xf]
        %v1951 = vld [vmem:[%s1921 + $0x74] sm:$0xf]
        %v1952 = vld [vmem:[%s1921 + $0x78] sm:$0xf]
        %v1953 = vld [vmem:[%s1921 + $0x7c] sm:$0xf]
        %v1956 = vrot.slane %v358, 1
        %v1957 = vrot.slane %v359, 1
        %v1992 = vunpack.c.l.b16 %v1922
        %v1993 = vunpack.c.l.b16 %v1923
        %v1994 = vunpack.c.l.b16 %v1924
        %v1995 = vunpack.c.l.b16 %v1925
        %v1996 = vunpack.c.l.b16 %v1926
        %v1997 = vunpack.c.l.b16 %v1927
        %v1998 = vunpack.c.l.b16 %v1928
        %v1999 = vunpack.c.l.b16 %v1929
        %v2000 = vunpack.c.l.b16 %v1930
        %v2001 = vunpack.c.l.b16 %v1931
        %v2002 = vunpack.c.l.b16 %v1932
        %v2003 = vunpack.c.l.b16 %v1933
        %v2004 = vunpack.c.l.b16 %v1934
        %v2005 = vunpack.c.l.b16 %v1935
        %v2006 = vunpack.c.l.b16 %v1936
        %v2007 = vunpack.c.l.b16 %v1937
        %v2008 = vunpack.c.l.b16 %v1938
        %v2009 = vunpack.c.l.b16 %v1939
        %v2010 = vunpack.c.l.b16 %v1940
        %v2011 = vunpack.c.l.b16 %v1941
        %v2012 = vunpack.c.l.b16 %v1942
        %v2013 = vunpack.c.l.b16 %v1943
        %v2014 = vunpack.c.l.b16 %v1944
        %v2015 = vunpack.c.l.b16 %v1945
        %v2016 = vunpack.c.l.b16 %v1946
        %v2017 = vunpack.c.l.b16 %v1947
        %v2018 = vunpack.c.l.b16 %v1948
        %v2019 = vunpack.c.l.b16 %v1949
        %v2020 = vunpack.c.l.b16 %v1950
        %v2021 = vunpack.c.l.b16 %v1951
        %v2022 = vunpack.c.l.b16 %v1952
        %v2023 = vunpack.c.l.b16 %v1953
        %v2024 = vpack.c.b16 %v1993, %v1992
        %v2025 = vpack.c.b16 %v1995, %v1994
        %v2026 = vpack.c.b16 %v1997, %v1996
        %v2027 = vpack.c.b16 %v1999, %v1998
        %v2028 = vpack.c.b16 %v2001, %v2000
        %v2029 = vpack.c.b16 %v2003, %v2002
        %v2030 = vpack.c.b16 %v2005, %v2004
        %v2031 = vpack.c.b16 %v2007, %v2006
        %v2032 = vpack.c.b16 %v2009, %v2008
        %v2033 = vpack.c.b16 %v2011, %v2010
        %v2034 = vpack.c.b16 %v2013, %v2012
        %v2035 = vpack.c.b16 %v2015, %v2014
        %v2036 = vpack.c.b16 %v2017, %v2016
        %v2037 = vpack.c.b16 %v2019, %v2018
        %v2038 = vpack.c.b16 %v2021, %v2020
        %v2039 = vpack.c.b16 %v2023, %v2022
        %2056 = vmatprep.subr.bf16.mxu0 0
        %2057 = vmatpush1.bf16.msra.mxu0 %v2024
        %2058 = vmatprep.subr.bf16.mxu0 0
        %2059 = vmatpush1.bf16.msra.mxu0 %v2025
        %2060 = vmatprep.subr.bf16.mxu0 0
        %2061 = vmatpush1.bf16.msra.mxu0 %v2026
        %2062 = vmatprep.subr.bf16.mxu0 0
        %2063 = vmatpush1.bf16.msra.mxu0 %v2027
        %2064 = vmatprep.subr.bf16.mxu0 0
        %2065 = vmatpush1.bf16.msra.mxu0 %v2028
        %2066 = vmatprep.subr.bf16.mxu0 0
        %2067 = vmatpush1.bf16.msra.mxu0 %v2029
        %2068 = vmatprep.subr.bf16.mxu0 0
        %2069 = vmatpush1.bf16.msra.mxu0 %v2030
        %2070 = vmatprep.subr.bf16.mxu0 0
        %2071 = vmatpush1.bf16.msra.mxu0 %v2031
        %2072 = vmatprep.subr.bf16.mxu0 0
        %2073 = vmatpush1.bf16.msra.mxu0 %v2032
        %2074 = vmatprep.subr.bf16.mxu0 0
        %2075 = vmatpush1.bf16.msra.mxu0 %v2033
        %2076 = vmatprep.subr.bf16.mxu0 0
        %2077 = vmatpush1.bf16.msra.mxu0 %v2034
        %2078 = vmatprep.subr.bf16.mxu0 0
        %2079 = vmatpush1.bf16.msra.mxu0 %v2035
        %2080 = vmatprep.subr.bf16.mxu0 0
        %2081 = vmatpush1.bf16.msra.mxu0 %v2036
        %2082 = vmatprep.subr.bf16.mxu0 0
        %2083 = vmatpush1.bf16.msra.mxu0 %v2037
        %2084 = vmatprep.subr.bf16.mxu0 0
        %2085 = vmatpush1.bf16.msra.mxu0 %v2038
        %2086 = vmatprep.subr.bf16.mxu0 0
        %2087 = vmatpush1.bf16.msra.mxu0 %v2039
        %2088 = vmatprep.mubr.bf16.mxu0 %v1957
        %2089 = vmatmul.mubr.bf16.gmra.mrb[0].mxu0 %v1956
        %v2090 = vpop.f32.mrb[0].mxu0
        %v2091 = vadd.f32 0.0, %v2090
        %v2092 = vpop.f32.mrb[0].mxu0
        %v2093 = vpop.f32.mrb[0].mxu0
        %v2094 = vpop.f32.mrb[0].mxu0
        %2095 = vdwg.mxu0
        %v2096 = vadd.f32 %v1920, %v2091
        %s2097 = scalar_lea.vmem %s186, 1280 [#allocation6]
        %v2098 = vld [vmem:[%s2097] sm:$0xf]
        %v2099 = vld [vmem:[%s2097 + $0x4] sm:$0xf]
        %v2100 = vld [vmem:[%s2097 + $0x8] sm:$0xf]
        %v2101 = vld [vmem:[%s2097 + $0xc] sm:$0xf]
        %v2102 = vld [vmem:[%s2097 + $0x10] sm:$0xf]
        %v2103 = vld [vmem:[%s2097 + $0x14] sm:$0xf]
        %v2104 = vld [vmem:[%s2097 + $0x18] sm:$0xf]
        %v2105 = vld [vmem:[%s2097 + $0x1c] sm:$0xf]
        %v2106 = vld [vmem:[%s2097 + $0x20] sm:$0xf]
        %v2107 = vld [vmem:[%s2097 + $0x24] sm:$0xf]
        %v2108 = vld [vmem:[%s2097 + $0x28] sm:$0xf]
        %v2109 = vld [vmem:[%s2097 + $0x2c] sm:$0xf]
        %v2110 = vld [vmem:[%s2097 + $0x30] sm:$0xf]
        %v2111 = vld [vmem:[%s2097 + $0x34] sm:$0xf]
        %v2112 = vld [vmem:[%s2097 + $0x38] sm:$0xf]
        %v2113 = vld [vmem:[%s2097 + $0x3c] sm:$0xf]
        %v2114 = vld [vmem:[%s2097 + $0x40] sm:$0xf]
        %v2115 = vld [vmem:[%s2097 + $0x44] sm:$0xf]
        %v2116 = vld [vmem:[%s2097 + $0x48] sm:$0xf]
        %v2117 = vld [vmem:[%s2097 + $0x4c] sm:$0xf]
        %v2118 = vld [vmem:[%s2097 + $0x50] sm:$0xf]
        %v2119 = vld [vmem:[%s2097 + $0x54] sm:$0xf]
        %v2120 = vld [vmem:[%s2097 + $0x58] sm:$0xf]
        %v2121 = vld [vmem:[%s2097 + $0x5c] sm:$0xf]
        %v2122 = vld [vmem:[%s2097 + $0x60] sm:$0xf]
        %v2123 = vld [vmem:[%s2097 + $0x64] sm:$0xf]
        %v2124 = vld [vmem:[%s2097 + $0x68] sm:$0xf]
        %v2125 = vld [vmem:[%s2097 + $0x6c] sm:$0xf]
        %v2126 = vld [vmem:[%s2097 + $0x70] sm:$0xf]
        %v2127 = vld [vmem:[%s2097 + $0x74] sm:$0xf]
        %v2128 = vld [vmem:[%s2097 + $0x78] sm:$0xf]
        %v2129 = vld [vmem:[%s2097 + $0x7c] sm:$0xf]
        %v2130 = vrot.slane %v358, 2
        %v2131 = vrot.slane %v359, 2
        %v2166 = vunpack.c.l.b16 %v2098
        %v2167 = vunpack.c.l.b16 %v2099
        %v2168 = vunpack.c.l.b16 %v2100
        %v2169 = vunpack.c.l.b16 %v2101
        %v2170 = vunpack.c.l.b16 %v2102
        %v2171 = vunpack.c.l.b16 %v2103
        %v2172 = vunpack.c.l.b16 %v2104
        %v2173 = vunpack.c.l.b16 %v2105
        %v2174 = vunpack.c.l.b16 %v2106
        %v2175 = vunpack.c.l.b16 %v2107
        %v2176 = vunpack.c.l.b16 %v2108
        %v2177 = vunpack.c.l.b16 %v2109
        %v2178 = vunpack.c.l.b16 %v2110
        %v2179 = vunpack.c.l.b16 %v2111
        %v2180 = vunpack.c.l.b16 %v2112
        %v2181 = vunpack.c.l.b16 %v2113
        %v2182 = vunpack.c.l.b16 %v2114
        %v2183 = vunpack.c.l.b16 %v2115
        %v2184 = vunpack.c.l.b16 %v2116
        %v2185 = vunpack.c.l.b16 %v2117
        %v2186 = vunpack.c.l.b16 %v2118
        %v2187 = vunpack.c.l.b16 %v2119
        %v2188 = vunpack.c.l.b16 %v2120
        %v2189 = vunpack.c.l.b16 %v2121
        %v2190 = vunpack.c.l.b16 %v2122
        %v2191 = vunpack.c.l.b16 %v2123
        %v2192 = vunpack.c.l.b16 %v2124
        %v2193 = vunpack.c.l.b16 %v2125
        %v2194 = vunpack.c.l.b16 %v2126
        %v2195 = vunpack.c.l.b16 %v2127
        %v2196 = vunpack.c.l.b16 %v2128
        %v2197 = vunpack.c.l.b16 %v2129
        %v2198 = vpack.c.b16 %v2167, %v2166
        %v2199 = vpack.c.b16 %v2169, %v2168
        %v2200 = vpack.c.b16 %v2171, %v2170
        %v2201 = vpack.c.b16 %v2173, %v2172
        %v2202 = vpack.c.b16 %v2175, %v2174
        %v2203 = vpack.c.b16 %v2177, %v2176
        %v2204 = vpack.c.b16 %v2179, %v2178
        %v2205 = vpack.c.b16 %v2181, %v2180
        %v2206 = vpack.c.b16 %v2183, %v2182
        %v2207 = vpack.c.b16 %v2185, %v2184
        %v2208 = vpack.c.b16 %v2187, %v2186
        %v2209 = vpack.c.b16 %v2189, %v2188
        %v2210 = vpack.c.b16 %v2191, %v2190
        %v2211 = vpack.c.b16 %v2193, %v2192
        %v2212 = vpack.c.b16 %v2195, %v2194
        %v2213 = vpack.c.b16 %v2197, %v2196
        %2230 = vmatprep.subr.bf16.mxu0 0
        %2231 = vmatpush1.bf16.msra.mxu0 %v2198
        %2232 = vmatprep.subr.bf16.mxu0 0
        %2233 = vmatpush1.bf16.msra.mxu0 %v2199
        %2234 = vmatprep.subr.bf16.mxu0 0
        %2235 = vmatpush1.bf16.msra.mxu0 %v2200
        %2236 = vmatprep.subr.bf16.mxu0 0
        %2237 = vmatpush1.bf16.msra.mxu0 %v2201
        %2238 = vmatprep.subr.bf16.mxu0 0
        %2239 = vmatpush1.bf16.msra.mxu0 %v2202
        %2240 = vmatprep.subr.bf16.mxu0 0
        %2241 = vmatpush1.bf16.msra.mxu0 %v2203
        %2242 = vmatprep.subr.bf16.mxu0 0
        %2243 = vmatpush1.bf16.msra.mxu0 %v2204
        %2244 = vmatprep.subr.bf16.mxu0 0
        %2245 = vmatpush1.bf16.msra.mxu0 %v2205
        %2246 = vmatprep.subr.bf16.mxu0 0
        %2247 = vmatpush1.bf16.msra.mxu0 %v2206
        %2248 = vmatprep.subr.bf16.mxu0 0
        %2249 = vmatpush1.bf16.msra.mxu0 %v2207
        %2250 = vmatprep.subr.bf16.mxu0 0
        %2251 = vmatpush1.bf16.msra.mxu0 %v2208
        %2252 = vmatprep.subr.bf16.mxu0 0
        %2253 = vmatpush1.bf16.msra.mxu0 %v2209
        %2254 = vmatprep.subr.bf16.mxu0 0
        %2255 = vmatpush1.bf16.msra.mxu0 %v2210
        %2256 = vmatprep.subr.bf16.mxu0 0
        %2257 = vmatpush1.bf16.msra.mxu0 %v2211
        %2258 = vmatprep.subr.bf16.mxu0 0
        %2259 = vmatpush1.bf16.msra.mxu0 %v2212
        %2260 = vmatprep.subr.bf16.mxu0 0
        %2261 = vmatpush1.bf16.msra.mxu0 %v2213
        %2262 = vmatprep.mubr.bf16.mxu0 %v2131
        %2263 = vmatmul.mubr.bf16.gmra.mrb[0].mxu0 %v2130
        %v2264 = vpop.f32.mrb[0].mxu0
        %v2265 = vadd.f32 0.0, %v2264
        %v2266 = vpop.f32.mrb[0].mxu0
        %v2267 = vpop.f32.mrb[0].mxu0
        %v2268 = vpop.f32.mrb[0].mxu0
        %2269 = vdwg.mxu0
        %v2270 = vadd.f32 %v2096, %v2265
        %s2271 = scalar_lea.vmem %s186, 1408 [#allocation6]
        %v2272 = vld [vmem:[%s2271] sm:$0xf]
        %v2273 = vld [vmem:[%s2271 + $0x4] sm:$0xf]
        %v2274 = vld [vmem:[%s2271 + $0x8] sm:$0xf]
        %v2275 = vld [vmem:[%s2271 + $0xc] sm:$0xf]
        %v2276 = vld [vmem:[%s2271 + $0x10] sm:$0xf]
        %v2277 = vld [vmem:[%s2271 + $0x14] sm:$0xf]
        %v2278 = vld [vmem:[%s2271 + $0x18] sm:$0xf]
        %v2279 = vld [vmem:[%s2271 + $0x1c] sm:$0xf]
        %v2280 = vld [vmem:[%s2271 + $0x20] sm:$0xf]
        %v2281 = vld [vmem:[%s2271 + $0x24] sm:$0xf]
        %v2282 = vld [vmem:[%s2271 + $0x28] sm:$0xf]
        %v2283 = vld [vmem:[%s2271 + $0x2c] sm:$0xf]
        %v2284 = vld [vmem:[%s2271 + $0x30] sm:$0xf]
        %v2285 = vld [vmem:[%s2271 + $0x34] sm:$0xf]
        %v2286 = vld [vmem:[%s2271 + $0x38] sm:$0xf]
        %v2287 = vld [vmem:[%s2271 + $0x3c] sm:$0xf]
        %v2288 = vld [vmem:[%s2271 + $0x40] sm:$0xf]
        %v2289 = vld [vmem:[%s2271 + $0x44] sm:$0xf]
        %v2290 = vld [vmem:[%s2271 + $0x48] sm:$0xf]
        %v2291 = vld [vmem:[%s2271 + $0x4c] sm:$0xf]
        %v2292 = vld [vmem:[%s2271 + $0x50] sm:$0xf]
        %v2293 = vld [vmem:[%s2271 + $0x54] sm:$0xf]
        %v2294 = vld [vmem:[%s2271 + $0x58] sm:$0xf]
        %v2295 = vld [vmem:[%s2271 + $0x5c] sm:$0xf]
        %v2296 = vld [vmem:[%s2271 + $0x60] sm:$0xf]
        %v2297 = vld [vmem:[%s2271 + $0x64] sm:$0xf]
        %v2298 = vld [vmem:[%s2271 + $0x68] sm:$0xf]
        %v2299 = vld [vmem:[%s2271 + $0x6c] sm:$0xf]
        %v2300 = vld [vmem:[%s2271 + $0x70] sm:$0xf]
        %v2301 = vld [vmem:[%s2271 + $0x74] sm:$0xf]
        %v2302 = vld [vmem:[%s2271 + $0x78] sm:$0xf]
        %v2303 = vld [vmem:[%s2271 + $0x7c] sm:$0xf]
        %v2304 = vrot.slane %v358, 3
        %v2305 = vrot.slane %v359, 3
        %v2340 = vunpack.c.l.b16 %v2272
        %v2341 = vunpack.c.l.b16 %v2273
        %v2342 = vunpack.c.l.b16 %v2274
        %v2343 = vunpack.c.l.b16 %v2275
        %v2344 = vunpack.c.l.b16 %v2276
        %v2345 = vunpack.c.l.b16 %v2277
        %v2346 = vunpack.c.l.b16 %v2278
        %v2347 = vunpack.c.l.b16 %v2279
        %v2348 = vunpack.c.l.b16 %v2280
        %v2349 = vunpack.c.l.b16 %v2281
        %v2350 = vunpack.c.l.b16 %v2282
        %v2351 = vunpack.c.l.b16 %v2283
        %v2352 = vunpack.c.l.b16 %v2284
        %v2353 = vunpack.c.l.b16 %v2285
        %v2354 = vunpack.c.l.b16 %v2286
        %v2355 = vunpack.c.l.b16 %v2287
        %v2356 = vunpack.c.l.b16 %v2288
        %v2357 = vunpack.c.l.b16 %v2289
        %v2358 = vunpack.c.l.b16 %v2290
        %v2359 = vunpack.c.l.b16 %v2291
        %v2360 = vunpack.c.l.b16 %v2292
        %v2361 = vunpack.c.l.b16 %v2293
        %v2362 = vunpack.c.l.b16 %v2294
        %v2363 = vunpack.c.l.b16 %v2295
        %v2364 = vunpack.c.l.b16 %v2296
        %v2365 = vunpack.c.l.b16 %v2297
        %v2366 = vunpack.c.l.b16 %v2298
        %v2367 = vunpack.c.l.b16 %v2299
        %v2368 = vunpack.c.l.b16 %v2300
        %v2369 = vunpack.c.l.b16 %v2301
        %v2370 = vunpack.c.l.b16 %v2302
        %v2371 = vunpack.c.l.b16 %v2303
        %v2372 = vpack.c.b16 %v2341, %v2340
        %v2373 = vpack.c.b16 %v2343, %v2342
        %v2374 = vpack.c.b16 %v2345, %v2344
        %v2375 = vpack.c.b16 %v2347, %v2346
        %v2376 = vpack.c.b16 %v2349, %v2348
        %v2377 = vpack.c.b16 %v2351, %v2350
        %v2378 = vpack.c.b16 %v2353, %v2352
        %v2379 = vpack.c.b16 %v2355, %v2354
        %v2380 = vpack.c.b16 %v2357, %v2356
        %v2381 = vpack.c.b16 %v2359, %v2358
        %v2382 = vpack.c.b16 %v2361, %v2360
        %v2383 = vpack.c.b16 %v2363, %v2362
        %v2384 = vpack.c.b16 %v2365, %v2364
        %v2385 = vpack.c.b16 %v2367, %v2366
        %v2386 = vpack.c.b16 %v2369, %v2368
        %v2387 = vpack.c.b16 %v2371, %v2370
        %2404 = vmatprep.subr.bf16.mxu0 0
        %2405 = vmatpush1.bf16.msra.mxu0 %v2372
        %2406 = vmatprep.subr.bf16.mxu0 0
        %2407 = vmatpush1.bf16.msra.mxu0 %v2373
        %2408 = vmatprep.subr.bf16.mxu0 0
        %2409 = vmatpush1.bf16.msra.mxu0 %v2374
        %2410 = vmatprep.subr.bf16.mxu0 0
        %2411 = vmatpush1.bf16.msra.mxu0 %v2375
        %2412 = vmatprep.subr.bf16.mxu0 0
        %2413 = vmatpush1.bf16.msra.mxu0 %v2376
        %2414 = vmatprep.subr.bf16.mxu0 0
        %2415 = vmatpush1.bf16.msra.mxu0 %v2377
        %2416 = vmatprep.subr.bf16.mxu0 0
        %2417 = vmatpush1.bf16.msra.mxu0 %v2378
        %2418 = vmatprep.subr.bf16.mxu0 0
        %2419 = vmatpush1.bf16.msra.mxu0 %v2379
        %2420 = vmatprep.subr.bf16.mxu0 0
        %2421 = vmatpush1.bf16.msra.mxu0 %v2380
        %2422 = vmatprep.subr.bf16.mxu0 0
        %2423 = vmatpush1.bf16.msra.mxu0 %v2381
        %2424 = vmatprep.subr.bf16.mxu0 0
        %2425 = vmatpush1.bf16.msra.mxu0 %v2382
        %2426 = vmatprep.subr.bf16.mxu0 0
        %2427 = vmatpush1.bf16.msra.mxu0 %v2383
        %2428 = vmatprep.subr.bf16.mxu0 0
        %2429 = vmatpush1.bf16.msra.mxu0 %v2384
        %2430 = vmatprep.subr.bf16.mxu0 0
        %2431 = vmatpush1.bf16.msra.mxu0 %v2385
        %2432 = vmatprep.subr.bf16.mxu0 0
        %2433 = vmatpush1.bf16.msra.mxu0 %v2386
        %2434 = vmatprep.subr.bf16.mxu0 0
        %2435 = vmatpush1.bf16.msra.mxu0 %v2387
        %2436 = vmatprep.mubr.bf16.mxu0 %v2305
        %2437 = vmatmul.mubr.bf16.gmra.mrb[0].mxu0 %v2304
        %v2438 = vpop.f32.mrb[0].mxu0
        %v2439 = vadd.f32 0.0, %v2438
        %v2440 = vpop.f32.mrb[0].mxu0
        %v2441 = vpop.f32.mrb[0].mxu0
        %v2442 = vpop.f32.mrb[0].mxu0
        %2443 = vdwg.mxu0
        %v2444 = vadd.f32 %v2270, %v2439
        %s2445 = scalar_lea.vmem %s186, 1536 [#allocation6]
        %v2446 = vld [vmem:[%s2445] sm:$0xf]
        %v2447 = vld [vmem:[%s2445 + $0x4] sm:$0xf]
        %v2448 = vld [vmem:[%s2445 + $0x8] sm:$0xf]
        %v2449 = vld [vmem:[%s2445 + $0xc] sm:$0xf]
        %v2450 = vld [vmem:[%s2445 + $0x10] sm:$0xf]
        %v2451 = vld [vmem:[%s2445 + $0x14] sm:$0xf]
        %v2452 = vld [vmem:[%s2445 + $0x18] sm:$0xf]
        %v2453 = vld [vmem:[%s2445 + $0x1c] sm:$0xf]
        %v2454 = vld [vmem:[%s2445 + $0x20] sm:$0xf]
        %v2455 = vld [vmem:[%s2445 + $0x24] sm:$0xf]
        %v2456 = vld [vmem:[%s2445 + $0x28] sm:$0xf]
        %v2457 = vld [vmem:[%s2445 + $0x2c] sm:$0xf]
        %v2458 = vld [vmem:[%s2445 + $0x30] sm:$0xf]
        %v2459 = vld [vmem:[%s2445 + $0x34] sm:$0xf]
        %v2460 = vld [vmem:[%s2445 + $0x38] sm:$0xf]
        %v2461 = vld [vmem:[%s2445 + $0x3c] sm:$0xf]
        %v2462 = vld [vmem:[%s2445 + $0x40] sm:$0xf]
        %v2463 = vld [vmem:[%s2445 + $0x44] sm:$0xf]
        %v2464 = vld [vmem:[%s2445 + $0x48] sm:$0xf]
        %v2465 = vld [vmem:[%s2445 + $0x4c] sm:$0xf]
        %v2466 = vld [vmem:[%s2445 + $0x50] sm:$0xf]
        %v2467 = vld [vmem:[%s2445 + $0x54] sm:$0xf]
        %v2468 = vld [vmem:[%s2445 + $0x58] sm:$0xf]
        %v2469 = vld [vmem:[%s2445 + $0x5c] sm:$0xf]
        %v2470 = vld [vmem:[%s2445 + $0x60] sm:$0xf]
        %v2471 = vld [vmem:[%s2445 + $0x64] sm:$0xf]
        %v2472 = vld [vmem:[%s2445 + $0x68] sm:$0xf]
        %v2473 = vld [vmem:[%s2445 + $0x6c] sm:$0xf]
        %v2474 = vld [vmem:[%s2445 + $0x70] sm:$0xf]
        %v2475 = vld [vmem:[%s2445 + $0x74] sm:$0xf]
        %v2476 = vld [vmem:[%s2445 + $0x78] sm:$0xf]
        %v2477 = vld [vmem:[%s2445 + $0x7c] sm:$0xf]
        %v2478 = vrot.slane %v358, 4
        %v2479 = vrot.slane %v359, 4
        %v2514 = vunpack.c.l.b16 %v2446
        %v2515 = vunpack.c.l.b16 %v2447
        %v2516 = vunpack.c.l.b16 %v2448
        %v2517 = vunpack.c.l.b16 %v2449
        %v2518 = vunpack.c.l.b16 %v2450
        %v2519 = vunpack.c.l.b16 %v2451
        %v2520 = vunpack.c.l.b16 %v2452
        %v2521 = vunpack.c.l.b16 %v2453
        %v2522 = vunpack.c.l.b16 %v2454
        %v2523 = vunpack.c.l.b16 %v2455
        %v2524 = vunpack.c.l.b16 %v2456
        %v2525 = vunpack.c.l.b16 %v2457
        %v2526 = vunpack.c.l.b16 %v2458
        %v2527 = vunpack.c.l.b16 %v2459
        %v2528 = vunpack.c.l.b16 %v2460
        %v2529 = vunpack.c.l.b16 %v2461
        %v2530 = vunpack.c.l.b16 %v2462
        %v2531 = vunpack.c.l.b16 %v2463
        %v2532 = vunpack.c.l.b16 %v2464
        %v2533 = vunpack.c.l.b16 %v2465
        %v2534 = vunpack.c.l.b16 %v2466
        %v2535 = vunpack.c.l.b16 %v2467
        %v2536 = vunpack.c.l.b16 %v2468
        %v2537 = vunpack.c.l.b16 %v2469
        %v2538 = vunpack.c.l.b16 %v2470
        %v2539 = vunpack.c.l.b16 %v2471
        %v2540 = vunpack.c.l.b16 %v2472
        %v2541 = vunpack.c.l.b16 %v2473
        %v2542 = vunpack.c.l.b16 %v2474
        %v2543 = vunpack.c.l.b16 %v2475
        %v2544 = vunpack.c.l.b16 %v2476
        %v2545 = vunpack.c.l.b16 %v2477
        %v2546 = vpack.c.b16 %v2515, %v2514
        %v2547 = vpack.c.b16 %v2517, %v2516
        %v2548 = vpack.c.b16 %v2519, %v2518
        %v2549 = vpack.c.b16 %v2521, %v2520
        %v2550 = vpack.c.b16 %v2523, %v2522
        %v2551 = vpack.c.b16 %v2525, %v2524
        %v2552 = vpack.c.b16 %v2527, %v2526
        %v2553 = vpack.c.b16 %v2529, %v2528
        %v2554 = vpack.c.b16 %v2531, %v2530
        %v2555 = vpack.c.b16 %v2533, %v2532
        %v2556 = vpack.c.b16 %v2535, %v2534
        %v2557 = vpack.c.b16 %v2537, %v2536
        %v2558 = vpack.c.b16 %v2539, %v2538
        %v2559 = vpack.c.b16 %v2541, %v2540
        %v2560 = vpack.c.b16 %v2543, %v2542
        %v2561 = vpack.c.b16 %v2545, %v2544
        %2578 = vmatprep.subr.bf16.mxu0 0
        %2579 = vmatpush1.bf16.msra.mxu0 %v2546
        %2580 = vmatprep.subr.bf16.mxu0 0
        %2581 = vmatpush1.bf16.msra.mxu0 %v2547
        %2582 = vmatprep.subr.bf16.mxu0 0
        %2583 = vmatpush1.bf16.msra.mxu0 %v2548
        %2584 = vmatprep.subr.bf16.mxu0 0
        %2585 = vmatpush1.bf16.msra.mxu0 %v2549
        %2586 = vmatprep.subr.bf16.mxu0 0
        %2587 = vmatpush1.bf16.msra.mxu0 %v2550
        %2588 = vmatprep.subr.bf16.mxu0 0
        %2589 = vmatpush1.bf16.msra.mxu0 %v2551
        %2590 = vmatprep.subr.bf16.mxu0 0
        %2591 = vmatpush1.bf16.msra.mxu0 %v2552
        %2592 = vmatprep.subr.bf16.mxu0 0
        %2593 = vmatpush1.bf16.msra.mxu0 %v2553
        %2594 = vmatprep.subr.bf16.mxu0 0
        %2595 = vmatpush1.bf16.msra.mxu0 %v2554
        %2596 = vmatprep.subr.bf16.mxu0 0
        %2597 = vmatpush1.bf16.msra.mxu0 %v2555
        %2598 = vmatprep.subr.bf16.mxu0 0
        %2599 = vmatpush1.bf16.msra.mxu0 %v2556
        %2600 = vmatprep.subr.bf16.mxu0 0
        %2601 = vmatpush1.bf16.msra.mxu0 %v2557
        %2602 = vmatprep.subr.bf16.mxu0 0
        %2603 = vmatpush1.bf16.msra.mxu0 %v2558
        %2604 = vmatprep.subr.bf16.mxu0 0
        %2605 = vmatpush1.bf16.msra.mxu0 %v2559
        %2606 = vmatprep.subr.bf16.mxu0 0
        %2607 = vmatpush1.bf16.msra.mxu0 %v2560
        %2608 = vmatprep.subr.bf16.mxu0 0
        %2609 = vmatpush1.bf16.msra.mxu0 %v2561
        %2610 = vmatprep.mubr.bf16.mxu0 %v2479
        %2611 = vmatmul.mubr.bf16.gmra.mrb[0].mxu0 %v2478
        %v2612 = vpop.f32.mrb[0].mxu0
        %v2613 = vadd.f32 0.0, %v2612
        %v2614 = vpop.f32.mrb[0].mxu0
        %v2615 = vpop.f32.mrb[0].mxu0
        %v2616 = vpop.f32.mrb[0].mxu0
        %2617 = vdwg.mxu0
        %v2618 = vadd.f32 %v2444, %v2613
        %s2619 = scalar_lea.vmem %s186, 1664 [#allocation6]
        %v2620 = vld [vmem:[%s2619] sm:$0xf]
        %v2621 = vld [vmem:[%s2619 + $0x4] sm:$0xf]
        %v2622 = vld [vmem:[%s2619 + $0x8] sm:$0xf]
        %v2623 = vld [vmem:[%s2619 + $0xc] sm:$0xf]
        %v2624 = vld [vmem:[%s2619 + $0x10] sm:$0xf]
        %v2625 = vld [vmem:[%s2619 + $0x14] sm:$0xf]
        %v2626 = vld [vmem:[%s2619 + $0x18] sm:$0xf]
        %v2627 = vld [vmem:[%s2619 + $0x1c] sm:$0xf]
        %v2628 = vld [vmem:[%s2619 + $0x20] sm:$0xf]
        %v2629 = vld [vmem:[%s2619 + $0x24] sm:$0xf]
        %v2630 = vld [vmem:[%s2619 + $0x28] sm:$0xf]
        %v2631 = vld [vmem:[%s2619 + $0x2c] sm:$0xf]
        %v2632 = vld [vmem:[%s2619 + $0x30] sm:$0xf]
        %v2633 = vld [vmem:[%s2619 + $0x34] sm:$0xf]
        %v2634 = vld [vmem:[%s2619 + $0x38] sm:$0xf]
        %v2635 = vld [vmem:[%s2619 + $0x3c] sm:$0xf]
        %v2636 = vld [vmem:[%s2619 + $0x40] sm:$0xf]
        %v2637 = vld [vmem:[%s2619 + $0x44] sm:$0xf]
        %v2638 = vld [vmem:[%s2619 + $0x48] sm:$0xf]
        %v2639 = vld [vmem:[%s2619 + $0x4c] sm:$0xf]
        %v2640 = vld [vmem:[%s2619 + $0x50] sm:$0xf]
        %v2641 = vld [vmem:[%s2619 + $0x54] sm:$0xf]
        %v2642 = vld [vmem:[%s2619 + $0x58] sm:$0xf]
        %v2643 = vld [vmem:[%s2619 + $0x5c] sm:$0xf]
        %v2644 = vld [vmem:[%s2619 + $0x60] sm:$0xf]
        %v2645 = vld [vmem:[%s2619 + $0x64] sm:$0xf]
        %v2646 = vld [vmem:[%s2619 + $0x68] sm:$0xf]
        %v2647 = vld [vmem:[%s2619 + $0x6c] sm:$0xf]
        %v2648 = vld [vmem:[%s2619 + $0x70] sm:$0xf]
        %v2649 = vld [vmem:[%s2619 + $0x74] sm:$0xf]
        %v2650 = vld [vmem:[%s2619 + $0x78] sm:$0xf]
        %v2651 = vld [vmem:[%s2619 + $0x7c] sm:$0xf]
        %v2652 = vrot.slane %v358, 5
        %v2653 = vrot.slane %v359, 5
        %v2688 = vunpack.c.l.b16 %v2620
        %v2689 = vunpack.c.l.b16 %v2621
        %v2690 = vunpack.c.l.b16 %v2622
        %v2691 = vunpack.c.l.b16 %v2623
        %v2692 = vunpack.c.l.b16 %v2624
        %v2693 = vunpack.c.l.b16 %v2625
        %v2694 = vunpack.c.l.b16 %v2626
        %v2695 = vunpack.c.l.b16 %v2627
        %v2696 = vunpack.c.l.b16 %v2628
        %v2697 = vunpack.c.l.b16 %v2629
        %v2698 = vunpack.c.l.b16 %v2630
        %v2699 = vunpack.c.l.b16 %v2631
        %v2700 = vunpack.c.l.b16 %v2632
        %v2701 = vunpack.c.l.b16 %v2633
        %v2702 = vunpack.c.l.b16 %v2634
        %v2703 = vunpack.c.l.b16 %v2635
        %v2704 = vunpack.c.l.b16 %v2636
        %v2705 = vunpack.c.l.b16 %v2637
        %v2706 = vunpack.c.l.b16 %v2638
        %v2707 = vunpack.c.l.b16 %v2639
        %v2708 = vunpack.c.l.b16 %v2640
        %v2709 = vunpack.c.l.b16 %v2641
        %v2710 = vunpack.c.l.b16 %v2642
        %v2711 = vunpack.c.l.b16 %v2643
        %v2712 = vunpack.c.l.b16 %v2644
        %v2713 = vunpack.c.l.b16 %v2645
        %v2714 = vunpack.c.l.b16 %v2646
        %v2715 = vunpack.c.l.b16 %v2647
        %v2716 = vunpack.c.l.b16 %v2648
        %v2717 = vunpack.c.l.b16 %v2649
        %v2718 = vunpack.c.l.b16 %v2650
        %v2719 = vunpack.c.l.b16 %v2651
        %v2720 = vpack.c.b16 %v2689, %v2688
        %v2721 = vpack.c.b16 %v2691, %v2690
        %v2722 = vpack.c.b16 %v2693, %v2692
        %v2723 = vpack.c.b16 %v2695, %v2694
        %v2724 = vpack.c.b16 %v2697, %v2696
        %v2725 = vpack.c.b16 %v2699, %v2698
        %v2726 = vpack.c.b16 %v2701, %v2700
        %v2727 = vpack.c.b16 %v2703, %v2702
        %v2728 = vpack.c.b16 %v2705, %v2704
        %v2729 = vpack.c.b16 %v2707, %v2706
        %v2730 = vpack.c.b16 %v2709, %v2708
        %v2731 = vpack.c.b16 %v2711, %v2710
        %v2732 = vpack.c.b16 %v2713, %v2712
        %v2733 = vpack.c.b16 %v2715, %v2714
        %v2734 = vpack.c.b16 %v2717, %v2716
        %v2735 = vpack.c.b16 %v2719, %v2718
        %2752 = vmatprep.subr.bf16.mxu0 0
        %2753 = vmatpush1.bf16.msra.mxu0 %v2720
        %2754 = vmatprep.subr.bf16.mxu0 0
        %2755 = vmatpush1.bf16.msra.mxu0 %v2721
        %2756 = vmatprep.subr.bf16.mxu0 0
        %2757 = vmatpush1.bf16.msra.mxu0 %v2722
        %2758 = vmatprep.subr.bf16.mxu0 0
        %2759 = vmatpush1.bf16.msra.mxu0 %v2723
        %2760 = vmatprep.subr.bf16.mxu0 0
        %2761 = vmatpush1.bf16.msra.mxu0 %v2724
        %2762 = vmatprep.subr.bf16.mxu0 0
        %2763 = vmatpush1.bf16.msra.mxu0 %v2725
        %2764 = vmatprep.subr.bf16.mxu0 0
        %2765 = vmatpush1.bf16.msra.mxu0 %v2726
        %2766 = vmatprep.subr.bf16.mxu0 0
        %2767 = vmatpush1.bf16.msra.mxu0 %v2727
        %2768 = vmatprep.subr.bf16.mxu0 0
        %2769 = vmatpush1.bf16.msra.mxu0 %v2728
        %2770 = vmatprep.subr.bf16.mxu0 0
        %2771 = vmatpush1.bf16.msra.mxu0 %v2729
        %2772 = vmatprep.subr.bf16.mxu0 0
        %2773 = vmatpush1.bf16.msra.mxu0 %v2730
        %2774 = vmatprep.subr.bf16.mxu0 0
        %2775 = vmatpush1.bf16.msra.mxu0 %v2731
        %2776 = vmatprep.subr.bf16.mxu0 0
        %2777 = vmatpush1.bf16.msra.mxu0 %v2732
        %2778 = vmatprep.subr.bf16.mxu0 0
        %2779 = vmatpush1.bf16.msra.mxu0 %v2733
        %2780 = vmatprep.subr.bf16.mxu0 0
        %2781 = vmatpush1.bf16.msra.mxu0 %v2734
        %2782 = vmatprep.subr.bf16.mxu0 0
        %2783 = vmatpush1.bf16.msra.mxu0 %v2735
        %2784 = vmatprep.mubr.bf16.mxu0 %v2653
        %2785 = vmatmul.mubr.bf16.gmra.mrb[0].mxu0 %v2652
        %v2786 = vpop.f32.mrb[0].mxu0
        %v2787 = vadd.f32 0.0, %v2786
        %v2788 = vpop.f32.mrb[0].mxu0
        %v2789 = vpop.f32.mrb[0].mxu0
        %v2790 = vpop.f32.mrb[0].mxu0
        %2791 = vdwg.mxu0
        %v2792 = vadd.f32 %v2618, %v2787
        %s2793 = scalar_lea.vmem %s186, 1792 [#allocation6]
        %v2794 = vld [vmem:[%s2793] sm:$0xf]
        %v2795 = vld [vmem:[%s2793 + $0x4] sm:$0xf]
        %v2796 = vld [vmem:[%s2793 + $0x8] sm:$0xf]
        %v2797 = vld [vmem:[%s2793 + $0xc] sm:$0xf]
        %v2798 = vld [vmem:[%s2793 + $0x10] sm:$0xf]
        %v2799 = vld [vmem:[%s2793 + $0x14] sm:$0xf]
        %v2800 = vld [vmem:[%s2793 + $0x18] sm:$0xf]
        %v2801 = vld [vmem:[%s2793 + $0x1c] sm:$0xf]
        %v2802 = vld [vmem:[%s2793 + $0x20] sm:$0xf]
        %v2803 = vld [vmem:[%s2793 + $0x24] sm:$0xf]
        %v2804 = vld [vmem:[%s2793 + $0x28] sm:$0xf]
        %v2805 = vld [vmem:[%s2793 + $0x2c] sm:$0xf]
        %v2806 = vld [vmem:[%s2793 + $0x30] sm:$0xf]
        %v2807 = vld [vmem:[%s2793 + $0x34] sm:$0xf]
        %v2808 = vld [vmem:[%s2793 + $0x38] sm:$0xf]
        %v2809 = vld [vmem:[%s2793 + $0x3c] sm:$0xf]
        %v2810 = vld [vmem:[%s2793 + $0x40] sm:$0xf]
        %v2811 = vld [vmem:[%s2793 + $0x44] sm:$0xf]
        %v2812 = vld [vmem:[%s2793 + $0x48] sm:$0xf]
        %v2813 = vld [vmem:[%s2793 + $0x4c] sm:$0xf]
        %v2814 = vld [vmem:[%s2793 + $0x50] sm:$0xf]
        %v2815 = vld [vmem:[%s2793 + $0x54] sm:$0xf]
        %v2816 = vld [vmem:[%s2793 + $0x58] sm:$0xf]
        %v2817 = vld [vmem:[%s2793 + $0x5c] sm:$0xf]
        %v2818 = vld [vmem:[%s2793 + $0x60] sm:$0xf]
        %v2819 = vld [vmem:[%s2793 + $0x64] sm:$0xf]
        %v2820 = vld [vmem:[%s2793 + $0x68] sm:$0xf]
        %v2821 = vld [vmem:[%s2793 + $0x6c] sm:$0xf]
        %v2822 = vld [vmem:[%s2793 + $0x70] sm:$0xf]
        %v2823 = vld [vmem:[%s2793 + $0x74] sm:$0xf]
        %v2824 = vld [vmem:[%s2793 + $0x78] sm:$0xf]
        %v2825 = vld [vmem:[%s2793 + $0x7c] sm:$0xf]
        %v2826 = vrot.slane %v358, 6
        %v2827 = vrot.slane %v359, 6
        %v2862 = vunpack.c.l.b16 %v2794
        %v2863 = vunpack.c.l.b16 %v2795
        %v2864 = vunpack.c.l.b16 %v2796
        %v2865 = vunpack.c.l.b16 %v2797
        %v2866 = vunpack.c.l.b16 %v2798
        %v2867 = vunpack.c.l.b16 %v2799
        %v2868 = vunpack.c.l.b16 %v2800
        %v2869 = vunpack.c.l.b16 %v2801
        %v2870 = vunpack.c.l.b16 %v2802
        %v2871 = vunpack.c.l.b16 %v2803
        %v2872 = vunpack.c.l.b16 %v2804
        %v2873 = vunpack.c.l.b16 %v2805
        %v2874 = vunpack.c.l.b16 %v2806
        %v2875 = vunpack.c.l.b16 %v2807
        %v2876 = vunpack.c.l.b16 %v2808
        %v2877 = vunpack.c.l.b16 %v2809
        %v2878 = vunpack.c.l.b16 %v2810
        %v2879 = vunpack.c.l.b16 %v2811
        %v2880 = vunpack.c.l.b16 %v2812
        %v2881 = vunpack.c.l.b16 %v2813
        %v2882 = vunpack.c.l.b16 %v2814
        %v2883 = vunpack.c.l.b16 %v2815
        %v2884 = vunpack.c.l.b16 %v2816
        %v2885 = vunpack.c.l.b16 %v2817
        %v2886 = vunpack.c.l.b16 %v2818
        %v2887 = vunpack.c.l.b16 %v2819
        %v2888 = vunpack.c.l.b16 %v2820
        %v2889 = vunpack.c.l.b16 %v2821
        %v2890 = vunpack.c.l.b16 %v2822
        %v2891 = vunpack.c.l.b16 %v2823
        %v2892 = vunpack.c.l.b16 %v2824
        %v2893 = vunpack.c.l.b16 %v2825
        %v2894 = vpack.c.b16 %v2863, %v2862
        %v2895 = vpack.c.b16 %v2865, %v2864
        %v2896 = vpack.c.b16 %v2867, %v2866
        %v2897 = vpack.c.b16 %v2869, %v2868
        %v2898 = vpack.c.b16 %v2871, %v2870
        %v2899 = vpack.c.b16 %v2873, %v2872
        %v2900 = vpack.c.b16 %v2875, %v2874
        %v2901 = vpack.c.b16 %v2877, %v2876
        %v2902 = vpack.c.b16 %v2879, %v2878
        %v2903 = vpack.c.b16 %v2881, %v2880
        %v2904 = vpack.c.b16 %v2883, %v2882
        %v2905 = vpack.c.b16 %v2885, %v2884
        %v2906 = vpack.c.b16 %v2887, %v2886
        %v2907 = vpack.c.b16 %v2889, %v2888
        %v2908 = vpack.c.b16 %v2891, %v2890
        %v2909 = vpack.c.b16 %v2893, %v2892
        %2926 = vmatprep.subr.bf16.mxu0 0
        %2927 = vmatpush1.bf16.msra.mxu0 %v2894
        %2928 = vmatprep.subr.bf16.mxu0 0
        %2929 = vmatpush1.bf16.msra.mxu0 %v2895
        %2930 = vmatprep.subr.bf16.mxu0 0
        %2931 = vmatpush1.bf16.msra.mxu0 %v2896
        %2932 = vmatprep.subr.bf16.mxu0 0
        %2933 = vmatpush1.bf16.msra.mxu0 %v2897
        %2934 = vmatprep.subr.bf16.mxu0 0
        %2935 = vmatpush1.bf16.msra.mxu0 %v2898
        %2936 = vmatprep.subr.bf16.mxu0 0
        %2937 = vmatpush1.bf16.msra.mxu0 %v2899
        %2938 = vmatprep.subr.bf16.mxu0 0
        %2939 = vmatpush1.bf16.msra.mxu0 %v2900
        %2940 = vmatprep.subr.bf16.mxu0 0
        %2941 = vmatpush1.bf16.msra.mxu0 %v2901
        %2942 = vmatprep.subr.bf16.mxu0 0
        %2943 = vmatpush1.bf16.msra.mxu0 %v2902
        %2944 = vmatprep.subr.bf16.mxu0 0
        %2945 = vmatpush1.bf16.msra.mxu0 %v2903
        %2946 = vmatprep.subr.bf16.mxu0 0
        %2947 = vmatpush1.bf16.msra.mxu0 %v2904
        %2948 = vmatprep.subr.bf16.mxu0 0
        %2949 = vmatpush1.bf16.msra.mxu0 %v2905
        %2950 = vmatprep.subr.bf16.mxu0 0
        %2951 = vmatpush1.bf16.msra.mxu0 %v2906
        %2952 = vmatprep.subr.bf16.mxu0 0
        %2953 = vmatpush1.bf16.msra.mxu0 %v2907
        %2954 = vmatprep.subr.bf16.mxu0 0
        %2955 = vmatpush1.bf16.msra.mxu0 %v2908
        %2956 = vmatprep.subr.bf16.mxu0 0
        %2957 = vmatpush1.bf16.msra.mxu0 %v2909
        %2958 = vmatprep.mubr.bf16.mxu0 %v2827
        %2959 = vmatmul.mubr.bf16.gmra.mrb[0].mxu0 %v2826
        %v2960 = vpop.f32.mrb[0].mxu0
        %v2961 = vadd.f32 0.0, %v2960
        %v2962 = vpop.f32.mrb[0].mxu0
        %v2963 = vpop.f32.mrb[0].mxu0
        %v2964 = vpop.f32.mrb[0].mxu0
        %2965 = vdwg.mxu0
        %v2966 = vadd.f32 %v2792, %v2961
        %s2967 = scalar_lea.vmem %s186, 1920 [#allocation6]
        %v2968 = vld [vmem:[%s2967] sm:$0xf]
        %v2969 = vld [vmem:[%s2967 + $0x4] sm:$0xf]
        %v2970 = vld [vmem:[%s2967 + $0x8] sm:$0xf]
        %v2971 = vld [vmem:[%s2967 + $0xc] sm:$0xf]
        %v2972 = vld [vmem:[%s2967 + $0x10] sm:$0xf]
        %v2973 = vld [vmem:[%s2967 + $0x14] sm:$0xf]
        %v2974 = vld [vmem:[%s2967 + $0x18] sm:$0xf]
        %v2975 = vld [vmem:[%s2967 + $0x1c] sm:$0xf]
        %v2976 = vld [vmem:[%s2967 + $0x20] sm:$0xf]
        %v2977 = vld [vmem:[%s2967 + $0x24] sm:$0xf]
        %v2978 = vld [vmem:[%s2967 + $0x28] sm:$0xf]
        %v2979 = vld [vmem:[%s2967 + $0x2c] sm:$0xf]
        %v2980 = vld [vmem:[%s2967 + $0x30] sm:$0xf]
        %v2981 = vld [vmem:[%s2967 + $0x34] sm:$0xf]
        %v2982 = vld [vmem:[%s2967 + $0x38] sm:$0xf]
        %v2983 = vld [vmem:[%s2967 + $0x3c] sm:$0xf]
        %v2984 = vld [vmem:[%s2967 + $0x40] sm:$0xf]
        %v2985 = vld [vmem:[%s2967 + $0x44] sm:$0xf]
        %v2986 = vld [vmem:[%s2967 + $0x48] sm:$0xf]
        %v2987 = vld [vmem:[%s2967 + $0x4c] sm:$0xf]
        %v2988 = vld [vmem:[%s2967 + $0x50] sm:$0xf]
        %v2989 = vld [vmem:[%s2967 + $0x54] sm:$0xf]
        %v2990 = vld [vmem:[%s2967 + $0x58] sm:$0xf]
        %v2991 = vld [vmem:[%s2967 + $0x5c] sm:$0xf]
        %v2992 = vld [vmem:[%s2967 + $0x60] sm:$0xf]
        %v2993 = vld [vmem:[%s2967 + $0x64] sm:$0xf]
        %v2994 = vld [vmem:[%s2967 + $0x68] sm:$0xf]
        %v2995 = vld [vmem:[%s2967 + $0x6c] sm:$0xf]
        %v2996 = vld [vmem:[%s2967 + $0x70] sm:$0xf]
        %v2997 = vld [vmem:[%s2967 + $0x74] sm:$0xf]
        %v2998 = vld [vmem:[%s2967 + $0x78] sm:$0xf]
        %v2999 = vld [vmem:[%s2967 + $0x7c] sm:$0xf]
        %v3000 = vrot.slane %v358, 7
        %v3001 = vrot.slane %v359, 7
        %v3036 = vunpack.c.l.b16 %v2968
        %v3037 = vunpack.c.l.b16 %v2969
        %v3038 = vunpack.c.l.b16 %v2970
        %v3039 = vunpack.c.l.b16 %v2971
        %v3040 = vunpack.c.l.b16 %v2972
        %v3041 = vunpack.c.l.b16 %v2973
        %v3042 = vunpack.c.l.b16 %v2974
        %v3043 = vunpack.c.l.b16 %v2975
        %v3044 = vunpack.c.l.b16 %v2976
        %v3045 = vunpack.c.l.b16 %v2977
        %v3046 = vunpack.c.l.b16 %v2978
        %v3047 = vunpack.c.l.b16 %v2979
        %v3048 = vunpack.c.l.b16 %v2980
        %v3049 = vunpack.c.l.b16 %v2981
        %v3050 = vunpack.c.l.b16 %v2982
        %v3051 = vunpack.c.l.b16 %v2983
        %v3052 = vunpack.c.l.b16 %v2984
        %v3053 = vunpack.c.l.b16 %v2985
        %v3054 = vunpack.c.l.b16 %v2986
        %v3055 = vunpack.c.l.b16 %v2987
        %v3056 = vunpack.c.l.b16 %v2988
        %v3057 = vunpack.c.l.b16 %v2989
        %v3058 = vunpack.c.l.b16 %v2990
        %v3059 = vunpack.c.l.b16 %v2991
        %v3060 = vunpack.c.l.b16 %v2992
        %v3061 = vunpack.c.l.b16 %v2993
        %v3062 = vunpack.c.l.b16 %v2994
        %v3063 = vunpack.c.l.b16 %v2995
        %v3064 = vunpack.c.l.b16 %v2996
        %v3065 = vunpack.c.l.b16 %v2997
        %v3066 = vunpack.c.l.b16 %v2998
        %v3067 = vunpack.c.l.b16 %v2999
        %v3068 = vpack.c.b16 %v3037, %v3036
        %v3069 = vpack.c.b16 %v3039, %v3038
        %v3070 = vpack.c.b16 %v3041, %v3040
        %v3071 = vpack.c.b16 %v3043, %v3042
        %v3072 = vpack.c.b16 %v3045, %v3044
        %v3073 = vpack.c.b16 %v3047, %v3046
        %v3074 = vpack.c.b16 %v3049, %v3048
        %v3075 = vpack.c.b16 %v3051, %v3050
        %v3076 = vpack.c.b16 %v3053, %v3052
        %v3077 = vpack.c.b16 %v3055, %v3054
        %v3078 = vpack.c.b16 %v3057, %v3056
        %v3079 = vpack.c.b16 %v3059, %v3058
        %v3080 = vpack.c.b16 %v3061, %v3060
        %v3081 = vpack.c.b16 %v3063, %v3062
        %v3082 = vpack.c.b16 %v3065, %v3064
        %v3083 = vpack.c.b16 %v3067, %v3066
        %3100 = vmatprep.subr.bf16.mxu0 0
        %3101 = vmatpush1.bf16.msra.mxu0 %v3068
        %3102 = vmatprep.subr.bf16.mxu0 0
        %3103 = vmatpush1.bf16.msra.mxu0 %v3069
        %3104 = vmatprep.subr.bf16.mxu0 0
        %3105 = vmatpush1.bf16.msra.mxu0 %v3070
        %3106 = vmatprep.subr.bf16.mxu0 0
        %3107 = vmatpush1.bf16.msra.mxu0 %v3071
        %3108 = vmatprep.subr.bf16.mxu0 0
        %3109 = vmatpush1.bf16.msra.mxu0 %v3072
        %3110 = vmatprep.subr.bf16.mxu0 0
        %3111 = vmatpush1.bf16.msra.mxu0 %v3073
        %3112 = vmatprep.subr.bf16.mxu0 0
        %3113 = vmatpush1.bf16.msra.mxu0 %v3074
        %3114 = vmatprep.subr.bf16.mxu0 0
        %3115 = vmatpush1.bf16.msra.mxu0 %v3075
        %3116 = vmatprep.subr.bf16.mxu0 0
        %3117 = vmatpush1.bf16.msra.mxu0 %v3076
        %3118 = vmatprep.subr.bf16.mxu0 0
        %3119 = vmatpush1.bf16.msra.mxu0 %v3077
        %3120 = vmatprep.subr.bf16.mxu0 0
        %3121 = vmatpush1.bf16.msra.mxu0 %v3078
        %3122 = vmatprep.subr.bf16.mxu0 0
        %3123 = vmatpush1.bf16.msra.mxu0 %v3079
        %3124 = vmatprep.subr.bf16.mxu0 0
        %3125 = vmatpush1.bf16.msra.mxu0 %v3080
        %3126 = vmatprep.subr.bf16.mxu0 0
        %3127 = vmatpush1.bf16.msra.mxu0 %v3081
        %3128 = vmatprep.subr.bf16.mxu0 0
        %3129 = vmatpush1.bf16.msra.mxu0 %v3082
        %3130 = vmatprep.subr.bf16.mxu0 0
        %3131 = vmatpush1.bf16.msra.mxu0 %v3083
        %3132 = vmatprep.mubr.bf16.mxu0 %v3001
        %3133 = vmatmul.mubr.bf16.gmra.mrb[0].mxu0 %v3000
        %v3134 = vpop.f32.mrb[0].mxu0
        %v3135 = vadd.f32 0.0, %v3134
        %v3136 = vpop.f32.mrb[0].mxu0
        %v3137 = vpop.f32.mrb[0].mxu0
        %v3138 = vpop.f32.mrb[0].mxu0
        %3139 = vdwg.mxu0
        %v3140 = vadd.f32 %v2966, %v3135
        %s3141 = scalar_lea.vmem %s186, 2048 [#allocation6]
        %v3142 = vld [vmem:[%s3141] sm:$0xf]
        %v3143 = vld [vmem:[%s3141 + $0x4] sm:$0xf]
        %v3144 = vld [vmem:[%s3141 + $0x8] sm:$0xf]
        %v3145 = vld [vmem:[%s3141 + $0xc] sm:$0xf]
        %v3146 = vld [vmem:[%s3141 + $0x10] sm:$0xf]
        %v3147 = vld [vmem:[%s3141 + $0x14] sm:$0xf]
        %v3148 = vld [vmem:[%s3141 + $0x18] sm:$0xf]
        %v3149 = vld [vmem:[%s3141 + $0x1c] sm:$0xf]
        %v3150 = vld [vmem:[%s3141 + $0x20] sm:$0xf]
        %v3151 = vld [vmem:[%s3141 + $0x24] sm:$0xf]
        %v3152 = vld [vmem:[%s3141 + $0x28] sm:$0xf]
        %v3153 = vld [vmem:[%s3141 + $0x2c] sm:$0xf]
        %v3154 = vld [vmem:[%s3141 + $0x30] sm:$0xf]
        %v3155 = vld [vmem:[%s3141 + $0x34] sm:$0xf]
        %v3156 = vld [vmem:[%s3141 + $0x38] sm:$0xf]
        %v3157 = vld [vmem:[%s3141 + $0x3c] sm:$0xf]
        %v3158 = vld [vmem:[%s3141 + $0x40] sm:$0xf]
        %v3159 = vld [vmem:[%s3141 + $0x44] sm:$0xf]
        %v3160 = vld [vmem:[%s3141 + $0x48] sm:$0xf]
        %v3161 = vld [vmem:[%s3141 + $0x4c] sm:$0xf]
        %v3162 = vld [vmem:[%s3141 + $0x50] sm:$0xf]
        %v3163 = vld [vmem:[%s3141 + $0x54] sm:$0xf]
        %v3164 = vld [vmem:[%s3141 + $0x58] sm:$0xf]
        %v3165 = vld [vmem:[%s3141 + $0x5c] sm:$0xf]
        %v3166 = vld [vmem:[%s3141 + $0x60] sm:$0xf]
        %v3167 = vld [vmem:[%s3141 + $0x64] sm:$0xf]
        %v3168 = vld [vmem:[%s3141 + $0x68] sm:$0xf]
        %v3169 = vld [vmem:[%s3141 + $0x6c] sm:$0xf]
        %v3170 = vld [vmem:[%s3141 + $0x70] sm:$0xf]
        %v3171 = vld [vmem:[%s3141 + $0x74] sm:$0xf]
        %v3172 = vld [vmem:[%s3141 + $0x78] sm:$0xf]
        %v3173 = vld [vmem:[%s3141 + $0x7c] sm:$0xf]
        %v3206 = vunpack.c.l.b16 %v3142
        %v3207 = vunpack.c.l.b16 %v3143
        %v3208 = vunpack.c.l.b16 %v3144
        %v3209 = vunpack.c.l.b16 %v3145
        %v3210 = vunpack.c.l.b16 %v3146
        %v3211 = vunpack.c.l.b16 %v3147
        %v3212 = vunpack.c.l.b16 %v3148
        %v3213 = vunpack.c.l.b16 %v3149
        %v3214 = vunpack.c.l.b16 %v3150
        %v3215 = vunpack.c.l.b16 %v3151
        %v3216 = vunpack.c.l.b16 %v3152
        %v3217 = vunpack.c.l.b16 %v3153
        %v3218 = vunpack.c.l.b16 %v3154
        %v3219 = vunpack.c.l.b16 %v3155
        %v3220 = vunpack.c.l.b16 %v3156
        %v3221 = vunpack.c.l.b16 %v3157
        %v3222 = vunpack.c.l.b16 %v3158
        %v3223 = vunpack.c.l.b16 %v3159
        %v3224 = vunpack.c.l.b16 %v3160
        %v3225 = vunpack.c.l.b16 %v3161
        %v3226 = vunpack.c.l.b16 %v3162
        %v3227 = vunpack.c.l.b16 %v3163
        %v3228 = vunpack.c.l.b16 %v3164
        %v3229 = vunpack.c.l.b16 %v3165
        %v3230 = vunpack.c.l.b16 %v3166
        %v3231 = vunpack.c.l.b16 %v3167
        %v3232 = vunpack.c.l.b16 %v3168
        %v3233 = vunpack.c.l.b16 %v3169
        %v3234 = vunpack.c.l.b16 %v3170
        %v3235 = vunpack.c.l.b16 %v3171
        %v3236 = vunpack.c.l.b16 %v3172
        %v3237 = vunpack.c.l.b16 %v3173
        %v3238 = vpack.c.b16 %v3207, %v3206
        %v3239 = vpack.c.b16 %v3209, %v3208
        %v3240 = vpack.c.b16 %v3211, %v3210
        %v3241 = vpack.c.b16 %v3213, %v3212
        %v3242 = vpack.c.b16 %v3215, %v3214
        %v3243 = vpack.c.b16 %v3217, %v3216
        %v3244 = vpack.c.b16 %v3219, %v3218
        %v3245 = vpack.c.b16 %v3221, %v3220
        %v3246 = vpack.c.b16 %v3223, %v3222
        %v3247 = vpack.c.b16 %v3225, %v3224
        %v3248 = vpack.c.b16 %v3227, %v3226
        %v3249 = vpack.c.b16 %v3229, %v3228
        %v3250 = vpack.c.b16 %v3231, %v3230
        %v3251 = vpack.c.b16 %v3233, %v3232
        %v3252 = vpack.c.b16 %v3235, %v3234
        %v3253 = vpack.c.b16 %v3237, %v3236
        %3270 = vmatprep.subr.bf16.mxu0 0
        %3271 = vmatpush1.bf16.msra.mxu0 %v3238
        %3272 = vmatprep.subr.bf16.mxu0 0
        %3273 = vmatpush1.bf16.msra.mxu0 %v3239
        %3274 = vmatprep.subr.bf16.mxu0 0
        %3275 = vmatpush1.bf16.msra.mxu0 %v3240
        %3276 = vmatprep.subr.bf16.mxu0 0
        %3277 = vmatpush1.bf16.msra.mxu0 %v3241
        %3278 = vmatprep.subr.bf16.mxu0 0
        %3279 = vmatpush1.bf16.msra.mxu0 %v3242
        %3280 = vmatprep.subr.bf16.mxu0 0
        %3281 = vmatpush1.bf16.msra.mxu0 %v3243
        %3282 = vmatprep.subr.bf16.mxu0 0
        %3283 = vmatpush1.bf16.msra.mxu0 %v3244
        %3284 = vmatprep.subr.bf16.mxu0 0
        %3285 = vmatpush1.bf16.msra.mxu0 %v3245
        %3286 = vmatprep.subr.bf16.mxu0 0
        %3287 = vmatpush1.bf16.msra.mxu0 %v3246
        %3288 = vmatprep.subr.bf16.mxu0 0
        %3289 = vmatpush1.bf16.msra.mxu0 %v3247
        %3290 = vmatprep.subr.bf16.mxu0 0
        %3291 = vmatpush1.bf16.msra.mxu0 %v3248
        %3292 = vmatprep.subr.bf16.mxu0 0
        %3293 = vmatpush1.bf16.msra.mxu0 %v3249
        %3294 = vmatprep.subr.bf16.mxu0 0
        %3295 = vmatpush1.bf16.msra.mxu0 %v3250
        %3296 = vmatprep.subr.bf16.mxu0 0
        %3297 = vmatpush1.bf16.msra.mxu0 %v3251
        %3298 = vmatprep.subr.bf16.mxu0 0
        %3299 = vmatpush1.bf16.msra.mxu0 %v3252
        %3300 = vmatprep.subr.bf16.mxu0 0
        %3301 = vmatpush1.bf16.msra.mxu0 %v3253
        %3302 = vmatprep.mubr.bf16.mxu0 %v361
        %3303 = vmatmul.mubr.bf16.gmra.mrb[0].mxu0 %v360
        %v3304 = vpop.f32.mrb[0].mxu0
        %v3305 = vadd.f32 0.0, %v3304
        %v3306 = vpop.f32.mrb[0].mxu0
        %v3307 = vpop.f32.mrb[0].mxu0
        %v3308 = vpop.f32.mrb[0].mxu0
        %3309 = vdwg.mxu0
        %v3310 = vadd.f32 %v3140, %v3305
        %s3311 = scalar_lea.vmem %s186, 2176 [#allocation6]
        %v3312 = vld [vmem:[%s3311] sm:$0xf]
        %v3313 = vld [vmem:[%s3311 + $0x4] sm:$0xf]
        %v3314 = vld [vmem:[%s3311 + $0x8] sm:$0xf]
        %v3315 = vld [vmem:[%s3311 + $0xc] sm:$0xf]
        %v3316 = vld [vmem:[%s3311 + $0x10] sm:$0xf]
        %v3317 = vld [vmem:[%s3311 + $0x14] sm:$0xf]
        %v3318 = vld [vmem:[%s3311 + $0x18] sm:$0xf]
        %v3319 = vld [vmem:[%s3311 + $0x1c] sm:$0xf]
        %v3320 = vld [vmem:[%s3311 + $0x20] sm:$0xf]
        %v3321 = vld [vmem:[%s3311 + $0x24] sm:$0xf]
        %v3322 = vld [vmem:[%s3311 + $0x28] sm:$0xf]
        %v3323 = vld [vmem:[%s3311 + $0x2c] sm:$0xf]
        %v3324 = vld [vmem:[%s3311 + $0x30] sm:$0xf]
        %v3325 = vld [vmem:[%s3311 + $0x34] sm:$0xf]
        %v3326 = vld [vmem:[%s3311 + $0x38] sm:$0xf]
        %v3327 = vld [vmem:[%s3311 + $0x3c] sm:$0xf]
        %v3328 = vld [vmem:[%s3311 + $0x40] sm:$0xf]
        %v3329 = vld [vmem:[%s3311 + $0x44] sm:$0xf]
        %v3330 = vld [vmem:[%s3311 + $0x48] sm:$0xf]
        %v3331 = vld [vmem:[%s3311 + $0x4c] sm:$0xf]
        %v3332 = vld [vmem:[%s3311 + $0x50] sm:$0xf]
        %v3333 = vld [vmem:[%s3311 + $0x54] sm:$0xf]
        %v3334 = vld [vmem:[%s3311 + $0x58] sm:$0xf]
        %v3335 = vld [vmem:[%s3311 + $0x5c] sm:$0xf]
        %v3336 = vld [vmem:[%s3311 + $0x60] sm:$0xf]
        %v3337 = vld [vmem:[%s3311 + $0x64] sm:$0xf]
        %v3338 = vld [vmem:[%s3311 + $0x68] sm:$0xf]
        %v3339 = vld [vmem:[%s3311 + $0x6c] sm:$0xf]
        %v3340 = vld [vmem:[%s3311 + $0x70] sm:$0xf]
        %v3341 = vld [vmem:[%s3311 + $0x74] sm:$0xf]
        %v3342 = vld [vmem:[%s3311 + $0x78] sm:$0xf]
        %v3343 = vld [vmem:[%s3311 + $0x7c] sm:$0xf]
        %v3346 = vrot.slane %v360, 1
        %v3347 = vrot.slane %v361, 1
        %v3382 = vunpack.c.l.b16 %v3312
        %v3383 = vunpack.c.l.b16 %v3313
        %v3384 = vunpack.c.l.b16 %v3314
        %v3385 = vunpack.c.l.b16 %v3315
        %v3386 = vunpack.c.l.b16 %v3316
        %v3387 = vunpack.c.l.b16 %v3317
        %v3388 = vunpack.c.l.b16 %v3318
        %v3389 = vunpack.c.l.b16 %v3319
        %v3390 = vunpack.c.l.b16 %v3320
        %v3391 = vunpack.c.l.b16 %v3321
        %v3392 = vunpack.c.l.b16 %v3322
        %v3393 = vunpack.c.l.b16 %v3323
        %v3394 = vunpack.c.l.b16 %v3324
        %v3395 = vunpack.c.l.b16 %v3325
        %v3396 = vunpack.c.l.b16 %v3326
        %v3397 = vunpack.c.l.b16 %v3327
        %v3398 = vunpack.c.l.b16 %v3328
        %v3399 = vunpack.c.l.b16 %v3329
        %v3400 = vunpack.c.l.b16 %v3330
        %v3401 = vunpack.c.l.b16 %v3331
        %v3402 = vunpack.c.l.b16 %v3332
        %v3403 = vunpack.c.l.b16 %v3333
        %v3404 = vunpack.c.l.b16 %v3334
        %v3405 = vunpack.c.l.b16 %v3335
        %v3406 = vunpack.c.l.b16 %v3336
        %v3407 = vunpack.c.l.b16 %v3337
        %v3408 = vunpack.c.l.b16 %v3338
        %v3409 = vunpack.c.l.b16 %v3339
        %v3410 = vunpack.c.l.b16 %v3340
        %v3411 = vunpack.c.l.b16 %v3341
        %v3412 = vunpack.c.l.b16 %v3342
        %v3413 = vunpack.c.l.b16 %v3343
        %v3414 = vpack.c.b16 %v3383, %v3382
        %v3415 = vpack.c.b16 %v3385, %v3384
        %v3416 = vpack.c.b16 %v3387, %v3386
        %v3417 = vpack.c.b16 %v3389, %v3388
        %v3418 = vpack.c.b16 %v3391, %v3390
        %v3419 = vpack.c.b16 %v3393, %v3392
        %v3420 = vpack.c.b16 %v3395, %v3394
        %v3421 = vpack.c.b16 %v3397, %v3396
        %v3422 = vpack.c.b16 %v3399, %v3398
        %v3423 = vpack.c.b16 %v3401, %v3400
        %v3424 = vpack.c.b16 %v3403, %v3402
        %v3425 = vpack.c.b16 %v3405, %v3404
        %v3426 = vpack.c.b16 %v3407, %v3406
        %v3427 = vpack.c.b16 %v3409, %v3408
        %v3428 = vpack.c.b16 %v3411, %v3410
        %v3429 = vpack.c.b16 %v3413, %v3412
        %3446 = vmatprep.subr.bf16.mxu0 0
        %3447 = vmatpush1.bf16.msra.mxu0 %v3414
        %3448 = vmatprep.subr.bf16.mxu0 0
        %3449 = vmatpush1.bf16.msra.mxu0 %v3415
        %3450 = vmatprep.subr.bf16.mxu0 0
        %3451 = vmatpush1.bf16.msra.mxu0 %v3416
        %3452 = vmatprep.subr.bf16.mxu0 0
        %3453 = vmatpush1.bf16.msra.mxu0 %v3417
        %3454 = vmatprep.subr.bf16.mxu0 0
        %3455 = vmatpush1.bf16.msra.mxu0 %v3418
        %3456 = vmatprep.subr.bf16.mxu0 0
        %3457 = vmatpush1.bf16.msra.mxu0 %v3419
        %3458 = vmatprep.subr.bf16.mxu0 0
        %3459 = vmatpush1.bf16.msra.mxu0 %v3420
        %3460 = vmatprep.subr.bf16.mxu0 0
        %3461 = vmatpush1.bf16.msra.mxu0 %v3421
        %3462 = vmatprep.subr.bf16.mxu0 0
        %3463 = vmatpush1.bf16.msra.mxu0 %v3422
        %3464 = vmatprep.subr.bf16.mxu0 0
        %3465 = vmatpush1.bf16.msra.mxu0 %v3423
        %3466 = vmatprep.subr.bf16.mxu0 0
        %3467 = vmatpush1.bf16.msra.mxu0 %v3424
        %3468 = vmatprep.subr.bf16.mxu0 0
        %3469 = vmatpush1.bf16.msra.mxu0 %v3425
        %3470 = vmatprep.subr.bf16.mxu0 0
        %3471 = vmatpush1.bf16.msra.mxu0 %v3426
        %3472 = vmatprep.subr.bf16.mxu0 0
        %3473 = vmatpush1.bf16.msra.mxu0 %v3427
        %3474 = vmatprep.subr.bf16.mxu0 0
        %3475 = vmatpush1.bf16.msra.mxu0 %v3428
        %3476 = vmatprep.subr.bf16.mxu0 0
        %3477 = vmatpush1.bf16.msra.mxu0 %v3429
        %3478 = vmatprep.mubr.bf16.mxu0 %v3347
        %3479 = vmatmul.mubr.bf16.gmra.mrb[0].mxu0 %v3346
        %v3480 = vpop.f32.mrb[0].mxu0
        %v3481 = vadd.f32 0.0, %v3480
        %v3482 = vpop.f32.mrb[0].mxu0
        %v3483 = vpop.f32.mrb[0].mxu0
        %v3484 = vpop.f32.mrb[0].mxu0
        %3485 = vdwg.mxu0
        %v3486 = vadd.f32 %v3310, %v3481
        %s3487 = scalar_lea.vmem %s186, 2304 [#allocation6]
        %v3488 = vld [vmem:[%s3487] sm:$0xf]
        %v3489 = vld [vmem:[%s3487 + $0x4] sm:$0xf]
        %v3490 = vld [vmem:[%s3487 + $0x8] sm:$0xf]
        %v3491 = vld [vmem:[%s3487 + $0xc] sm:$0xf]
        %v3492 = vld [vmem:[%s3487 + $0x10] sm:$0xf]
        %v3493 = vld [vmem:[%s3487 + $0x14] sm:$0xf]
        %v3494 = vld [vmem:[%s3487 + $0x18] sm:$0xf]
        %v3495 = vld [vmem:[%s3487 + $0x1c] sm:$0xf]
        %v3496 = vld [vmem:[%s3487 + $0x20] sm:$0xf]
        %v3497 = vld [vmem:[%s3487 + $0x24] sm:$0xf]
        %v3498 = vld [vmem:[%s3487 + $0x28] sm:$0xf]
        %v3499 = vld [vmem:[%s3487 + $0x2c] sm:$0xf]
        %v3500 = vld [vmem:[%s3487 + $0x30] sm:$0xf]
        %v3501 = vld [vmem:[%s3487 + $0x34] sm:$0xf]
        %v3502 = vld [vmem:[%s3487 + $0x38] sm:$0xf]
        %v3503 = vld [vmem:[%s3487 + $0x3c] sm:$0xf]
        %v3504 = vld [vmem:[%s3487 + $0x40] sm:$0xf]
        %v3505 = vld [vmem:[%s3487 + $0x44] sm:$0xf]
        %v3506 = vld [vmem:[%s3487 + $0x48] sm:$0xf]
        %v3507 = vld [vmem:[%s3487 + $0x4c] sm:$0xf]
        %v3508 = vld [vmem:[%s3487 + $0x50] sm:$0xf]
        %v3509 = vld [vmem:[%s3487 + $0x54] sm:$0xf]
        %v3510 = vld [vmem:[%s3487 + $0x58] sm:$0xf]
        %v3511 = vld [vmem:[%s3487 + $0x5c] sm:$0xf]
        %v3512 = vld [vmem:[%s3487 + $0x60] sm:$0xf]
        %v3513 = vld [vmem:[%s3487 + $0x64] sm:$0xf]
        %v3514 = vld [vmem:[%s3487 + $0x68] sm:$0xf]
        %v3515 = vld [vmem:[%s3487 + $0x6c] sm:$0xf]
        %v3516 = vld [vmem:[%s3487 + $0x70] sm:$0xf]
        %v3517 = vld [vmem:[%s3487 + $0x74] sm:$0xf]
        %v3518 = vld [vmem:[%s3487 + $0x78] sm:$0xf]
        %v3519 = vld [vmem:[%s3487 + $0x7c] sm:$0xf]
        %v3520 = vrot.slane %v360, 2
        %v3521 = vrot.slane %v361, 2
        %v3556 = vunpack.c.l.b16 %v3488
        %v3557 = vunpack.c.l.b16 %v3489
        %v3558 = vunpack.c.l.b16 %v3490
        %v3559 = vunpack.c.l.b16 %v3491
        %v3560 = vunpack.c.l.b16 %v3492
        %v3561 = vunpack.c.l.b16 %v3493
        %v3562 = vunpack.c.l.b16 %v3494
        %v3563 = vunpack.c.l.b16 %v3495
        %v3564 = vunpack.c.l.b16 %v3496
        %v3565 = vunpack.c.l.b16 %v3497
        %v3566 = vunpack.c.l.b16 %v3498
        %v3567 = vunpack.c.l.b16 %v3499
        %v3568 = vunpack.c.l.b16 %v3500
        %v3569 = vunpack.c.l.b16 %v3501
        %v3570 = vunpack.c.l.b16 %v3502
        %v3571 = vunpack.c.l.b16 %v3503
        %v3572 = vunpack.c.l.b16 %v3504
        %v3573 = vunpack.c.l.b16 %v3505
        %v3574 = vunpack.c.l.b16 %v3506
        %v3575 = vunpack.c.l.b16 %v3507
        %v3576 = vunpack.c.l.b16 %v3508
        %v3577 = vunpack.c.l.b16 %v3509
        %v3578 = vunpack.c.l.b16 %v3510
        %v3579 = vunpack.c.l.b16 %v3511
        %v3580 = vunpack.c.l.b16 %v3512
        %v3581 = vunpack.c.l.b16 %v3513
        %v3582 = vunpack.c.l.b16 %v3514
        %v3583 = vunpack.c.l.b16 %v3515
        %v3584 = vunpack.c.l.b16 %v3516
        %v3585 = vunpack.c.l.b16 %v3517
        %v3586 = vunpack.c.l.b16 %v3518
        %v3587 = vunpack.c.l.b16 %v3519
        %v3588 = vpack.c.b16 %v3557, %v3556
        %v3589 = vpack.c.b16 %v3559, %v3558
        %v3590 = vpack.c.b16 %v3561, %v3560
        %v3591 = vpack.c.b16 %v3563, %v3562
        %v3592 = vpack.c.b16 %v3565, %v3564
        %v3593 = vpack.c.b16 %v3567, %v3566
        %v3594 = vpack.c.b16 %v3569, %v3568
        %v3595 = vpack.c.b16 %v3571, %v3570
        %v3596 = vpack.c.b16 %v3573, %v3572
        %v3597 = vpack.c.b16 %v3575, %v3574
        %v3598 = vpack.c.b16 %v3577, %v3576
        %v3599 = vpack.c.b16 %v3579, %v3578
        %v3600 = vpack.c.b16 %v3581, %v3580
        %v3601 = vpack.c.b16 %v3583, %v3582
        %v3602 = vpack.c.b16 %v3585, %v3584
        %v3603 = vpack.c.b16 %v3587, %v3586
        %3620 = vmatprep.subr.bf16.mxu0 0
        %3621 = vmatpush1.bf16.msra.mxu0 %v3588
        %3622 = vmatprep.subr.bf16.mxu0 0
        %3623 = vmatpush1.bf16.msra.mxu0 %v3589
        %3624 = vmatprep.subr.bf16.mxu0 0
        %3625 = vmatpush1.bf16.msra.mxu0 %v3590
        %3626 = vmatprep.subr.bf16.mxu0 0
        %3627 = vmatpush1.bf16.msra.mxu0 %v3591
        %3628 = vmatprep.subr.bf16.mxu0 0
        %3629 = vmatpush1.bf16.msra.mxu0 %v3592
        %3630 = vmatprep.subr.bf16.mxu0 0
        %3631 = vmatpush1.bf16.msra.mxu0 %v3593
        %3632 = vmatprep.subr.bf16.mxu0 0
        %3633 = vmatpush1.bf16.msra.mxu0 %v3594
        %3634 = vmatprep.subr.bf16.mxu0 0
        %3635 = vmatpush1.bf16.msra.mxu0 %v3595
        %3636 = vmatprep.subr.bf16.mxu0 0
        %3637 = vmatpush1.bf16.msra.mxu0 %v3596
        %3638 = vmatprep.subr.bf16.mxu0 0
        %3639 = vmatpush1.bf16.msra.mxu0 %v3597
        %3640 = vmatprep.subr.bf16.mxu0 0
        %3641 = vmatpush1.bf16.msra.mxu0 %v3598
        %3642 = vmatprep.subr.bf16.mxu0 0
        %3643 = vmatpush1.bf16.msra.mxu0 %v3599
        %3644 = vmatprep.subr.bf16.mxu0 0
        %3645 = vmatpush1.bf16.msra.mxu0 %v3600
        %3646 = vmatprep.subr.bf16.mxu0 0
        %3647 = vmatpush1.bf16.msra.mxu0 %v3601
        %3648 = vmatprep.subr.bf16.mxu0 0
        %3649 = vmatpush1.bf16.msra.mxu0 %v3602
        %3650 = vmatprep.subr.bf16.mxu0 0
        %3651 = vmatpush1.bf16.msra.mxu0 %v3603
        %3652 = vmatprep.mubr.bf16.mxu0 %v3521
        %3653 = vmatmul.mubr.bf16.gmra.mrb[0].mxu0 %v3520
        %v3654 = vpop.f32.mrb[0].mxu0
        %v3655 = vadd.f32 0.0, %v3654
        %v3656 = vpop.f32.mrb[0].mxu0
        %v3657 = vpop.f32.mrb[0].mxu0
        %v3658 = vpop.f32.mrb[0].mxu0
        %3659 = vdwg.mxu0
        %v3660 = vadd.f32 %v3486, %v3655
        %s3661 = scalar_lea.vmem %s186, 2432 [#allocation6]
        %v3662 = vld [vmem:[%s3661] sm:$0xf]
        %v3663 = vld [vmem:[%s3661 + $0x4] sm:$0xf]
        %v3664 = vld [vmem:[%s3661 + $0x8] sm:$0xf]
        %v3665 = vld [vmem:[%s3661 + $0xc] sm:$0xf]
        %v3666 = vld [vmem:[%s3661 + $0x10] sm:$0xf]
        %v3667 = vld [vmem:[%s3661 + $0x14] sm:$0xf]
        %v3668 = vld [vmem:[%s3661 + $0x18] sm:$0xf]
        %v3669 = vld [vmem:[%s3661 + $0x1c] sm:$0xf]
        %v3670 = vld [vmem:[%s3661 + $0x20] sm:$0xf]
        %v3671 = vld [vmem:[%s3661 + $0x24] sm:$0xf]
        %v3672 = vld [vmem:[%s3661 + $0x28] sm:$0xf]
        %v3673 = vld [vmem:[%s3661 + $0x2c] sm:$0xf]
        %v3674 = vld [vmem:[%s3661 + $0x30] sm:$0xf]
        %v3675 = vld [vmem:[%s3661 + $0x34] sm:$0xf]
        %v3676 = vld [vmem:[%s3661 + $0x38] sm:$0xf]
        %v3677 = vld [vmem:[%s3661 + $0x3c] sm:$0xf]
        %v3678 = vld [vmem:[%s3661 + $0x40] sm:$0xf]
        %v3679 = vld [vmem:[%s3661 + $0x44] sm:$0xf]
        %v3680 = vld [vmem:[%s3661 + $0x48] sm:$0xf]
        %v3681 = vld [vmem:[%s3661 + $0x4c] sm:$0xf]
        %v3682 = vld [vmem:[%s3661 + $0x50] sm:$0xf]
        %v3683 = vld [vmem:[%s3661 + $0x54] sm:$0xf]
        %v3684 = vld [vmem:[%s3661 + $0x58] sm:$0xf]
        %v3685 = vld [vmem:[%s3661 + $0x5c] sm:$0xf]
        %v3686 = vld [vmem:[%s3661 + $0x60] sm:$0xf]
        %v3687 = vld [vmem:[%s3661 + $0x64] sm:$0xf]
        %v3688 = vld [vmem:[%s3661 + $0x68] sm:$0xf]
        %v3689 = vld [vmem:[%s3661 + $0x6c] sm:$0xf]
        %v3690 = vld [vmem:[%s3661 + $0x70] sm:$0xf]
        %v3691 = vld [vmem:[%s3661 + $0x74] sm:$0xf]
        %v3692 = vld [vmem:[%s3661 + $0x78] sm:$0xf]
        %v3693 = vld [vmem:[%s3661 + $0x7c] sm:$0xf]
        %v3694 = vrot.slane %v360, 3
        %v3695 = vrot.slane %v361, 3
        %v3730 = vunpack.c.l.b16 %v3662
        %v3731 = vunpack.c.l.b16 %v3663
        %v3732 = vunpack.c.l.b16 %v3664
        %v3733 = vunpack.c.l.b16 %v3665
        %v3734 = vunpack.c.l.b16 %v3666
        %v3735 = vunpack.c.l.b16 %v3667
        %v3736 = vunpack.c.l.b16 %v3668
        %v3737 = vunpack.c.l.b16 %v3669
        %v3738 = vunpack.c.l.b16 %v3670
        %v3739 = vunpack.c.l.b16 %v3671
        %v3740 = vunpack.c.l.b16 %v3672
        %v3741 = vunpack.c.l.b16 %v3673
        %v3742 = vunpack.c.l.b16 %v3674
        %v3743 = vunpack.c.l.b16 %v3675
        %v3744 = vunpack.c.l.b16 %v3676
        %v3745 = vunpack.c.l.b16 %v3677
        %v3746 = vunpack.c.l.b16 %v3678
        %v3747 = vunpack.c.l.b16 %v3679
        %v3748 = vunpack.c.l.b16 %v3680
        %v3749 = vunpack.c.l.b16 %v3681
        %v3750 = vunpack.c.l.b16 %v3682
        %v3751 = vunpack.c.l.b16 %v3683
        %v3752 = vunpack.c.l.b16 %v3684
        %v3753 = vunpack.c.l.b16 %v3685
        %v3754 = vunpack.c.l.b16 %v3686
        %v3755 = vunpack.c.l.b16 %v3687
        %v3756 = vunpack.c.l.b16 %v3688
        %v3757 = vunpack.c.l.b16 %v3689
        %v3758 = vunpack.c.l.b16 %v3690
        %v3759 = vunpack.c.l.b16 %v3691
        %v3760 = vunpack.c.l.b16 %v3692
        %v3761 = vunpack.c.l.b16 %v3693
        %v3762 = vpack.c.b16 %v3731, %v3730
        %v3763 = vpack.c.b16 %v3733, %v3732
        %v3764 = vpack.c.b16 %v3735, %v3734
        %v3765 = vpack.c.b16 %v3737, %v3736
        %v3766 = vpack.c.b16 %v3739, %v3738
        %v3767 = vpack.c.b16 %v3741, %v3740
        %v3768 = vpack.c.b16 %v3743, %v3742
        %v3769 = vpack.c.b16 %v3745, %v3744
        %v3770 = vpack.c.b16 %v3747, %v3746
        %v3771 = vpack.c.b16 %v3749, %v3748
        %v3772 = vpack.c.b16 %v3751, %v3750
        %v3773 = vpack.c.b16 %v3753, %v3752
        %v3774 = vpack.c.b16 %v3755, %v3754
        %v3775 = vpack.c.b16 %v3757, %v3756
        %v3776 = vpack.c.b16 %v3759, %v3758
        %v3777 = vpack.c.b16 %v3761, %v3760
        %3794 = vmatprep.subr.bf16.mxu0 0
        %3795 = vmatpush1.bf16.msra.mxu0 %v3762
        %3796 = vmatprep.subr.bf16.mxu0 0
        %3797 = vmatpush1.bf16.msra.mxu0 %v3763
        %3798 = vmatprep.subr.bf16.mxu0 0
        %3799 = vmatpush1.bf16.msra.mxu0 %v3764
        %3800 = vmatprep.subr.bf16.mxu0 0
        %3801 = vmatpush1.bf16.msra.mxu0 %v3765
        %3802 = vmatprep.subr.bf16.mxu0 0
        %3803 = vmatpush1.bf16.msra.mxu0 %v3766
        %3804 = vmatprep.subr.bf16.mxu0 0
        %3805 = vmatpush1.bf16.msra.mxu0 %v3767
        %3806 = vmatprep.subr.bf16.mxu0 0
        %3807 = vmatpush1.bf16.msra.mxu0 %v3768
        %3808 = vmatprep.subr.bf16.mxu0 0
        %3809 = vmatpush1.bf16.msra.mxu0 %v3769
        %3810 = vmatprep.subr.bf16.mxu0 0
        %3811 = vmatpush1.bf16.msra.mxu0 %v3770
        %3812 = vmatprep.subr.bf16.mxu0 0
        %3813 = vmatpush1.bf16.msra.mxu0 %v3771
        %3814 = vmatprep.subr.bf16.mxu0 0
        %3815 = vmatpush1.bf16.msra.mxu0 %v3772
        %3816 = vmatprep.subr.bf16.mxu0 0
        %3817 = vmatpush1.bf16.msra.mxu0 %v3773
        %3818 = vmatprep.subr.bf16.mxu0 0
        %3819 = vmatpush1.bf16.msra.mxu0 %v3774
        %3820 = vmatprep.subr.bf16.mxu0 0
        %3821 = vmatpush1.bf16.msra.mxu0 %v3775
        %3822 = vmatprep.subr.bf16.mxu0 0
        %3823 = vmatpush1.bf16.msra.mxu0 %v3776
        %3824 = vmatprep.subr.bf16.mxu0 0
        %3825 = vmatpush1.bf16.msra.mxu0 %v3777
        %3826 = vmatprep.mubr.bf16.mxu0 %v3695
        %3827 = vmatmul.mubr.bf16.gmra.mrb[0].mxu0 %v3694
        %v3828 = vpop.f32.mrb[0].mxu0
        %v3829 = vadd.f32 0.0, %v3828
        %v3830 = vpop.f32.mrb[0].mxu0
        %v3831 = vpop.f32.mrb[0].mxu0
        %v3832 = vpop.f32.mrb[0].mxu0
        %3833 = vdwg.mxu0
        %v3834 = vadd.f32 %v3660, %v3829
        %s3835 = scalar_lea.vmem %s186, 2560 [#allocation6]
        %v3836 = vld [vmem:[%s3835] sm:$0xf]
        %v3837 = vld [vmem:[%s3835 + $0x4] sm:$0xf]
        %v3838 = vld [vmem:[%s3835 + $0x8] sm:$0xf]
        %v3839 = vld [vmem:[%s3835 + $0xc] sm:$0xf]
        %v3840 = vld [vmem:[%s3835 + $0x10] sm:$0xf]
        %v3841 = vld [vmem:[%s3835 + $0x14] sm:$0xf]
        %v3842 = vld [vmem:[%s3835 + $0x18] sm:$0xf]
        %v3843 = vld [vmem:[%s3835 + $0x1c] sm:$0xf]
        %v3844 = vld [vmem:[%s3835 + $0x20] sm:$0xf]
        %v3845 = vld [vmem:[%s3835 + $0x24] sm:$0xf]
        %v3846 = vld [vmem:[%s3835 + $0x28] sm:$0xf]
        %v3847 = vld [vmem:[%s3835 + $0x2c] sm:$0xf]
        %v3848 = vld [vmem:[%s3835 + $0x30] sm:$0xf]
        %v3849 = vld [vmem:[%s3835 + $0x34] sm:$0xf]
        %v3850 = vld [vmem:[%s3835 + $0x38] sm:$0xf]
        %v3851 = vld [vmem:[%s3835 + $0x3c] sm:$0xf]
        %v3852 = vld [vmem:[%s3835 + $0x40] sm:$0xf]
        %v3853 = vld [vmem:[%s3835 + $0x44] sm:$0xf]
        %v3854 = vld [vmem:[%s3835 + $0x48] sm:$0xf]
        %v3855 = vld [vmem:[%s3835 + $0x4c] sm:$0xf]
        %v3856 = vld [vmem:[%s3835 + $0x50] sm:$0xf]
        %v3857 = vld [vmem:[%s3835 + $0x54] sm:$0xf]
        %v3858 = vld [vmem:[%s3835 + $0x58] sm:$0xf]
        %v3859 = vld [vmem:[%s3835 + $0x5c] sm:$0xf]
        %v3860 = vld [vmem:[%s3835 + $0x60] sm:$0xf]
        %v3861 = vld [vmem:[%s3835 + $0x64] sm:$0xf]
        %v3862 = vld [vmem:[%s3835 + $0x68] sm:$0xf]
        %v3863 = vld [vmem:[%s3835 + $0x6c] sm:$0xf]
        %v3864 = vld [vmem:[%s3835 + $0x70] sm:$0xf]
        %v3865 = vld [vmem:[%s3835 + $0x74] sm:$0xf]
        %v3866 = vld [vmem:[%s3835 + $0x78] sm:$0xf]
        %v3867 = vld [vmem:[%s3835 + $0x7c] sm:$0xf]
        %v3868 = vrot.slane %v360, 4
        %v3869 = vrot.slane %v361, 4
        %v3904 = vunpack.c.l.b16 %v3836
        %v3905 = vunpack.c.l.b16 %v3837
        %v3906 = vunpack.c.l.b16 %v3838
        %v3907 = vunpack.c.l.b16 %v3839
        %v3908 = vunpack.c.l.b16 %v3840
        %v3909 = vunpack.c.l.b16 %v3841
        %v3910 = vunpack.c.l.b16 %v3842
        %v3911 = vunpack.c.l.b16 %v3843
        %v3912 = vunpack.c.l.b16 %v3844
        %v3913 = vunpack.c.l.b16 %v3845
        %v3914 = vunpack.c.l.b16 %v3846
        %v3915 = vunpack.c.l.b16 %v3847
        %v3916 = vunpack.c.l.b16 %v3848
        %v3917 = vunpack.c.l.b16 %v3849
        %v3918 = vunpack.c.l.b16 %v3850
        %v3919 = vunpack.c.l.b16 %v3851
        %v3920 = vunpack.c.l.b16 %v3852
        %v3921 = vunpack.c.l.b16 %v3853
        %v3922 = vunpack.c.l.b16 %v3854
        %v3923 = vunpack.c.l.b16 %v3855
        %v3924 = vunpack.c.l.b16 %v3856
        %v3925 = vunpack.c.l.b16 %v3857
        %v3926 = vunpack.c.l.b16 %v3858
        %v3927 = vunpack.c.l.b16 %v3859
        %v3928 = vunpack.c.l.b16 %v3860
        %v3929 = vunpack.c.l.b16 %v3861
        %v3930 = vunpack.c.l.b16 %v3862
        %v3931 = vunpack.c.l.b16 %v3863
        %v3932 = vunpack.c.l.b16 %v3864
        %v3933 = vunpack.c.l.b16 %v3865
        %v3934 = vunpack.c.l.b16 %v3866
        %v3935 = vunpack.c.l.b16 %v3867
        %v3936 = vpack.c.b16 %v3905, %v3904
        %v3937 = vpack.c.b16 %v3907, %v3906
        %v3938 = vpack.c.b16 %v3909, %v3908
        %v3939 = vpack.c.b16 %v3911, %v3910
        %v3940 = vpack.c.b16 %v3913, %v3912
        %v3941 = vpack.c.b16 %v3915, %v3914
        %v3942 = vpack.c.b16 %v3917, %v3916
        %v3943 = vpack.c.b16 %v3919, %v3918
        %v3944 = vpack.c.b16 %v3921, %v3920
        %v3945 = vpack.c.b16 %v3923, %v3922
        %v3946 = vpack.c.b16 %v3925, %v3924
        %v3947 = vpack.c.b16 %v3927, %v3926
        %v3948 = vpack.c.b16 %v3929, %v3928
        %v3949 = vpack.c.b16 %v3931, %v3930
        %v3950 = vpack.c.b16 %v3933, %v3932
        %v3951 = vpack.c.b16 %v3935, %v3934
        %3968 = vmatprep.subr.bf16.mxu0 0
        %3969 = vmatpush1.bf16.msra.mxu0 %v3936
        %3970 = vmatprep.subr.bf16.mxu0 0
        %3971 = vmatpush1.bf16.msra.mxu0 %v3937
        %3972 = vmatprep.subr.bf16.mxu0 0
        %3973 = vmatpush1.bf16.msra.mxu0 %v3938
        %3974 = vmatprep.subr.bf16.mxu0 0
        %3975 = vmatpush1.bf16.msra.mxu0 %v3939
        %3976 = vmatprep.subr.bf16.mxu0 0
        %3977 = vmatpush1.bf16.msra.mxu0 %v3940
        %3978 = vmatprep.subr.bf16.mxu0 0
        %3979 = vmatpush1.bf16.msra.mxu0 %v3941
        %3980 = vmatprep.subr.bf16.mxu0 0
        %3981 = vmatpush1.bf16.msra.mxu0 %v3942
        %3982 = vmatprep.subr.bf16.mxu0 0
        %3983 = vmatpush1.bf16.msra.mxu0 %v3943
        %3984 = vmatprep.subr.bf16.mxu0 0
        %3985 = vmatpush1.bf16.msra.mxu0 %v3944
        %3986 = vmatprep.subr.bf16.mxu0 0
        %3987 = vmatpush1.bf16.msra.mxu0 %v3945
        %3988 = vmatprep.subr.bf16.mxu0 0
        %3989 = vmatpush1.bf16.msra.mxu0 %v3946
        %3990 = vmatprep.subr.bf16.mxu0 0
        %3991 = vmatpush1.bf16.msra.mxu0 %v3947
        %3992 = vmatprep.subr.bf16.mxu0 0
        %3993 = vmatpush1.bf16.msra.mxu0 %v3948
        %3994 = vmatprep.subr.bf16.mxu0 0
        %3995 = vmatpush1.bf16.msra.mxu0 %v3949
        %3996 = vmatprep.subr.bf16.mxu0 0
        %3997 = vmatpush1.bf16.msra.mxu0 %v3950
        %3998 = vmatprep.subr.bf16.mxu0 0
        %3999 = vmatpush1.bf16.msra.mxu0 %v3951
        %4000 = vmatprep.mubr.bf16.mxu0 %v3869
        %4001 = vmatmul.mubr.bf16.gmra.mrb[0].mxu0 %v3868
        %v4002 = vpop.f32.mrb[0].mxu0
        %v4003 = vadd.f32 0.0, %v4002
        %v4004 = vpop.f32.mrb[0].mxu0
        %v4005 = vpop.f32.mrb[0].mxu0
        %v4006 = vpop.f32.mrb[0].mxu0
        %4007 = vdwg.mxu0
        %v4008 = vadd.f32 %v3834, %v4003
        %s4009 = scalar_lea.vmem %s186, 2688 [#allocation6]
        %v4010 = vld [vmem:[%s4009] sm:$0xf]
        %v4011 = vld [vmem:[%s4009 + $0x4] sm:$0xf]
        %v4012 = vld [vmem:[%s4009 + $0x8] sm:$0xf]
        %v4013 = vld [vmem:[%s4009 + $0xc] sm:$0xf]
        %v4014 = vld [vmem:[%s4009 + $0x10] sm:$0xf]
        %v4015 = vld [vmem:[%s4009 + $0x14] sm:$0xf]
        %v4016 = vld [vmem:[%s4009 + $0x18] sm:$0xf]
        %v4017 = vld [vmem:[%s4009 + $0x1c] sm:$0xf]
        %v4018 = vld [vmem:[%s4009 + $0x20] sm:$0xf]
        %v4019 = vld [vmem:[%s4009 + $0x24] sm:$0xf]
        %v4020 = vld [vmem:[%s4009 + $0x28] sm:$0xf]
        %v4021 = vld [vmem:[%s4009 + $0x2c] sm:$0xf]
        %v4022 = vld [vmem:[%s4009 + $0x30] sm:$0xf]
        %v4023 = vld [vmem:[%s4009 + $0x34] sm:$0xf]
        %v4024 = vld [vmem:[%s4009 + $0x38] sm:$0xf]
        %v4025 = vld [vmem:[%s4009 + $0x3c] sm:$0xf]
        %v4026 = vld [vmem:[%s4009 + $0x40] sm:$0xf]
        %v4027 = vld [vmem:[%s4009 + $0x44] sm:$0xf]
        %v4028 = vld [vmem:[%s4009 + $0x48] sm:$0xf]
        %v4029 = vld [vmem:[%s4009 + $0x4c] sm:$0xf]
        %v4030 = vld [vmem:[%s4009 + $0x50] sm:$0xf]
        %v4031 = vld [vmem:[%s4009 + $0x54] sm:$0xf]
        %v4032 = vld [vmem:[%s4009 + $0x58] sm:$0xf]
        %v4033 = vld [vmem:[%s4009 + $0x5c] sm:$0xf]
        %v4034 = vld [vmem:[%s4009 + $0x60] sm:$0xf]
        %v4035 = vld [vmem:[%s4009 + $0x64] sm:$0xf]
        %v4036 = vld [vmem:[%s4009 + $0x68] sm:$0xf]
        %v4037 = vld [vmem:[%s4009 + $0x6c] sm:$0xf]
        %v4038 = vld [vmem:[%s4009 + $0x70] sm:$0xf]
        %v4039 = vld [vmem:[%s4009 + $0x74] sm:$0xf]
        %v4040 = vld [vmem:[%s4009 + $0x78] sm:$0xf]
        %v4041 = vld [vmem:[%s4009 + $0x7c] sm:$0xf]
        %v4042 = vrot.slane %v360, 5
        %v4043 = vrot.slane %v361, 5
        %v4078 = vunpack.c.l.b16 %v4010
        %v4079 = vunpack.c.l.b16 %v4011
        %v4080 = vunpack.c.l.b16 %v4012
        %v4081 = vunpack.c.l.b16 %v4013
        %v4082 = vunpack.c.l.b16 %v4014
        %v4083 = vunpack.c.l.b16 %v4015
        %v4084 = vunpack.c.l.b16 %v4016
        %v4085 = vunpack.c.l.b16 %v4017
        %v4086 = vunpack.c.l.b16 %v4018
        %v4087 = vunpack.c.l.b16 %v4019
        %v4088 = vunpack.c.l.b16 %v4020
        %v4089 = vunpack.c.l.b16 %v4021
        %v4090 = vunpack.c.l.b16 %v4022
        %v4091 = vunpack.c.l.b16 %v4023
        %v4092 = vunpack.c.l.b16 %v4024
        %v4093 = vunpack.c.l.b16 %v4025
        %v4094 = vunpack.c.l.b16 %v4026
        %v4095 = vunpack.c.l.b16 %v4027
        %v4096 = vunpack.c.l.b16 %v4028
        %v4097 = vunpack.c.l.b16 %v4029
        %v4098 = vunpack.c.l.b16 %v4030
        %v4099 = vunpack.c.l.b16 %v4031
        %v4100 = vunpack.c.l.b16 %v4032
        %v4101 = vunpack.c.l.b16 %v4033
        %v4102 = vunpack.c.l.b16 %v4034
        %v4103 = vunpack.c.l.b16 %v4035
        %v4104 = vunpack.c.l.b16 %v4036
        %v4105 = vunpack.c.l.b16 %v4037
        %v4106 = vunpack.c.l.b16 %v4038
        %v4107 = vunpack.c.l.b16 %v4039
        %v4108 = vunpack.c.l.b16 %v4040
        %v4109 = vunpack.c.l.b16 %v4041
        %v4110 = vpack.c.b16 %v4079, %v4078
        %v4111 = vpack.c.b16 %v4081, %v4080
        %v4112 = vpack.c.b16 %v4083, %v4082
        %v4113 = vpack.c.b16 %v4085, %v4084
        %v4114 = vpack.c.b16 %v4087, %v4086
        %v4115 = vpack.c.b16 %v4089, %v4088
        %v4116 = vpack.c.b16 %v4091, %v4090
        %v4117 = vpack.c.b16 %v4093, %v4092
        %v4118 = vpack.c.b16 %v4095, %v4094
        %v4119 = vpack.c.b16 %v4097, %v4096
        %v4120 = vpack.c.b16 %v4099, %v4098
        %v4121 = vpack.c.b16 %v4101, %v4100
        %v4122 = vpack.c.b16 %v4103, %v4102
        %v4123 = vpack.c.b16 %v4105, %v4104
        %v4124 = vpack.c.b16 %v4107, %v4106
        %v4125 = vpack.c.b16 %v4109, %v4108
        %4142 = vmatprep.subr.bf16.mxu0 0
        %4143 = vmatpush1.bf16.msra.mxu0 %v4110
        %4144 = vmatprep.subr.bf16.mxu0 0
        %4145 = vmatpush1.bf16.msra.mxu0 %v4111
        %4146 = vmatprep.subr.bf16.mxu0 0
        %4147 = vmatpush1.bf16.msra.mxu0 %v4112
        %4148 = vmatprep.subr.bf16.mxu0 0
        %4149 = vmatpush1.bf16.msra.mxu0 %v4113
        %4150 = vmatprep.subr.bf16.mxu0 0
        %4151 = vmatpush1.bf16.msra.mxu0 %v4114
        %4152 = vmatprep.subr.bf16.mxu0 0
        %4153 = vmatpush1.bf16.msra.mxu0 %v4115
        %4154 = vmatprep.subr.bf16.mxu0 0
        %4155 = vmatpush1.bf16.msra.mxu0 %v4116
        %4156 = vmatprep.subr.bf16.mxu0 0
        %4157 = vmatpush1.bf16.msra.mxu0 %v4117
        %4158 = vmatprep.subr.bf16.mxu0 0
        %4159 = vmatpush1.bf16.msra.mxu0 %v4118
        %4160 = vmatprep.subr.bf16.mxu0 0
        %4161 = vmatpush1.bf16.msra.mxu0 %v4119
        %4162 = vmatprep.subr.bf16.mxu0 0
        %4163 = vmatpush1.bf16.msra.mxu0 %v4120
        %4164 = vmatprep.subr.bf16.mxu0 0
        %4165 = vmatpush1.bf16.msra.mxu0 %v4121
        %4166 = vmatprep.subr.bf16.mxu0 0
        %4167 = vmatpush1.bf16.msra.mxu0 %v4122
        %4168 = vmatprep.subr.bf16.mxu0 0
        %4169 = vmatpush1.bf16.msra.mxu0 %v4123
        %4170 = vmatprep.subr.bf16.mxu0 0
        %4171 = vmatpush1.bf16.msra.mxu0 %v4124
        %4172 = vmatprep.subr.bf16.mxu0 0
        %4173 = vmatpush1.bf16.msra.mxu0 %v4125
        %4174 = vmatprep.mubr.bf16.mxu0 %v4043
        %4175 = vmatmul.mubr.bf16.gmra.mrb[0].mxu0 %v4042
        %v4176 = vpop.f32.mrb[0].mxu0
        %v4177 = vadd.f32 0.0, %v4176
        %v4178 = vpop.f32.mrb[0].mxu0
        %v4179 = vpop.f32.mrb[0].mxu0
        %v4180 = vpop.f32.mrb[0].mxu0
        %4181 = vdwg.mxu0
        %v4182 = vadd.f32 %v4008, %v4177
        %s4183 = scalar_lea.vmem %s186, 2816 [#allocation6]
        %v4184 = vld [vmem:[%s4183] sm:$0xf]
        %v4185 = vld [vmem:[%s4183 + $0x4] sm:$0xf]
        %v4186 = vld [vmem:[%s4183 + $0x8] sm:$0xf]
        %v4187 = vld [vmem:[%s4183 + $0xc] sm:$0xf]
        %v4188 = vld [vmem:[%s4183 + $0x10] sm:$0xf]
        %v4189 = vld [vmem:[%s4183 + $0x14] sm:$0xf]
        %v4190 = vld [vmem:[%s4183 + $0x18] sm:$0xf]
        %v4191 = vld [vmem:[%s4183 + $0x1c] sm:$0xf]
        %v4192 = vld [vmem:[%s4183 + $0x20] sm:$0xf]
        %v4193 = vld [vmem:[%s4183 + $0x24] sm:$0xf]
        %v4194 = vld [vmem:[%s4183 + $0x28] sm:$0xf]
        %v4195 = vld [vmem:[%s4183 + $0x2c] sm:$0xf]
        %v4196 = vld [vmem:[%s4183 + $0x30] sm:$0xf]
        %v4197 = vld [vmem:[%s4183 + $0x34] sm:$0xf]
        %v4198 = vld [vmem:[%s4183 + $0x38] sm:$0xf]
        %v4199 = vld [vmem:[%s4183 + $0x3c] sm:$0xf]
        %v4200 = vld [vmem:[%s4183 + $0x40] sm:$0xf]
        %v4201 = vld [vmem:[%s4183 + $0x44] sm:$0xf]
        %v4202 = vld [vmem:[%s4183 + $0x48] sm:$0xf]
        %v4203 = vld [vmem:[%s4183 + $0x4c] sm:$0xf]
        %v4204 = vld [vmem:[%s4183 + $0x50] sm:$0xf]
        %v4205 = vld [vmem:[%s4183 + $0x54] sm:$0xf]
        %v4206 = vld [vmem:[%s4183 + $0x58] sm:$0xf]
        %v4207 = vld [vmem:[%s4183 + $0x5c] sm:$0xf]
        %v4208 = vld [vmem:[%s4183 + $0x60] sm:$0xf]
        %v4209 = vld [vmem:[%s4183 + $0x64] sm:$0xf]
        %v4210 = vld [vmem:[%s4183 + $0x68] sm:$0xf]
        %v4211 = vld [vmem:[%s4183 + $0x6c] sm:$0xf]
        %v4212 = vld [vmem:[%s4183 + $0x70] sm:$0xf]
        %v4213 = vld [vmem:[%s4183 + $0x74] sm:$0xf]
        %v4214 = vld [vmem:[%s4183 + $0x78] sm:$0xf]
        %v4215 = vld [vmem:[%s4183 + $0x7c] sm:$0xf]
        %v4216 = vrot.slane %v360, 6
        %v4217 = vrot.slane %v361, 6
        %v4252 = vunpack.c.l.b16 %v4184
        %v4253 = vunpack.c.l.b16 %v4185
        %v4254 = vunpack.c.l.b16 %v4186
        %v4255 = vunpack.c.l.b16 %v4187
        %v4256 = vunpack.c.l.b16 %v4188
        %v4257 = vunpack.c.l.b16 %v4189
        %v4258 = vunpack.c.l.b16 %v4190
        %v4259 = vunpack.c.l.b16 %v4191
        %v4260 = vunpack.c.l.b16 %v4192
        %v4261 = vunpack.c.l.b16 %v4193
        %v4262 = vunpack.c.l.b16 %v4194
        %v4263 = vunpack.c.l.b16 %v4195
        %v4264 = vunpack.c.l.b16 %v4196
        %v4265 = vunpack.c.l.b16 %v4197
        %v4266 = vunpack.c.l.b16 %v4198
        %v4267 = vunpack.c.l.b16 %v4199
        %v4268 = vunpack.c.l.b16 %v4200
        %v4269 = vunpack.c.l.b16 %v4201
        %v4270 = vunpack.c.l.b16 %v4202
        %v4271 = vunpack.c.l.b16 %v4203
        %v4272 = vunpack.c.l.b16 %v4204
        %v4273 = vunpack.c.l.b16 %v4205
        %v4274 = vunpack.c.l.b16 %v4206
        %v4275 = vunpack.c.l.b16 %v4207
        %v4276 = vunpack.c.l.b16 %v4208
        %v4277 = vunpack.c.l.b16 %v4209
        %v4278 = vunpack.c.l.b16 %v4210
        %v4279 = vunpack.c.l.b16 %v4211
        %v4280 = vunpack.c.l.b16 %v4212
        %v4281 = vunpack.c.l.b16 %v4213
        %v4282 = vunpack.c.l.b16 %v4214
        %v4283 = vunpack.c.l.b16 %v4215
        %v4284 = vpack.c.b16 %v4253, %v4252
        %v4285 = vpack.c.b16 %v4255, %v4254
        %v4286 = vpack.c.b16 %v4257, %v4256
        %v4287 = vpack.c.b16 %v4259, %v4258
        %v4288 = vpack.c.b16 %v4261, %v4260
        %v4289 = vpack.c.b16 %v4263, %v4262
        %v4290 = vpack.c.b16 %v4265, %v4264
        %v4291 = vpack.c.b16 %v4267, %v4266
        %v4292 = vpack.c.b16 %v4269, %v4268
        %v4293 = vpack.c.b16 %v4271, %v4270
        %v4294 = vpack.c.b16 %v4273, %v4272
        %v4295 = vpack.c.b16 %v4275, %v4274
        %v4296 = vpack.c.b16 %v4277, %v4276
        %v4297 = vpack.c.b16 %v4279, %v4278
        %v4298 = vpack.c.b16 %v4281, %v4280
        %v4299 = vpack.c.b16 %v4283, %v4282
        %4316 = vmatprep.subr.bf16.mxu0 0
        %4317 = vmatpush1.bf16.msra.mxu0 %v4284
        %4318 = vmatprep.subr.bf16.mxu0 0
        %4319 = vmatpush1.bf16.msra.mxu0 %v4285
        %4320 = vmatprep.subr.bf16.mxu0 0
        %4321 = vmatpush1.bf16.msra.mxu0 %v4286
        %4322 = vmatprep.subr.bf16.mxu0 0
        %4323 = vmatpush1.bf16.msra.mxu0 %v4287
        %4324 = vmatprep.subr.bf16.mxu0 0
        %4325 = vmatpush1.bf16.msra.mxu0 %v4288
        %4326 = vmatprep.subr.bf16.mxu0 0
        %4327 = vmatpush1.bf16.msra.mxu0 %v4289
        %4328 = vmatprep.subr.bf16.mxu0 0
        %4329 = vmatpush1.bf16.msra.mxu0 %v4290
        %4330 = vmatprep.subr.bf16.mxu0 0
        %4331 = vmatpush1.bf16.msra.mxu0 %v4291
        %4332 = vmatprep.subr.bf16.mxu0 0
        %4333 = vmatpush1.bf16.msra.mxu0 %v4292
        %4334 = vmatprep.subr.bf16.mxu0 0
        %4335 = vmatpush1.bf16.msra.mxu0 %v4293
        %4336 = vmatprep.subr.bf16.mxu0 0
        %4337 = vmatpush1.bf16.msra.mxu0 %v4294
        %4338 = vmatprep.subr.bf16.mxu0 0
        %4339 = vmatpush1.bf16.msra.mxu0 %v4295
        %4340 = vmatprep.subr.bf16.mxu0 0
        %4341 = vmatpush1.bf16.msra.mxu0 %v4296
        %4342 = vmatprep.subr.bf16.mxu0 0
        %4343 = vmatpush1.bf16.msra.mxu0 %v4297
        %4344 = vmatprep.subr.bf16.mxu0 0
        %4345 = vmatpush1.bf16.msra.mxu0 %v4298
        %4346 = vmatprep.subr.bf16.mxu0 0
        %4347 = vmatpush1.bf16.msra.mxu0 %v4299
        %4348 = vmatprep.mubr.bf16.mxu0 %v4217
        %4349 = vmatmul.mubr.bf16.gmra.mrb[0].mxu0 %v4216
        %v4350 = vpop.f32.mrb[0].mxu0
        %v4351 = vadd.f32 0.0, %v4350
        %v4352 = vpop.f32.mrb[0].mxu0
        %v4353 = vpop.f32.mrb[0].mxu0
        %v4354 = vpop.f32.mrb[0].mxu0
        %4355 = vdwg.mxu0
        %v4356 = vadd.f32 %v4182, %v4351
        %s4357 = scalar_lea.vmem %s186, 2944 [#allocation6]
        %v4358 = vld [vmem:[%s4357] sm:$0xf]
        %v4359 = vld [vmem:[%s4357 + $0x4] sm:$0xf]
        %v4360 = vld [vmem:[%s4357 + $0x8] sm:$0xf]
        %v4361 = vld [vmem:[%s4357 + $0xc] sm:$0xf]
        %v4362 = vld [vmem:[%s4357 + $0x10] sm:$0xf]
        %v4363 = vld [vmem:[%s4357 + $0x14] sm:$0xf]
        %v4364 = vld [vmem:[%s4357 + $0x18] sm:$0xf]
        %v4365 = vld [vmem:[%s4357 + $0x1c] sm:$0xf]
        %v4366 = vld [vmem:[%s4357 + $0x20] sm:$0xf]
        %v4367 = vld [vmem:[%s4357 + $0x24] sm:$0xf]
        %v4368 = vld [vmem:[%s4357 + $0x28] sm:$0xf]
        %v4369 = vld [vmem:[%s4357 + $0x2c] sm:$0xf]
        %v4370 = vld [vmem:[%s4357 + $0x30] sm:$0xf]
        %v4371 = vld [vmem:[%s4357 + $0x34] sm:$0xf]
        %v4372 = vld [vmem:[%s4357 + $0x38] sm:$0xf]
        %v4373 = vld [vmem:[%s4357 + $0x3c] sm:$0xf]
        %v4374 = vld [vmem:[%s4357 + $0x40] sm:$0xf]
        %v4375 = vld [vmem:[%s4357 + $0x44] sm:$0xf]
        %v4376 = vld [vmem:[%s4357 + $0x48] sm:$0xf]
        %v4377 = vld [vmem:[%s4357 + $0x4c] sm:$0xf]
        %v4378 = vld [vmem:[%s4357 + $0x50] sm:$0xf]
        %v4379 = vld [vmem:[%s4357 + $0x54] sm:$0xf]
        %v4380 = vld [vmem:[%s4357 + $0x58] sm:$0xf]
        %v4381 = vld [vmem:[%s4357 + $0x5c] sm:$0xf]
        %v4382 = vld [vmem:[%s4357 + $0x60] sm:$0xf]
        %v4383 = vld [vmem:[%s4357 + $0x64] sm:$0xf]
        %v4384 = vld [vmem:[%s4357 + $0x68] sm:$0xf]
        %v4385 = vld [vmem:[%s4357 + $0x6c] sm:$0xf]
        %v4386 = vld [vmem:[%s4357 + $0x70] sm:$0xf]
        %v4387 = vld [vmem:[%s4357 + $0x74] sm:$0xf]
        %v4388 = vld [vmem:[%s4357 + $0x78] sm:$0xf]
        %v4389 = vld [vmem:[%s4357 + $0x7c] sm:$0xf]
        %v4390 = vrot.slane %v360, 7
        %v4391 = vrot.slane %v361, 7
        %v4426 = vunpack.c.l.b16 %v4358
        %v4427 = vunpack.c.l.b16 %v4359
        %v4428 = vunpack.c.l.b16 %v4360
        %v4429 = vunpack.c.l.b16 %v4361
        %v4430 = vunpack.c.l.b16 %v4362
        %v4431 = vunpack.c.l.b16 %v4363
        %v4432 = vunpack.c.l.b16 %v4364
        %v4433 = vunpack.c.l.b16 %v4365
        %v4434 = vunpack.c.l.b16 %v4366
        %v4435 = vunpack.c.l.b16 %v4367
        %v4436 = vunpack.c.l.b16 %v4368
        %v4437 = vunpack.c.l.b16 %v4369
        %v4438 = vunpack.c.l.b16 %v4370
        %v4439 = vunpack.c.l.b16 %v4371
        %v4440 = vunpack.c.l.b16 %v4372
        %v4441 = vunpack.c.l.b16 %v4373
        %v4442 = vunpack.c.l.b16 %v4374
        %v4443 = vunpack.c.l.b16 %v4375
        %v4444 = vunpack.c.l.b16 %v4376
        %v4445 = vunpack.c.l.b16 %v4377
        %v4446 = vunpack.c.l.b16 %v4378
        %v4447 = vunpack.c.l.b16 %v4379
        %v4448 = vunpack.c.l.b16 %v4380
        %v4449 = vunpack.c.l.b16 %v4381
        %v4450 = vunpack.c.l.b16 %v4382
        %v4451 = vunpack.c.l.b16 %v4383
        %v4452 = vunpack.c.l.b16 %v4384
        %v4453 = vunpack.c.l.b16 %v4385
        %v4454 = vunpack.c.l.b16 %v4386
        %v4455 = vunpack.c.l.b16 %v4387
        %v4456 = vunpack.c.l.b16 %v4388
        %v4457 = vunpack.c.l.b16 %v4389
        %v4458 = vpack.c.b16 %v4427, %v4426
        %v4459 = vpack.c.b16 %v4429, %v4428
        %v4460 = vpack.c.b16 %v4431, %v4430
        %v4461 = vpack.c.b16 %v4433, %v4432
        %v4462 = vpack.c.b16 %v4435, %v4434
        %v4463 = vpack.c.b16 %v4437, %v4436
        %v4464 = vpack.c.b16 %v4439, %v4438
        %v4465 = vpack.c.b16 %v4441, %v4440
        %v4466 = vpack.c.b16 %v4443, %v4442
        %v4467 = vpack.c.b16 %v4445, %v4444
        %v4468 = vpack.c.b16 %v4447, %v4446
        %v4469 = vpack.c.b16 %v4449, %v4448
        %v4470 = vpack.c.b16 %v4451, %v4450
        %v4471 = vpack.c.b16 %v4453, %v4452
        %v4472 = vpack.c.b16 %v4455, %v4454
        %v4473 = vpack.c.b16 %v4457, %v4456
        %4490 = vmatprep.subr.bf16.mxu0 0
        %4491 = vmatpush1.bf16.msra.mxu0 %v4458
        %4492 = vmatprep.subr.bf16.mxu0 0
        %4493 = vmatpush1.bf16.msra.mxu0 %v4459
        %4494 = vmatprep.subr.bf16.mxu0 0
        %4495 = vmatpush1.bf16.msra.mxu0 %v4460
        %4496 = vmatprep.subr.bf16.mxu0 0
        %4497 = vmatpush1.bf16.msra.mxu0 %v4461
        %4498 = vmatprep.subr.bf16.mxu0 0
        %4499 = vmatpush1.bf16.msra.mxu0 %v4462
        %4500 = vmatprep.subr.bf16.mxu0 0
        %4501 = vmatpush1.bf16.msra.mxu0 %v4463
        %4502 = vmatprep.subr.bf16.mxu0 0
        %4503 = vmatpush1.bf16.msra.mxu0 %v4464
        %4504 = vmatprep.subr.bf16.mxu0 0
        %4505 = vmatpush1.bf16.msra.mxu0 %v4465
        %4506 = vmatprep.subr.bf16.mxu0 0
        %4507 = vmatpush1.bf16.msra.mxu0 %v4466
        %4508 = vmatprep.subr.bf16.mxu0 0
        %4509 = vmatpush1.bf16.msra.mxu0 %v4467
        %4510 = vmatprep.subr.bf16.mxu0 0
        %4511 = vmatpush1.bf16.msra.mxu0 %v4468
        %4512 = vmatprep.subr.bf16.mxu0 0
        %4513 = vmatpush1.bf16.msra.mxu0 %v4469
        %4514 = vmatprep.subr.bf16.mxu0 0
        %4515 = vmatpush1.bf16.msra.mxu0 %v4470
        %4516 = vmatprep.subr.bf16.mxu0 0
        %4517 = vmatpush1.bf16.msra.mxu0 %v4471
        %4518 = vmatprep.subr.bf16.mxu0 0
        %4519 = vmatpush1.bf16.msra.mxu0 %v4472
        %4520 = vmatprep.subr.bf16.mxu0 0
        %4521 = vmatpush1.bf16.msra.mxu0 %v4473
        %4522 = vmatprep.mubr.bf16.mxu0 %v4391
        %4523 = vmatmul.mubr.bf16.gmra.mrb[0].mxu0 %v4390
        %v4524 = vpop.f32.mrb[0].mxu0
        %v4525 = vadd.f32 0.0, %v4524
        %v4526 = vpop.f32.mrb[0].mxu0
        %v4527 = vpop.f32.mrb[0].mxu0
        %v4528 = vpop.f32.mrb[0].mxu0
        %4529 = vdwg.mxu0
        %v4530 = vadd.f32 %v4356, %v4525
        %s4531 = scalar_lea.vmem %s186, 3072 [#allocation6]
        %v4532 = vld [vmem:[%s4531] sm:$0xf]
        %v4533 = vld [vmem:[%s4531 + $0x4] sm:$0xf]
        %v4534 = vld [vmem:[%s4531 + $0x8] sm:$0xf]
        %v4535 = vld [vmem:[%s4531 + $0xc] sm:$0xf]
        %v4536 = vld [vmem:[%s4531 + $0x10] sm:$0xf]
        %v4537 = vld [vmem:[%s4531 + $0x14] sm:$0xf]
        %v4538 = vld [vmem:[%s4531 + $0x18] sm:$0xf]
        %v4539 = vld [vmem:[%s4531 + $0x1c] sm:$0xf]
        %v4540 = vld [vmem:[%s4531 + $0x20] sm:$0xf]
        %v4541 = vld [vmem:[%s4531 + $0x24] sm:$0xf]
        %v4542 = vld [vmem:[%s4531 + $0x28] sm:$0xf]
        %v4543 = vld [vmem:[%s4531 + $0x2c] sm:$0xf]
        %v4544 = vld [vmem:[%s4531 + $0x30] sm:$0xf]
        %v4545 = vld [vmem:[%s4531 + $0x34] sm:$0xf]
        %v4546 = vld [vmem:[%s4531 + $0x38] sm:$0xf]
        %v4547 = vld [vmem:[%s4531 + $0x3c] sm:$0xf]
        %v4548 = vld [vmem:[%s4531 + $0x40] sm:$0xf]
        %v4549 = vld [vmem:[%s4531 + $0x44] sm:$0xf]
        %v4550 = vld [vmem:[%s4531 + $0x48] sm:$0xf]
        %v4551 = vld [vmem:[%s4531 + $0x4c] sm:$0xf]
        %v4552 = vld [vmem:[%s4531 + $0x50] sm:$0xf]
        %v4553 = vld [vmem:[%s4531 + $0x54] sm:$0xf]
        %v4554 = vld [vmem:[%s4531 + $0x58] sm:$0xf]
        %v4555 = vld [vmem:[%s4531 + $0x5c] sm:$0xf]
        %v4556 = vld [vmem:[%s4531 + $0x60] sm:$0xf]
        %v4557 = vld [vmem:[%s4531 + $0x64] sm:$0xf]
        %v4558 = vld [vmem:[%s4531 + $0x68] sm:$0xf]
        %v4559 = vld [vmem:[%s4531 + $0x6c] sm:$0xf]
        %v4560 = vld [vmem:[%s4531 + $0x70] sm:$0xf]
        %v4561 = vld [vmem:[%s4531 + $0x74] sm:$0xf]
        %v4562 = vld [vmem:[%s4531 + $0x78] sm:$0xf]
        %v4563 = vld [vmem:[%s4531 + $0x7c] sm:$0xf]
        %v4596 = vunpack.c.l.b16 %v4532
        %v4597 = vunpack.c.l.b16 %v4533
        %v4598 = vunpack.c.l.b16 %v4534
        %v4599 = vunpack.c.l.b16 %v4535
        %v4600 = vunpack.c.l.b16 %v4536
        %v4601 = vunpack.c.l.b16 %v4537
        %v4602 = vunpack.c.l.b16 %v4538
        %v4603 = vunpack.c.l.b16 %v4539
        %v4604 = vunpack.c.l.b16 %v4540
        %v4605 = vunpack.c.l.b16 %v4541
        %v4606 = vunpack.c.l.b16 %v4542
        %v4607 = vunpack.c.l.b16 %v4543
        %v4608 = vunpack.c.l.b16 %v4544
        %v4609 = vunpack.c.l.b16 %v4545
        %v4610 = vunpack.c.l.b16 %v4546
        %v4611 = vunpack.c.l.b16 %v4547
        %v4612 = vunpack.c.l.b16 %v4548
        %v4613 = vunpack.c.l.b16 %v4549
        %v4614 = vunpack.c.l.b16 %v4550
        %v4615 = vunpack.c.l.b16 %v4551
        %v4616 = vunpack.c.l.b16 %v4552
        %v4617 = vunpack.c.l.b16 %v4553
        %v4618 = vunpack.c.l.b16 %v4554
        %v4619 = vunpack.c.l.b16 %v4555
        %v4620 = vunpack.c.l.b16 %v4556
        %v4621 = vunpack.c.l.b16 %v4557
        %v4622 = vunpack.c.l.b16 %v4558
        %v4623 = vunpack.c.l.b16 %v4559
        %v4624 = vunpack.c.l.b16 %v4560
        %v4625 = vunpack.c.l.b16 %v4561
        %v4626 = vunpack.c.l.b16 %v4562
        %v4627 = vunpack.c.l.b16 %v4563
        %v4628 = vpack.c.b16 %v4597, %v4596
        %v4629 = vpack.c.b16 %v4599, %v4598
        %v4630 = vpack.c.b16 %v4601, %v4600
        %v4631 = vpack.c.b16 %v4603, %v4602
        %v4632 = vpack.c.b16 %v4605, %v4604
        %v4633 = vpack.c.b16 %v4607, %v4606
        %v4634 = vpack.c.b16 %v4609, %v4608
        %v4635 = vpack.c.b16 %v4611, %v4610
        %v4636 = vpack.c.b16 %v4613, %v4612
        %v4637 = vpack.c.b16 %v4615, %v4614
        %v4638 = vpack.c.b16 %v4617, %v4616
        %v4639 = vpack.c.b16 %v4619, %v4618
        %v4640 = vpack.c.b16 %v4621, %v4620
        %v4641 = vpack.c.b16 %v4623, %v4622
        %v4642 = vpack.c.b16 %v4625, %v4624
        %v4643 = vpack.c.b16 %v4627, %v4626
        %4660 = vmatprep.subr.bf16.mxu0 0
        %4661 = vmatpush1.bf16.msra.mxu0 %v4628
        %4662 = vmatprep.subr.bf16.mxu0 0
        %4663 = vmatpush1.bf16.msra.mxu0 %v4629
        %4664 = vmatprep.subr.bf16.mxu0 0
        %4665 = vmatpush1.bf16.msra.mxu0 %v4630
        %4666 = vmatprep.subr.bf16.mxu0 0
        %4667 = vmatpush1.bf16.msra.mxu0 %v4631
        %4668 = vmatprep.subr.bf16.mxu0 0
        %4669 = vmatpush1.bf16.msra.mxu0 %v4632
        %4670 = vmatprep.subr.bf16.mxu0 0
        %4671 = vmatpush1.bf16.msra.mxu0 %v4633
        %4672 = vmatprep.subr.bf16.mxu0 0
        %4673 = vmatpush1.bf16.msra.mxu0 %v4634
        %4674 = vmatprep.subr.bf16.mxu0 0
        %4675 = vmatpush1.bf16.msra.mxu0 %v4635
        %4676 = vmatprep.subr.bf16.mxu0 0
        %4677 = vmatpush1.bf16.msra.mxu0 %v4636
        %4678 = vmatprep.subr.bf16.mxu0 0
        %4679 = vmatpush1.bf16.msra.mxu0 %v4637
        %4680 = vmatprep.subr.bf16.mxu0 0
        %4681 = vmatpush1.bf16.msra.mxu0 %v4638
        %4682 = vmatprep.subr.bf16.mxu0 0
        %4683 = vmatpush1.bf16.msra.mxu0 %v4639
        %4684 = vmatprep.subr.bf16.mxu0 0
        %4685 = vmatpush1.bf16.msra.mxu0 %v4640
        %4686 = vmatprep.subr.bf16.mxu0 0
        %4687 = vmatpush1.bf16.msra.mxu0 %v4641
        %4688 = vmatprep.subr.bf16.mxu0 0
        %4689 = vmatpush1.bf16.msra.mxu0 %v4642
        %4690 = vmatprep.subr.bf16.mxu0 0
        %4691 = vmatpush1.bf16.msra.mxu0 %v4643
        %4692 = vmatprep.mubr.bf16.mxu0 %v363
        %4693 = vmatmul.mubr.bf16.gmra.mrb[0].mxu0 %v362
        %v4694 = vpop.f32.mrb[0].mxu0
        %v4695 = vadd.f32 0.0, %v4694
        %v4696 = vpop.f32.mrb[0].mxu0
        %v4697 = vpop.f32.mrb[0].mxu0
        %v4698 = vpop.f32.mrb[0].mxu0
        %4699 = vdwg.mxu0
        %v4700 = vadd.f32 %v4530, %v4695
        %s4701 = scalar_lea.vmem %s186, 3200 [#allocation6]
        %v4702 = vld [vmem:[%s4701] sm:$0xf]
        %v4703 = vld [vmem:[%s4701 + $0x4] sm:$0xf]
        %v4704 = vld [vmem:[%s4701 + $0x8] sm:$0xf]
        %v4705 = vld [vmem:[%s4701 + $0xc] sm:$0xf]
        %v4706 = vld [vmem:[%s4701 + $0x10] sm:$0xf]
        %v4707 = vld [vmem:[%s4701 + $0x14] sm:$0xf]
        %v4708 = vld [vmem:[%s4701 + $0x18] sm:$0xf]
        %v4709 = vld [vmem:[%s4701 + $0x1c] sm:$0xf]
        %v4710 = vld [vmem:[%s4701 + $0x20] sm:$0xf]
        %v4711 = vld [vmem:[%s4701 + $0x24] sm:$0xf]
        %v4712 = vld [vmem:[%s4701 + $0x28] sm:$0xf]
        %v4713 = vld [vmem:[%s4701 + $0x2c] sm:$0xf]
        %v4714 = vld [vmem:[%s4701 + $0x30] sm:$0xf]
        %v4715 = vld [vmem:[%s4701 + $0x34] sm:$0xf]
        %v4716 = vld [vmem:[%s4701 + $0x38] sm:$0xf]
        %v4717 = vld [vmem:[%s4701 + $0x3c] sm:$0xf]
        %v4718 = vld [vmem:[%s4701 + $0x40] sm:$0xf]
        %v4719 = vld [vmem:[%s4701 + $0x44] sm:$0xf]
        %v4720 = vld [vmem:[%s4701 + $0x48] sm:$0xf]
        %v4721 = vld [vmem:[%s4701 + $0x4c] sm:$0xf]
        %v4722 = vld [vmem:[%s4701 + $0x50] sm:$0xf]
        %v4723 = vld [vmem:[%s4701 + $0x54] sm:$0xf]
        %v4724 = vld [vmem:[%s4701 + $0x58] sm:$0xf]
        %v4725 = vld [vmem:[%s4701 + $0x5c] sm:$0xf]
        %v4726 = vld [vmem:[%s4701 + $0x60] sm:$0xf]
        %v4727 = vld [vmem:[%s4701 + $0x64] sm:$0xf]
        %v4728 = vld [vmem:[%s4701 + $0x68] sm:$0xf]
        %v4729 = vld [vmem:[%s4701 + $0x6c] sm:$0xf]
        %v4730 = vld [vmem:[%s4701 + $0x70] sm:$0xf]
        %v4731 = vld [vmem:[%s4701 + $0x74] sm:$0xf]
        %v4732 = vld [vmem:[%s4701 + $0x78] sm:$0xf]
        %v4733 = vld [vmem:[%s4701 + $0x7c] sm:$0xf]
        %v4736 = vrot.slane %v362, 1
        %v4737 = vrot.slane %v363, 1
        %v4772 = vunpack.c.l.b16 %v4702
        %v4773 = vunpack.c.l.b16 %v4703
        %v4774 = vunpack.c.l.b16 %v4704
        %v4775 = vunpack.c.l.b16 %v4705
        %v4776 = vunpack.c.l.b16 %v4706
        %v4777 = vunpack.c.l.b16 %v4707
        %v4778 = vunpack.c.l.b16 %v4708
        %v4779 = vunpack.c.l.b16 %v4709
        %v4780 = vunpack.c.l.b16 %v4710
        %v4781 = vunpack.c.l.b16 %v4711
        %v4782 = vunpack.c.l.b16 %v4712
        %v4783 = vunpack.c.l.b16 %v4713
        %v4784 = vunpack.c.l.b16 %v4714
        %v4785 = vunpack.c.l.b16 %v4715
        %v4786 = vunpack.c.l.b16 %v4716
        %v4787 = vunpack.c.l.b16 %v4717
        %v4788 = vunpack.c.l.b16 %v4718
        %v4789 = vunpack.c.l.b16 %v4719
        %v4790 = vunpack.c.l.b16 %v4720
        %v4791 = vunpack.c.l.b16 %v4721
        %v4792 = vunpack.c.l.b16 %v4722
        %v4793 = vunpack.c.l.b16 %v4723
        %v4794 = vunpack.c.l.b16 %v4724
        %v4795 = vunpack.c.l.b16 %v4725
        %v4796 = vunpack.c.l.b16 %v4726
        %v4797 = vunpack.c.l.b16 %v4727
        %v4798 = vunpack.c.l.b16 %v4728
        %v4799 = vunpack.c.l.b16 %v4729
        %v4800 = vunpack.c.l.b16 %v4730
        %v4801 = vunpack.c.l.b16 %v4731
        %v4802 = vunpack.c.l.b16 %v4732
        %v4803 = vunpack.c.l.b16 %v4733
        %v4804 = vpack.c.b16 %v4773, %v4772
        %v4805 = vpack.c.b16 %v4775, %v4774
        %v4806 = vpack.c.b16 %v4777, %v4776
        %v4807 = vpack.c.b16 %v4779, %v4778
        %v4808 = vpack.c.b16 %v4781, %v4780
        %v4809 = vpack.c.b16 %v4783, %v4782
        %v4810 = vpack.c.b16 %v4785, %v4784
        %v4811 = vpack.c.b16 %v4787, %v4786
        %v4812 = vpack.c.b16 %v4789, %v4788
        %v4813 = vpack.c.b16 %v4791, %v4790
        %v4814 = vpack.c.b16 %v4793, %v4792
        %v4815 = vpack.c.b16 %v4795, %v4794
        %v4816 = vpack.c.b16 %v4797, %v4796
        %v4817 = vpack.c.b16 %v4799, %v4798
        %v4818 = vpack.c.b16 %v4801, %v4800
        %v4819 = vpack.c.b16 %v4803, %v4802
        %4836 = vmatprep.subr.bf16.mxu0 0
        %4837 = vmatpush1.bf16.msra.mxu0 %v4804
        %4838 = vmatprep.subr.bf16.mxu0 0
        %4839 = vmatpush1.bf16.msra.mxu0 %v4805
        %4840 = vmatprep.subr.bf16.mxu0 0
        %4841 = vmatpush1.bf16.msra.mxu0 %v4806
        %4842 = vmatprep.subr.bf16.mxu0 0
        %4843 = vmatpush1.bf16.msra.mxu0 %v4807
        %4844 = vmatprep.subr.bf16.mxu0 0
        %4845 = vmatpush1.bf16.msra.mxu0 %v4808
        %4846 = vmatprep.subr.bf16.mxu0 0
        %4847 = vmatpush1.bf16.msra.mxu0 %v4809
        %4848 = vmatprep.subr.bf16.mxu0 0
        %4849 = vmatpush1.bf16.msra.mxu0 %v4810
        %4850 = vmatprep.subr.bf16.mxu0 0
        %4851 = vmatpush1.bf16.msra.mxu0 %v4811
        %4852 = vmatprep.subr.bf16.mxu0 0
        %4853 = vmatpush1.bf16.msra.mxu0 %v4812
        %4854 = vmatprep.subr.bf16.mxu0 0
        %4855 = vmatpush1.bf16.msra.mxu0 %v4813
        %4856 = vmatprep.subr.bf16.mxu0 0
        %4857 = vmatpush1.bf16.msra.mxu0 %v4814
        %4858 = vmatprep.subr.bf16.mxu0 0
        %4859 = vmatpush1.bf16.msra.mxu0 %v4815
        %4860 = vmatprep.subr.bf16.mxu0 0
        %4861 = vmatpush1.bf16.msra.mxu0 %v4816
        %4862 = vmatprep.subr.bf16.mxu0 0
        %4863 = vmatpush1.bf16.msra.mxu0 %v4817
        %4864 = vmatprep.subr.bf16.mxu0 0
        %4865 = vmatpush1.bf16.msra.mxu0 %v4818
        %4866 = vmatprep.subr.bf16.mxu0 0
        %4867 = vmatpush1.bf16.msra.mxu0 %v4819
        %4868 = vmatprep.mubr.bf16.mxu0 %v4737
        %4869 = vmatmul.mubr.bf16.gmra.mrb[0].mxu0 %v4736
        %v4870 = vpop.f32.mrb[0].mxu0
        %v4871 = vadd.f32 0.0, %v4870
        %v4872 = vpop.f32.mrb[0].mxu0
        %v4873 = vpop.f32.mrb[0].mxu0
        %v4874 = vpop.f32.mrb[0].mxu0
        %4875 = vdwg.mxu0
        %v4876 = vadd.f32 %v4700, %v4871
        %s4877 = scalar_lea.vmem %s186, 3328 [#allocation6]
        %v4878 = vld [vmem:[%s4877] sm:$0xf]
        %v4879 = vld [vmem:[%s4877 + $0x4] sm:$0xf]
        %v4880 = vld [vmem:[%s4877 + $0x8] sm:$0xf]
        %v4881 = vld [vmem:[%s4877 + $0xc] sm:$0xf]
        %v4882 = vld [vmem:[%s4877 + $0x10] sm:$0xf]
        %v4883 = vld [vmem:[%s4877 + $0x14] sm:$0xf]
        %v4884 = vld [vmem:[%s4877 + $0x18] sm:$0xf]
        %v4885 = vld [vmem:[%s4877 + $0x1c] sm:$0xf]
        %v4886 = vld [vmem:[%s4877 + $0x20] sm:$0xf]
        %v4887 = vld [vmem:[%s4877 + $0x24] sm:$0xf]
        %v4888 = vld [vmem:[%s4877 + $0x28] sm:$0xf]
        %v4889 = vld [vmem:[%s4877 + $0x2c] sm:$0xf]
        %v4890 = vld [vmem:[%s4877 + $0x30] sm:$0xf]
        %v4891 = vld [vmem:[%s4877 + $0x34] sm:$0xf]
        %v4892 = vld [vmem:[%s4877 + $0x38] sm:$0xf]
        %v4893 = vld [vmem:[%s4877 + $0x3c] sm:$0xf]
        %v4894 = vld [vmem:[%s4877 + $0x40] sm:$0xf]
        %v4895 = vld [vmem:[%s4877 + $0x44] sm:$0xf]
        %v4896 = vld [vmem:[%s4877 + $0x48] sm:$0xf]
        %v4897 = vld [vmem:[%s4877 + $0x4c] sm:$0xf]
        %v4898 = vld [vmem:[%s4877 + $0x50] sm:$0xf]
        %v4899 = vld [vmem:[%s4877 + $0x54] sm:$0xf]
        %v4900 = vld [vmem:[%s4877 + $0x58] sm:$0xf]
        %v4901 = vld [vmem:[%s4877 + $0x5c] sm:$0xf]
        %v4902 = vld [vmem:[%s4877 + $0x60] sm:$0xf]
        %v4903 = vld [vmem:[%s4877 + $0x64] sm:$0xf]
        %v4904 = vld [vmem:[%s4877 + $0x68] sm:$0xf]
        %v4905 = vld [vmem:[%s4877 + $0x6c] sm:$0xf]
        %v4906 = vld [vmem:[%s4877 + $0x70] sm:$0xf]
        %v4907 = vld [vmem:[%s4877 + $0x74] sm:$0xf]
        %v4908 = vld [vmem:[%s4877 + $0x78] sm:$0xf]
        %v4909 = vld [vmem:[%s4877 + $0x7c] sm:$0xf]
        %v4910 = vrot.slane %v362, 2
        %v4911 = vrot.slane %v363, 2
        %v4946 = vunpack.c.l.b16 %v4878
        %v4947 = vunpack.c.l.b16 %v4879
        %v4948 = vunpack.c.l.b16 %v4880
        %v4949 = vunpack.c.l.b16 %v4881
        %v4950 = vunpack.c.l.b16 %v4882
        %v4951 = vunpack.c.l.b16 %v4883
        %v4952 = vunpack.c.l.b16 %v4884
        %v4953 = vunpack.c.l.b16 %v4885
        %v4954 = vunpack.c.l.b16 %v4886
        %v4955 = vunpack.c.l.b16 %v4887
        %v4956 = vunpack.c.l.b16 %v4888
        %v4957 = vunpack.c.l.b16 %v4889
        %v4958 = vunpack.c.l.b16 %v4890
        %v4959 = vunpack.c.l.b16 %v4891
        %v4960 = vunpack.c.l.b16 %v4892
        %v4961 = vunpack.c.l.b16 %v4893
        %v4962 = vunpack.c.l.b16 %v4894
        %v4963 = vunpack.c.l.b16 %v4895
        %v4964 = vunpack.c.l.b16 %v4896
        %v4965 = vunpack.c.l.b16 %v4897
        %v4966 = vunpack.c.l.b16 %v4898
        %v4967 = vunpack.c.l.b16 %v4899
        %v4968 = vunpack.c.l.b16 %v4900
        %v4969 = vunpack.c.l.b16 %v4901
        %v4970 = vunpack.c.l.b16 %v4902
        %v4971 = vunpack.c.l.b16 %v4903
        %v4972 = vunpack.c.l.b16 %v4904
        %v4973 = vunpack.c.l.b16 %v4905
        %v4974 = vunpack.c.l.b16 %v4906
        %v4975 = vunpack.c.l.b16 %v4907
        %v4976 = vunpack.c.l.b16 %v4908
        %v4977 = vunpack.c.l.b16 %v4909
        %v4978 = vpack.c.b16 %v4947, %v4946
        %v4979 = vpack.c.b16 %v4949, %v4948
        %v4980 = vpack.c.b16 %v4951, %v4950
        %v4981 = vpack.c.b16 %v4953, %v4952
        %v4982 = vpack.c.b16 %v4955, %v4954
        %v4983 = vpack.c.b16 %v4957, %v4956
        %v4984 = vpack.c.b16 %v4959, %v4958
        %v4985 = vpack.c.b16 %v4961, %v4960
        %v4986 = vpack.c.b16 %v4963, %v4962
        %v4987 = vpack.c.b16 %v4965, %v4964
        %v4988 = vpack.c.b16 %v4967, %v4966
        %v4989 = vpack.c.b16 %v4969, %v4968
        %v4990 = vpack.c.b16 %v4971, %v4970
        %v4991 = vpack.c.b16 %v4973, %v4972
        %v4992 = vpack.c.b16 %v4975, %v4974
        %v4993 = vpack.c.b16 %v4977, %v4976
        %5010 = vmatprep.subr.bf16.mxu0 0
        %5011 = vmatpush1.bf16.msra.mxu0 %v4978
        %5012 = vmatprep.subr.bf16.mxu0 0
        %5013 = vmatpush1.bf16.msra.mxu0 %v4979
        %5014 = vmatprep.subr.bf16.mxu0 0
        %5015 = vmatpush1.bf16.msra.mxu0 %v4980
        %5016 = vmatprep.subr.bf16.mxu0 0
        %5017 = vmatpush1.bf16.msra.mxu0 %v4981
        %5018 = vmatprep.subr.bf16.mxu0 0
        %5019 = vmatpush1.bf16.msra.mxu0 %v4982
        %5020 = vmatprep.subr.bf16.mxu0 0
        %5021 = vmatpush1.bf16.msra.mxu0 %v4983
        %5022 = vmatprep.subr.bf16.mxu0 0
        %5023 = vmatpush1.bf16.msra.mxu0 %v4984
        %5024 = vmatprep.subr.bf16.mxu0 0
        %5025 = vmatpush1.bf16.msra.mxu0 %v4985
        %5026 = vmatprep.subr.bf16.mxu0 0
        %5027 = vmatpush1.bf16.msra.mxu0 %v4986
        %5028 = vmatprep.subr.bf16.mxu0 0
        %5029 = vmatpush1.bf16.msra.mxu0 %v4987
        %5030 = vmatprep.subr.bf16.mxu0 0
        %5031 = vmatpush1.bf16.msra.mxu0 %v4988
        %5032 = vmatprep.subr.bf16.mxu0 0
        %5033 = vmatpush1.bf16.msra.mxu0 %v4989
        %5034 = vmatprep.subr.bf16.mxu0 0
        %5035 = vmatpush1.bf16.msra.mxu0 %v4990
        %5036 = vmatprep.subr.bf16.mxu0 0
        %5037 = vmatpush1.bf16.msra.mxu0 %v4991
        %5038 = vmatprep.subr.bf16.mxu0 0
        %5039 = vmatpush1.bf16.msra.mxu0 %v4992
        %5040 = vmatprep.subr.bf16.mxu0 0
        %5041 = vmatpush1.bf16.msra.mxu0 %v4993
        %5042 = vmatprep.mubr.bf16.mxu0 %v4911
        %5043 = vmatmul.mubr.bf16.gmra.mrb[0].mxu0 %v4910
        %v5044 = vpop.f32.mrb[0].mxu0
        %v5045 = vadd.f32 0.0, %v5044
        %v5046 = vpop.f32.mrb[0].mxu0
        %v5047 = vpop.f32.mrb[0].mxu0
        %v5048 = vpop.f32.mrb[0].mxu0
        %5049 = vdwg.mxu0
        %v5050 = vadd.f32 %v4876, %v5045
        %s5051 = scalar_lea.vmem %s186, 3456 [#allocation6]
        %v5052 = vld [vmem:[%s5051] sm:$0xf]
        %v5053 = vld [vmem:[%s5051 + $0x4] sm:$0xf]
        %v5054 = vld [vmem:[%s5051 + $0x8] sm:$0xf]
        %v5055 = vld [vmem:[%s5051 + $0xc] sm:$0xf]
        %v5056 = vld [vmem:[%s5051 + $0x10] sm:$0xf]
        %v5057 = vld [vmem:[%s5051 + $0x14] sm:$0xf]
        %v5058 = vld [vmem:[%s5051 + $0x18] sm:$0xf]
        %v5059 = vld [vmem:[%s5051 + $0x1c] sm:$0xf]
        %v5060 = vld [vmem:[%s5051 + $0x20] sm:$0xf]
        %v5061 = vld [vmem:[%s5051 + $0x24] sm:$0xf]
        %v5062 = vld [vmem:[%s5051 + $0x28] sm:$0xf]
        %v5063 = vld [vmem:[%s5051 + $0x2c] sm:$0xf]
        %v5064 = vld [vmem:[%s5051 + $0x30] sm:$0xf]
        %v5065 = vld [vmem:[%s5051 + $0x34] sm:$0xf]
        %v5066 = vld [vmem:[%s5051 + $0x38] sm:$0xf]
        %v5067 = vld [vmem:[%s5051 + $0x3c] sm:$0xf]
        %v5068 = vld [vmem:[%s5051 + $0x40] sm:$0xf]
        %v5069 = vld [vmem:[%s5051 + $0x44] sm:$0xf]
        %v5070 = vld [vmem:[%s5051 + $0x48] sm:$0xf]
        %v5071 = vld [vmem:[%s5051 + $0x4c] sm:$0xf]
        %v5072 = vld [vmem:[%s5051 + $0x50] sm:$0xf]
        %v5073 = vld [vmem:[%s5051 + $0x54] sm:$0xf]
        %v5074 = vld [vmem:[%s5051 + $0x58] sm:$0xf]
        %v5075 = vld [vmem:[%s5051 + $0x5c] sm:$0xf]
        %v5076 = vld [vmem:[%s5051 + $0x60] sm:$0xf]
        %v5077 = vld [vmem:[%s5051 + $0x64] sm:$0xf]
        %v5078 = vld [vmem:[%s5051 + $0x68] sm:$0xf]
        %v5079 = vld [vmem:[%s5051 + $0x6c] sm:$0xf]
        %v5080 = vld [vmem:[%s5051 + $0x70] sm:$0xf]
        %v5081 = vld [vmem:[%s5051 + $0x74] sm:$0xf]
        %v5082 = vld [vmem:[%s5051 + $0x78] sm:$0xf]
        %v5083 = vld [vmem:[%s5051 + $0x7c] sm:$0xf]
        %v5084 = vrot.slane %v362, 3
        %v5085 = vrot.slane %v363, 3
        %v5120 = vunpack.c.l.b16 %v5052
        %v5121 = vunpack.c.l.b16 %v5053
        %v5122 = vunpack.c.l.b16 %v5054
        %v5123 = vunpack.c.l.b16 %v5055
        %v5124 = vunpack.c.l.b16 %v5056
        %v5125 = vunpack.c.l.b16 %v5057
        %v5126 = vunpack.c.l.b16 %v5058
        %v5127 = vunpack.c.l.b16 %v5059
        %v5128 = vunpack.c.l.b16 %v5060
        %v5129 = vunpack.c.l.b16 %v5061
        %v5130 = vunpack.c.l.b16 %v5062
        %v5131 = vunpack.c.l.b16 %v5063
        %v5132 = vunpack.c.l.b16 %v5064
        %v5133 = vunpack.c.l.b16 %v5065
        %v5134 = vunpack.c.l.b16 %v5066
        %v5135 = vunpack.c.l.b16 %v5067
        %v5136 = vunpack.c.l.b16 %v5068
        %v5137 = vunpack.c.l.b16 %v5069
        %v5138 = vunpack.c.l.b16 %v5070
        %v5139 = vunpack.c.l.b16 %v5071
        %v5140 = vunpack.c.l.b16 %v5072
        %v5141 = vunpack.c.l.b16 %v5073
        %v5142 = vunpack.c.l.b16 %v5074
        %v5143 = vunpack.c.l.b16 %v5075
        %v5144 = vunpack.c.l.b16 %v5076
        %v5145 = vunpack.c.l.b16 %v5077
        %v5146 = vunpack.c.l.b16 %v5078
        %v5147 = vunpack.c.l.b16 %v5079
        %v5148 = vunpack.c.l.b16 %v5080
        %v5149 = vunpack.c.l.b16 %v5081
        %v5150 = vunpack.c.l.b16 %v5082
        %v5151 = vunpack.c.l.b16 %v5083
        %v5152 = vpack.c.b16 %v5121, %v5120
        %v5153 = vpack.c.b16 %v5123, %v5122
        %v5154 = vpack.c.b16 %v5125, %v5124
        %v5155 = vpack.c.b16 %v5127, %v5126
        %v5156 = vpack.c.b16 %v5129, %v5128
        %v5157 = vpack.c.b16 %v5131, %v5130
        %v5158 = vpack.c.b16 %v5133, %v5132
        %v5159 = vpack.c.b16 %v5135, %v5134
        %v5160 = vpack.c.b16 %v5137, %v5136
        %v5161 = vpack.c.b16 %v5139, %v5138
        %v5162 = vpack.c.b16 %v5141, %v5140
        %v5163 = vpack.c.b16 %v5143, %v5142
        %v5164 = vpack.c.b16 %v5145, %v5144
        %v5165 = vpack.c.b16 %v5147, %v5146
        %v5166 = vpack.c.b16 %v5149, %v5148
        %v5167 = vpack.c.b16 %v5151, %v5150
        %5184 = vmatprep.subr.bf16.mxu0 0
        %5185 = vmatpush1.bf16.msra.mxu0 %v5152
        %5186 = vmatprep.subr.bf16.mxu0 0
        %5187 = vmatpush1.bf16.msra.mxu0 %v5153
        %5188 = vmatprep.subr.bf16.mxu0 0
        %5189 = vmatpush1.bf16.msra.mxu0 %v5154
        %5190 = vmatprep.subr.bf16.mxu0 0
        %5191 = vmatpush1.bf16.msra.mxu0 %v5155
        %5192 = vmatprep.subr.bf16.mxu0 0
        %5193 = vmatpush1.bf16.msra.mxu0 %v5156
        %5194 = vmatprep.subr.bf16.mxu0 0
        %5195 = vmatpush1.bf16.msra.mxu0 %v5157
        %5196 = vmatprep.subr.bf16.mxu0 0
        %5197 = vmatpush1.bf16.msra.mxu0 %v5158
        %5198 = vmatprep.subr.bf16.mxu0 0
        %5199 = vmatpush1.bf16.msra.mxu0 %v5159
        %5200 = vmatprep.subr.bf16.mxu0 0
        %5201 = vmatpush1.bf16.msra.mxu0 %v5160
        %5202 = vmatprep.subr.bf16.mxu0 0
        %5203 = vmatpush1.bf16.msra.mxu0 %v5161
        %5204 = vmatprep.subr.bf16.mxu0 0
        %5205 = vmatpush1.bf16.msra.mxu0 %v5162
        %5206 = vmatprep.subr.bf16.mxu0 0
        %5207 = vmatpush1.bf16.msra.mxu0 %v5163
        %5208 = vmatprep.subr.bf16.mxu0 0
        %5209 = vmatpush1.bf16.msra.mxu0 %v5164
        %5210 = vmatprep.subr.bf16.mxu0 0
        %5211 = vmatpush1.bf16.msra.mxu0 %v5165
        %5212 = vmatprep.subr.bf16.mxu0 0
        %5213 = vmatpush1.bf16.msra.mxu0 %v5166
        %5214 = vmatprep.subr.bf16.mxu0 0
        %5215 = vmatpush1.bf16.msra.mxu0 %v5167
        %5216 = vmatprep.mubr.bf16.mxu0 %v5085
        %5217 = vmatmul.mubr.bf16.gmra.mrb[0].mxu0 %v5084
        %v5218 = vpop.f32.mrb[0].mxu0
        %v5219 = vadd.f32 0.0, %v5218
        %v5220 = vpop.f32.mrb[0].mxu0
        %v5221 = vpop.f32.mrb[0].mxu0
        %v5222 = vpop.f32.mrb[0].mxu0
        %5223 = vdwg.mxu0
        %v5224 = vadd.f32 %v5050, %v5219
        %s5225 = scalar_lea.vmem %s186, 3584 [#allocation6]
        %v5226 = vld [vmem:[%s5225] sm:$0xf]
        %v5227 = vld [vmem:[%s5225 + $0x4] sm:$0xf]
        %v5228 = vld [vmem:[%s5225 + $0x8] sm:$0xf]
        %v5229 = vld [vmem:[%s5225 + $0xc] sm:$0xf]
        %v5230 = vld [vmem:[%s5225 + $0x10] sm:$0xf]
        %v5231 = vld [vmem:[%s5225 + $0x14] sm:$0xf]
        %v5232 = vld [vmem:[%s5225 + $0x18] sm:$0xf]
        %v5233 = vld [vmem:[%s5225 + $0x1c] sm:$0xf]
        %v5234 = vld [vmem:[%s5225 + $0x20] sm:$0xf]
        %v5235 = vld [vmem:[%s5225 + $0x24] sm:$0xf]
        %v5236 = vld [vmem:[%s5225 + $0x28] sm:$0xf]
        %v5237 = vld [vmem:[%s5225 + $0x2c] sm:$0xf]
        %v5238 = vld [vmem:[%s5225 + $0x30] sm:$0xf]
        %v5239 = vld [vmem:[%s5225 + $0x34] sm:$0xf]
        %v5240 = vld [vmem:[%s5225 + $0x38] sm:$0xf]
        %v5241 = vld [vmem:[%s5225 + $0x3c] sm:$0xf]
        %v5242 = vld [vmem:[%s5225 + $0x40] sm:$0xf]
        %v5243 = vld [vmem:[%s5225 + $0x44] sm:$0xf]
        %v5244 = vld [vmem:[%s5225 + $0x48] sm:$0xf]
        %v5245 = vld [vmem:[%s5225 + $0x4c] sm:$0xf]
        %v5246 = vld [vmem:[%s5225 + $0x50] sm:$0xf]
        %v5247 = vld [vmem:[%s5225 + $0x54] sm:$0xf]
        %v5248 = vld [vmem:[%s5225 + $0x58] sm:$0xf]
        %v5249 = vld [vmem:[%s5225 + $0x5c] sm:$0xf]
        %v5250 = vld [vmem:[%s5225 + $0x60] sm:$0xf]
        %v5251 = vld [vmem:[%s5225 + $0x64] sm:$0xf]
        %v5252 = vld [vmem:[%s5225 + $0x68] sm:$0xf]
        %v5253 = vld [vmem:[%s5225 + $0x6c] sm:$0xf]
        %v5254 = vld [vmem:[%s5225 + $0x70] sm:$0xf]
        %v5255 = vld [vmem:[%s5225 + $0x74] sm:$0xf]
        %v5256 = vld [vmem:[%s5225 + $0x78] sm:$0xf]
        %v5257 = vld [vmem:[%s5225 + $0x7c] sm:$0xf]
        %v5258 = vrot.slane %v362, 4
        %v5259 = vrot.slane %v363, 4
        %v5294 = vunpack.c.l.b16 %v5226
        %v5295 = vunpack.c.l.b16 %v5227
        %v5296 = vunpack.c.l.b16 %v5228
        %v5297 = vunpack.c.l.b16 %v5229
        %v5298 = vunpack.c.l.b16 %v5230
        %v5299 = vunpack.c.l.b16 %v5231
        %v5300 = vunpack.c.l.b16 %v5232
        %v5301 = vunpack.c.l.b16 %v5233
        %v5302 = vunpack.c.l.b16 %v5234
        %v5303 = vunpack.c.l.b16 %v5235
        %v5304 = vunpack.c.l.b16 %v5236
        %v5305 = vunpack.c.l.b16 %v5237
        %v5306 = vunpack.c.l.b16 %v5238
        %v5307 = vunpack.c.l.b16 %v5239
        %v5308 = vunpack.c.l.b16 %v5240
        %v5309 = vunpack.c.l.b16 %v5241
        %v5310 = vunpack.c.l.b16 %v5242
        %v5311 = vunpack.c.l.b16 %v5243
        %v5312 = vunpack.c.l.b16 %v5244
        %v5313 = vunpack.c.l.b16 %v5245
        %v5314 = vunpack.c.l.b16 %v5246
        %v5315 = vunpack.c.l.b16 %v5247
        %v5316 = vunpack.c.l.b16 %v5248
        %v5317 = vunpack.c.l.b16 %v5249
        %v5318 = vunpack.c.l.b16 %v5250
        %v5319 = vunpack.c.l.b16 %v5251
        %v5320 = vunpack.c.l.b16 %v5252
        %v5321 = vunpack.c.l.b16 %v5253
        %v5322 = vunpack.c.l.b16 %v5254
        %v5323 = vunpack.c.l.b16 %v5255
        %v5324 = vunpack.c.l.b16 %v5256
        %v5325 = vunpack.c.l.b16 %v5257
        %v5326 = vpack.c.b16 %v5295, %v5294
        %v5327 = vpack.c.b16 %v5297, %v5296
        %v5328 = vpack.c.b16 %v5299, %v5298
        %v5329 = vpack.c.b16 %v5301, %v5300
        %v5330 = vpack.c.b16 %v5303, %v5302
        %v5331 = vpack.c.b16 %v5305, %v5304
        %v5332 = vpack.c.b16 %v5307, %v5306
        %v5333 = vpack.c.b16 %v5309, %v5308
        %v5334 = vpack.c.b16 %v5311, %v5310
        %v5335 = vpack.c.b16 %v5313, %v5312
        %v5336 = vpack.c.b16 %v5315, %v5314
        %v5337 = vpack.c.b16 %v5317, %v5316
        %v5338 = vpack.c.b16 %v5319, %v5318
        %v5339 = vpack.c.b16 %v5321, %v5320
        %v5340 = vpack.c.b16 %v5323, %v5322
        %v5341 = vpack.c.b16 %v5325, %v5324
        %5358 = vmatprep.subr.bf16.mxu0 0
        %5359 = vmatpush1.bf16.msra.mxu0 %v5326
        %5360 = vmatprep.subr.bf16.mxu0 0
        %5361 = vmatpush1.bf16.msra.mxu0 %v5327
        %5362 = vmatprep.subr.bf16.mxu0 0
        %5363 = vmatpush1.bf16.msra.mxu0 %v5328
        %5364 = vmatprep.subr.bf16.mxu0 0
        %5365 = vmatpush1.bf16.msra.mxu0 %v5329
        %5366 = vmatprep.subr.bf16.mxu0 0
        %5367 = vmatpush1.bf16.msra.mxu0 %v5330
        %5368 = vmatprep.subr.bf16.mxu0 0
        %5369 = vmatpush1.bf16.msra.mxu0 %v5331
        %5370 = vmatprep.subr.bf16.mxu0 0
        %5371 = vmatpush1.bf16.msra.mxu0 %v5332
        %5372 = vmatprep.subr.bf16.mxu0 0
        %5373 = vmatpush1.bf16.msra.mxu0 %v5333
        %5374 = vmatprep.subr.bf16.mxu0 0
        %5375 = vmatpush1.bf16.msra.mxu0 %v5334
        %5376 = vmatprep.subr.bf16.mxu0 0
        %5377 = vmatpush1.bf16.msra.mxu0 %v5335
        %5378 = vmatprep.subr.bf16.mxu0 0
        %5379 = vmatpush1.bf16.msra.mxu0 %v5336
        %5380 = vmatprep.subr.bf16.mxu0 0
        %5381 = vmatpush1.bf16.msra.mxu0 %v5337
        %5382 = vmatprep.subr.bf16.mxu0 0
        %5383 = vmatpush1.bf16.msra.mxu0 %v5338
        %5384 = vmatprep.subr.bf16.mxu0 0
        %5385 = vmatpush1.bf16.msra.mxu0 %v5339
        %5386 = vmatprep.subr.bf16.mxu0 0
        %5387 = vmatpush1.bf16.msra.mxu0 %v5340
        %5388 = vmatprep.subr.bf16.mxu0 0
        %5389 = vmatpush1.bf16.msra.mxu0 %v5341
        %5390 = vmatprep.mubr.bf16.mxu0 %v5259
        %5391 = vmatmul.mubr.bf16.gmra.mrb[0].mxu0 %v5258
        %v5392 = vpop.f32.mrb[0].mxu0
        %v5393 = vadd.f32 0.0, %v5392
        %v5394 = vpop.f32.mrb[0].mxu0
        %v5395 = vpop.f32.mrb[0].mxu0
        %v5396 = vpop.f32.mrb[0].mxu0
        %5397 = vdwg.mxu0
        %v5398 = vadd.f32 %v5224, %v5393
        %s5399 = scalar_lea.vmem %s186, 3712 [#allocation6]
        %v5400 = vld [vmem:[%s5399] sm:$0xf]
        %v5401 = vld [vmem:[%s5399 + $0x4] sm:$0xf]
        %v5402 = vld [vmem:[%s5399 + $0x8] sm:$0xf]
        %v5403 = vld [vmem:[%s5399 + $0xc] sm:$0xf]
        %v5404 = vld [vmem:[%s5399 + $0x10] sm:$0xf]
        %v5405 = vld [vmem:[%s5399 + $0x14] sm:$0xf]
        %v5406 = vld [vmem:[%s5399 + $0x18] sm:$0xf]
        %v5407 = vld [vmem:[%s5399 + $0x1c] sm:$0xf]
        %v5408 = vld [vmem:[%s5399 + $0x20] sm:$0xf]
        %v5409 = vld [vmem:[%s5399 + $0x24] sm:$0xf]
        %v5410 = vld [vmem:[%s5399 + $0x28] sm:$0xf]
        %v5411 = vld [vmem:[%s5399 + $0x2c] sm:$0xf]
        %v5412 = vld [vmem:[%s5399 + $0x30] sm:$0xf]
        %v5413 = vld [vmem:[%s5399 + $0x34] sm:$0xf]
        %v5414 = vld [vmem:[%s5399 + $0x38] sm:$0xf]
        %v5415 = vld [vmem:[%s5399 + $0x3c] sm:$0xf]
        %v5416 = vld [vmem:[%s5399 + $0x40] sm:$0xf]
        %v5417 = vld [vmem:[%s5399 + $0x44] sm:$0xf]
        %v5418 = vld [vmem:[%s5399 + $0x48] sm:$0xf]
        %v5419 = vld [vmem:[%s5399 + $0x4c] sm:$0xf]
        %v5420 = vld [vmem:[%s5399 + $0x50] sm:$0xf]
        %v5421 = vld [vmem:[%s5399 + $0x54] sm:$0xf]
        %v5422 = vld [vmem:[%s5399 + $0x58] sm:$0xf]
        %v5423 = vld [vmem:[%s5399 + $0x5c] sm:$0xf]
        %v5424 = vld [vmem:[%s5399 + $0x60] sm:$0xf]
        %v5425 = vld [vmem:[%s5399 + $0x64] sm:$0xf]
        %v5426 = vld [vmem:[%s5399 + $0x68] sm:$0xf]
        %v5427 = vld [vmem:[%s5399 + $0x6c] sm:$0xf]
        %v5428 = vld [vmem:[%s5399 + $0x70] sm:$0xf]
        %v5429 = vld [vmem:[%s5399 + $0x74] sm:$0xf]
        %v5430 = vld [vmem:[%s5399 + $0x78] sm:$0xf]
        %v5431 = vld [vmem:[%s5399 + $0x7c] sm:$0xf]
        %v5432 = vrot.slane %v362, 5
        %v5433 = vrot.slane %v363, 5
        %v5468 = vunpack.c.l.b16 %v5400
        %v5469 = vunpack.c.l.b16 %v5401
        %v5470 = vunpack.c.l.b16 %v5402
        %v5471 = vunpack.c.l.b16 %v5403
        %v5472 = vunpack.c.l.b16 %v5404
        %v5473 = vunpack.c.l.b16 %v5405
        %v5474 = vunpack.c.l.b16 %v5406
        %v5475 = vunpack.c.l.b16 %v5407
        %v5476 = vunpack.c.l.b16 %v5408
        %v5477 = vunpack.c.l.b16 %v5409
        %v5478 = vunpack.c.l.b16 %v5410
        %v5479 = vunpack.c.l.b16 %v5411
        %v5480 = vunpack.c.l.b16 %v5412
        %v5481 = vunpack.c.l.b16 %v5413
        %v5482 = vunpack.c.l.b16 %v5414
        %v5483 = vunpack.c.l.b16 %v5415
        %v5484 = vunpack.c.l.b16 %v5416
        %v5485 = vunpack.c.l.b16 %v5417
        %v5486 = vunpack.c.l.b16 %v5418
        %v5487 = vunpack.c.l.b16 %v5419
        %v5488 = vunpack.c.l.b16 %v5420
        %v5489 = vunpack.c.l.b16 %v5421
        %v5490 = vunpack.c.l.b16 %v5422
        %v5491 = vunpack.c.l.b16 %v5423
        %v5492 = vunpack.c.l.b16 %v5424
        %v5493 = vunpack.c.l.b16 %v5425
        %v5494 = vunpack.c.l.b16 %v5426
        %v5495 = vunpack.c.l.b16 %v5427
        %v5496 = vunpack.c.l.b16 %v5428
        %v5497 = vunpack.c.l.b16 %v5429
        %v5498 = vunpack.c.l.b16 %v5430
        %v5499 = vunpack.c.l.b16 %v5431
        %v5500 = vpack.c.b16 %v5469, %v5468
        %v5501 = vpack.c.b16 %v5471, %v5470
        %v5502 = vpack.c.b16 %v5473, %v5472
        %v5503 = vpack.c.b16 %v5475, %v5474
        %v5504 = vpack.c.b16 %v5477, %v5476
        %v5505 = vpack.c.b16 %v5479, %v5478
        %v5506 = vpack.c.b16 %v5481, %v5480
        %v5507 = vpack.c.b16 %v5483, %v5482
        %v5508 = vpack.c.b16 %v5485, %v5484
        %v5509 = vpack.c.b16 %v5487, %v5486
        %v5510 = vpack.c.b16 %v5489, %v5488
        %v5511 = vpack.c.b16 %v5491, %v5490
        %v5512 = vpack.c.b16 %v5493, %v5492
        %v5513 = vpack.c.b16 %v5495, %v5494
        %v5514 = vpack.c.b16 %v5497, %v5496
        %v5515 = vpack.c.b16 %v5499, %v5498
        %5532 = vmatprep.subr.bf16.mxu0 0
        %5533 = vmatpush1.bf16.msra.mxu0 %v5500
        %5534 = vmatprep.subr.bf16.mxu0 0
        %5535 = vmatpush1.bf16.msra.mxu0 %v5501
        %5536 = vmatprep.subr.bf16.mxu0 0
        %5537 = vmatpush1.bf16.msra.mxu0 %v5502
        %5538 = vmatprep.subr.bf16.mxu0 0
        %5539 = vmatpush1.bf16.msra.mxu0 %v5503
        %5540 = vmatprep.subr.bf16.mxu0 0
        %5541 = vmatpush1.bf16.msra.mxu0 %v5504
        %5542 = vmatprep.subr.bf16.mxu0 0
        %5543 = vmatpush1.bf16.msra.mxu0 %v5505
        %5544 = vmatprep.subr.bf16.mxu0 0
        %5545 = vmatpush1.bf16.msra.mxu0 %v5506
        %5546 = vmatprep.subr.bf16.mxu0 0
        %5547 = vmatpush1.bf16.msra.mxu0 %v5507
        %5548 = vmatprep.subr.bf16.mxu0 0
        %5549 = vmatpush1.bf16.msra.mxu0 %v5508
        %5550 = vmatprep.subr.bf16.mxu0 0
        %5551 = vmatpush1.bf16.msra.mxu0 %v5509
        %5552 = vmatprep.subr.bf16.mxu0 0
        %5553 = vmatpush1.bf16.msra.mxu0 %v5510
        %5554 = vmatprep.subr.bf16.mxu0 0
        %5555 = vmatpush1.bf16.msra.mxu0 %v5511
        %5556 = vmatprep.subr.bf16.mxu0 0
        %5557 = vmatpush1.bf16.msra.mxu0 %v5512
        %5558 = vmatprep.subr.bf16.mxu0 0
        %5559 = vmatpush1.bf16.msra.mxu0 %v5513
        %5560 = vmatprep.subr.bf16.mxu0 0
        %5561 = vmatpush1.bf16.msra.mxu0 %v5514
        %5562 = vmatprep.subr.bf16.mxu0 0
        %5563 = vmatpush1.bf16.msra.mxu0 %v5515
        %5564 = vmatprep.mubr.bf16.mxu0 %v5433
        %5565 = vmatmul.mubr.bf16.gmra.mrb[0].mxu0 %v5432
        %v5566 = vpop.f32.mrb[0].mxu0
        %v5567 = vadd.f32 0.0, %v5566
        %v5568 = vpop.f32.mrb[0].mxu0
        %v5569 = vpop.f32.mrb[0].mxu0
        %v5570 = vpop.f32.mrb[0].mxu0
        %5571 = vdwg.mxu0
        %v5572 = vadd.f32 %v5398, %v5567
        %s5573 = scalar_lea.vmem %s186, 3840 [#allocation6]
        %v5574 = vld [vmem:[%s5573] sm:$0xf]
        %v5575 = vld [vmem:[%s5573 + $0x4] sm:$0xf]
        %v5576 = vld [vmem:[%s5573 + $0x8] sm:$0xf]
        %v5577 = vld [vmem:[%s5573 + $0xc] sm:$0xf]
        %v5578 = vld [vmem:[%s5573 + $0x10] sm:$0xf]
        %v5579 = vld [vmem:[%s5573 + $0x14] sm:$0xf]
        %v5580 = vld [vmem:[%s5573 + $0x18] sm:$0xf]
        %v5581 = vld [vmem:[%s5573 + $0x1c] sm:$0xf]
        %v5582 = vld [vmem:[%s5573 + $0x20] sm:$0xf]
        %v5583 = vld [vmem:[%s5573 + $0x24] sm:$0xf]
        %v5584 = vld [vmem:[%s5573 + $0x28] sm:$0xf]
        %v5585 = vld [vmem:[%s5573 + $0x2c] sm:$0xf]
        %v5586 = vld [vmem:[%s5573 + $0x30] sm:$0xf]
        %v5587 = vld [vmem:[%s5573 + $0x34] sm:$0xf]
        %v5588 = vld [vmem:[%s5573 + $0x38] sm:$0xf]
        %v5589 = vld [vmem:[%s5573 + $0x3c] sm:$0xf]
        %v5590 = vld [vmem:[%s5573 + $0x40] sm:$0xf]
        %v5591 = vld [vmem:[%s5573 + $0x44] sm:$0xf]
        %v5592 = vld [vmem:[%s5573 + $0x48] sm:$0xf]
        %v5593 = vld [vmem:[%s5573 + $0x4c] sm:$0xf]
        %v5594 = vld [vmem:[%s5573 + $0x50] sm:$0xf]
        %v5595 = vld [vmem:[%s5573 + $0x54] sm:$0xf]
        %v5596 = vld [vmem:[%s5573 + $0x58] sm:$0xf]
        %v5597 = vld [vmem:[%s5573 + $0x5c] sm:$0xf]
        %v5598 = vld [vmem:[%s5573 + $0x60] sm:$0xf]
        %v5599 = vld [vmem:[%s5573 + $0x64] sm:$0xf]
        %v5600 = vld [vmem:[%s5573 + $0x68] sm:$0xf]
        %v5601 = vld [vmem:[%s5573 + $0x6c] sm:$0xf]
        %v5602 = vld [vmem:[%s5573 + $0x70] sm:$0xf]
        %v5603 = vld [vmem:[%s5573 + $0x74] sm:$0xf]
        %v5604 = vld [vmem:[%s5573 + $0x78] sm:$0xf]
        %v5605 = vld [vmem:[%s5573 + $0x7c] sm:$0xf]
        %v5606 = vrot.slane %v362, 6
        %v5607 = vrot.slane %v363, 6
        %v5642 = vunpack.c.l.b16 %v5574
        %v5643 = vunpack.c.l.b16 %v5575
        %v5644 = vunpack.c.l.b16 %v5576
        %v5645 = vunpack.c.l.b16 %v5577
        %v5646 = vunpack.c.l.b16 %v5578
        %v5647 = vunpack.c.l.b16 %v5579
        %v5648 = vunpack.c.l.b16 %v5580
        %v5649 = vunpack.c.l.b16 %v5581
        %v5650 = vunpack.c.l.b16 %v5582
        %v5651 = vunpack.c.l.b16 %v5583
        %v5652 = vunpack.c.l.b16 %v5584
        %v5653 = vunpack.c.l.b16 %v5585
        %v5654 = vunpack.c.l.b16 %v5586
        %v5655 = vunpack.c.l.b16 %v5587
        %v5656 = vunpack.c.l.b16 %v5588
        %v5657 = vunpack.c.l.b16 %v5589
        %v5658 = vunpack.c.l.b16 %v5590
        %v5659 = vunpack.c.l.b16 %v5591
        %v5660 = vunpack.c.l.b16 %v5592
        %v5661 = vunpack.c.l.b16 %v5593
        %v5662 = vunpack.c.l.b16 %v5594
        %v5663 = vunpack.c.l.b16 %v5595
        %v5664 = vunpack.c.l.b16 %v5596
        %v5665 = vunpack.c.l.b16 %v5597
        %v5666 = vunpack.c.l.b16 %v5598
        %v5667 = vunpack.c.l.b16 %v5599
        %v5668 = vunpack.c.l.b16 %v5600
        %v5669 = vunpack.c.l.b16 %v5601
        %v5670 = vunpack.c.l.b16 %v5602
        %v5671 = vunpack.c.l.b16 %v5603
        %v5672 = vunpack.c.l.b16 %v5604
        %v5673 = vunpack.c.l.b16 %v5605
        %v5674 = vpack.c.b16 %v5643, %v5642
        %v5675 = vpack.c.b16 %v5645, %v5644
        %v5676 = vpack.c.b16 %v5647, %v5646
        %v5677 = vpack.c.b16 %v5649, %v5648
        %v5678 = vpack.c.b16 %v5651, %v5650
        %v5679 = vpack.c.b16 %v5653, %v5652
        %v5680 = vpack.c.b16 %v5655, %v5654
        %v5681 = vpack.c.b16 %v5657, %v5656
        %v5682 = vpack.c.b16 %v5659, %v5658
        %v5683 = vpack.c.b16 %v5661, %v5660
        %v5684 = vpack.c.b16 %v5663, %v5662
        %v5685 = vpack.c.b16 %v5665, %v5664
        %v5686 = vpack.c.b16 %v5667, %v5666
        %v5687 = vpack.c.b16 %v5669, %v5668
        %v5688 = vpack.c.b16 %v5671, %v5670
        %v5689 = vpack.c.b16 %v5673, %v5672
        %5706 = vmatprep.subr.bf16.mxu0 0
        %5707 = vmatpush1.bf16.msra.mxu0 %v5674
        %5708 = vmatprep.subr.bf16.mxu0 0
        %5709 = vmatpush1.bf16.msra.mxu0 %v5675
        %5710 = vmatprep.subr.bf16.mxu0 0
        %5711 = vmatpush1.bf16.msra.mxu0 %v5676
        %5712 = vmatprep.subr.bf16.mxu0 0
        %5713 = vmatpush1.bf16.msra.mxu0 %v5677
        %5714 = vmatprep.subr.bf16.mxu0 0
        %5715 = vmatpush1.bf16.msra.mxu0 %v5678
        %5716 = vmatprep.subr.bf16.mxu0 0
        %5717 = vmatpush1.bf16.msra.mxu0 %v5679
        %5718 = vmatprep.subr.bf16.mxu0 0
        %5719 = vmatpush1.bf16.msra.mxu0 %v5680
        %5720 = vmatprep.subr.bf16.mxu0 0
        %5721 = vmatpush1.bf16.msra.mxu0 %v5681
        %5722 = vmatprep.subr.bf16.mxu0 0
        %5723 = vmatpush1.bf16.msra.mxu0 %v5682
        %5724 = vmatprep.subr.bf16.mxu0 0
        %5725 = vmatpush1.bf16.msra.mxu0 %v5683
        %5726 = vmatprep.subr.bf16.mxu0 0
        %5727 = vmatpush1.bf16.msra.mxu0 %v5684
        %5728 = vmatprep.subr.bf16.mxu0 0
        %5729 = vmatpush1.bf16.msra.mxu0 %v5685
        %5730 = vmatprep.subr.bf16.mxu0 0
        %5731 = vmatpush1.bf16.msra.mxu0 %v5686
        %5732 = vmatprep.subr.bf16.mxu0 0
        %5733 = vmatpush1.bf16.msra.mxu0 %v5687
        %5734 = vmatprep.subr.bf16.mxu0 0
        %5735 = vmatpush1.bf16.msra.mxu0 %v5688
        %5736 = vmatprep.subr.bf16.mxu0 0
        %5737 = vmatpush1.bf16.msra.mxu0 %v5689
        %5738 = vmatprep.mubr.bf16.mxu0 %v5607
        %5739 = vmatmul.mubr.bf16.gmra.mrb[0].mxu0 %v5606
        %v5740 = vpop.f32.mrb[0].mxu0
        %v5741 = vadd.f32 0.0, %v5740
        %v5742 = vpop.f32.mrb[0].mxu0
        %v5743 = vpop.f32.mrb[0].mxu0
        %v5744 = vpop.f32.mrb[0].mxu0
        %5745 = vdwg.mxu0
        %v5746 = vadd.f32 %v5572, %v5741
        %s5747 = scalar_lea.vmem %s186, 3968 [#allocation6]
        %v5748 = vld [vmem:[%s5747] sm:$0xf]
        %v5749 = vld [vmem:[%s5747 + $0x4] sm:$0xf]
        %v5750 = vld [vmem:[%s5747 + $0x8] sm:$0xf]
        %v5751 = vld [vmem:[%s5747 + $0xc] sm:$0xf]
        %v5752 = vld [vmem:[%s5747 + $0x10] sm:$0xf]
        %v5753 = vld [vmem:[%s5747 + $0x14] sm:$0xf]
        %v5754 = vld [vmem:[%s5747 + $0x18] sm:$0xf]
        %v5755 = vld [vmem:[%s5747 + $0x1c] sm:$0xf]
        %v5756 = vld [vmem:[%s5747 + $0x20] sm:$0xf]
        %v5757 = vld [vmem:[%s5747 + $0x24] sm:$0xf]
        %v5758 = vld [vmem:[%s5747 + $0x28] sm:$0xf]
        %v5759 = vld [vmem:[%s5747 + $0x2c] sm:$0xf]
        %v5760 = vld [vmem:[%s5747 + $0x30] sm:$0xf]
        %v5761 = vld [vmem:[%s5747 + $0x34] sm:$0xf]
        %v5762 = vld [vmem:[%s5747 + $0x38] sm:$0xf]
        %v5763 = vld [vmem:[%s5747 + $0x3c] sm:$0xf]
        %v5764 = vld [vmem:[%s5747 + $0x40] sm:$0xf]
        %v5765 = vld [vmem:[%s5747 + $0x44] sm:$0xf]
        %v5766 = vld [vmem:[%s5747 + $0x48] sm:$0xf]
        %v5767 = vld [vmem:[%s5747 + $0x4c] sm:$0xf]
        %v5768 = vld [vmem:[%s5747 + $0x50] sm:$0xf]
        %v5769 = vld [vmem:[%s5747 + $0x54] sm:$0xf]
        %v5770 = vld [vmem:[%s5747 + $0x58] sm:$0xf]
        %v5771 = vld [vmem:[%s5747 + $0x5c] sm:$0xf]
        %v5772 = vld [vmem:[%s5747 + $0x60] sm:$0xf]
        %v5773 = vld [vmem:[%s5747 + $0x64] sm:$0xf]
        %v5774 = vld [vmem:[%s5747 + $0x68] sm:$0xf]
        %v5775 = vld [vmem:[%s5747 + $0x6c] sm:$0xf]
        %v5776 = vld [vmem:[%s5747 + $0x70] sm:$0xf]
        %v5777 = vld [vmem:[%s5747 + $0x74] sm:$0xf]
        %v5778 = vld [vmem:[%s5747 + $0x78] sm:$0xf]
        %v5779 = vld [vmem:[%s5747 + $0x7c] sm:$0xf]
        %v5780 = vrot.slane %v362, 7
        %v5781 = vrot.slane %v363, 7
        %v5816 = vunpack.c.l.b16 %v5748
        %v5817 = vunpack.c.l.b16 %v5749
        %v5818 = vunpack.c.l.b16 %v5750
        %v5819 = vunpack.c.l.b16 %v5751
        %v5820 = vunpack.c.l.b16 %v5752
        %v5821 = vunpack.c.l.b16 %v5753
        %v5822 = vunpack.c.l.b16 %v5754
        %v5823 = vunpack.c.l.b16 %v5755
        %v5824 = vunpack.c.l.b16 %v5756
        %v5825 = vunpack.c.l.b16 %v5757
        %v5826 = vunpack.c.l.b16 %v5758
        %v5827 = vunpack.c.l.b16 %v5759
        %v5828 = vunpack.c.l.b16 %v5760
        %v5829 = vunpack.c.l.b16 %v5761
        %v5830 = vunpack.c.l.b16 %v5762
        %v5831 = vunpack.c.l.b16 %v5763
        %v5832 = vunpack.c.l.b16 %v5764
        %v5833 = vunpack.c.l.b16 %v5765
        %v5834 = vunpack.c.l.b16 %v5766
        %v5835 = vunpack.c.l.b16 %v5767
        %v5836 = vunpack.c.l.b16 %v5768
        %v5837 = vunpack.c.l.b16 %v5769
        %v5838 = vunpack.c.l.b16 %v5770
        %v5839 = vunpack.c.l.b16 %v5771
        %v5840 = vunpack.c.l.b16 %v5772
        %v5841 = vunpack.c.l.b16 %v5773
        %v5842 = vunpack.c.l.b16 %v5774
        %v5843 = vunpack.c.l.b16 %v5775
        %v5844 = vunpack.c.l.b16 %v5776
        %v5845 = vunpack.c.l.b16 %v5777
        %v5846 = vunpack.c.l.b16 %v5778
        %v5847 = vunpack.c.l.b16 %v5779
        %v5848 = vpack.c.b16 %v5817, %v5816
        %v5849 = vpack.c.b16 %v5819, %v5818
        %v5850 = vpack.c.b16 %v5821, %v5820
        %v5851 = vpack.c.b16 %v5823, %v5822
        %v5852 = vpack.c.b16 %v5825, %v5824
        %v5853 = vpack.c.b16 %v5827, %v5826
        %v5854 = vpack.c.b16 %v5829, %v5828
        %v5855 = vpack.c.b16 %v5831, %v5830
        %v5856 = vpack.c.b16 %v5833, %v5832
        %v5857 = vpack.c.b16 %v5835, %v5834
        %v5858 = vpack.c.b16 %v5837, %v5836
        %v5859 = vpack.c.b16 %v5839, %v5838
        %v5860 = vpack.c.b16 %v5841, %v5840
        %v5861 = vpack.c.b16 %v5843, %v5842
        %v5862 = vpack.c.b16 %v5845, %v5844
        %v5863 = vpack.c.b16 %v5847, %v5846
        %5880 = vmatprep.subr.bf16.mxu0 0
        %5881 = vmatpush1.bf16.msra.mxu0 %v5848
        %5882 = vmatprep.subr.bf16.mxu0 0
        %5883 = vmatpush1.bf16.msra.mxu0 %v5849
        %5884 = vmatprep.subr.bf16.mxu0 0
        %5885 = vmatpush1.bf16.msra.mxu0 %v5850
        %5886 = vmatprep.subr.bf16.mxu0 0
        %5887 = vmatpush1.bf16.msra.mxu0 %v5851
        %5888 = vmatprep.subr.bf16.mxu0 0
        %5889 = vmatpush1.bf16.msra.mxu0 %v5852
        %5890 = vmatprep.subr.bf16.mxu0 0
        %5891 = vmatpush1.bf16.msra.mxu0 %v5853
        %5892 = vmatprep.subr.bf16.mxu0 0
        %5893 = vmatpush1.bf16.msra.mxu0 %v5854
        %5894 = vmatprep.subr.bf16.mxu0 0
        %5895 = vmatpush1.bf16.msra.mxu0 %v5855
        %5896 = vmatprep.subr.bf16.mxu0 0
        %5897 = vmatpush1.bf16.msra.mxu0 %v5856
        %5898 = vmatprep.subr.bf16.mxu0 0
        %5899 = vmatpush1.bf16.msra.mxu0 %v5857
        %5900 = vmatprep.subr.bf16.mxu0 0
        %5901 = vmatpush1.bf16.msra.mxu0 %v5858
        %5902 = vmatprep.subr.bf16.mxu0 0
        %5903 = vmatpush1.bf16.msra.mxu0 %v5859
        %5904 = vmatprep.subr.bf16.mxu0 0
        %5905 = vmatpush1.bf16.msra.mxu0 %v5860
        %5906 = vmatprep.subr.bf16.mxu0 0
        %5907 = vmatpush1.bf16.msra.mxu0 %v5861
        %5908 = vmatprep.subr.bf16.mxu0 0
        %5909 = vmatpush1.bf16.msra.mxu0 %v5862
        %5910 = vmatprep.subr.bf16.mxu0 0
        %5911 = vmatpush1.bf16.msra.mxu0 %v5863
        %5912 = vmatprep.mubr.bf16.mxu0 %v5781
        %5913 = vmatmul.mubr.bf16.gmra.mrb[0].mxu0 %v5780
        %v5914 = vpop.f32.mrb[0].mxu0
        %v5915 = vadd.f32 0.0, %v5914
        %v5916 = vpop.f32.mrb[0].mxu0
        %v5917 = vpop.f32.mrb[0].mxu0
        %v5918 = vpop.f32.mrb[0].mxu0
        %5919 = vdwg.mxu0
        %v5920 = vadd.f32 %v5746, %v5915
        %v5921 = vld [vmem:[#allocation2] sm:$0x3]
        %v5922 = vadd.f32 %v5921, %v5920
        %5923 = vst [vmem:[#allocation2] sm:$0x3] %v5922
        %p5924 = scmp.eq.s32.totalorder %s19, 3
        // Predicated region
        $region45: #{channel_attention_forward.1} parent=31 // pred_check
          %p5925 = pneg %p5924
        $region46: #{channel_attention_forward.1} parent=31 // pred_check_branch
          %5927 = sbr.rel (%p5925) target = $region48
        $region47: #{channel_attention_forward.1} parent=31 // pred_region
          %v5928 = vld [vmem:[#allocation2] sm:$0x3]
          %v5929 = vsub.f32 0.0, %v5928
          %v5930 = vmul.f32 %v5929, 1.442695
          %v5931 = vpow.pop %v5930
          %v5932 = vadd.f32 %v5931, 1.0
          %v5933 = vrcp.pop %v5932
          %v5934 = vmul.f32 1.0, %v5933
          %5935 = vst [vmem:[#allocation8] sm:$0x3] %v5934
        $region48: #{channel_attention_forward.1} parent=31 // pred_fallthru
          _
        // Predicated region
        $region49: #{channel_attention_forward.1} parent=31 // pred_check
          %p5936 = pneg %p105
        $region50: #{channel_attention_forward.1} parent=31 // pred_check_branch
          %5938 = sbr.rel (%p5936) target = $region52
        $region51: #{channel_attention_forward.1} parent=31 // pred_region
          %s5940 = ssub.s32 32, 32
          %5941 = vsyncadd [#allocation5], %s5940
          %s5943 = sshll.u32 [#allocation8], 4
          %s5944 = int_to_ptr.vmem [resolvable:$true] %s5943
          %5946 = dma.vmem_to_hbm [thread:$0]  %s5944, 32, %s3, [#allocation5]
        $region52: #{channel_attention_forward.1} parent=31 // pred_fallthru
          _
        // Predicated region
        $region53: #{channel_attention_forward.1} parent=31 // pred_check
          %p5947 = pneg %p105
        $region54: #{channel_attention_forward.1} parent=31 // pred_check_branch
          %5949 = sbr.rel (%p5947) target = $region56
        $region55: #{channel_attention_forward.1} parent=31 // pred_region
          %5950 = dma.done [#allocation5], 32
        $region56: #{channel_attention_forward.1} parent=31 // pred_fallthru
          _
      $region32: #{channel_attention_forward.1} parent=5 // pred_fallthru
        _
      %p5951 = scmp.le.s32.totalorder 2, %s14
      // Predicated region
      $region57: #{channel_attention_forward.1} parent=5 // pred_check
        %p5952 = pneg %p5951
      $region58: #{channel_attention_forward.1} parent=5 // pred_check_branch
        %5954 = sbr.rel (%p5952) target = $region60
      $region59: #{channel_attention_forward.1} parent=5 // pred_region
        %s5955 = ssub.s32 %s14, 2
      $region60: #{channel_attention_forward.1} parent=5 // pred_fallthru
        _
    $region6: #{channel_attention_forward.1} parent=1 // loop_footer
      %s18 = sadd.s32 1, %s14
    $region7: #{channel_attention_forward.1} parent=1 // loop_footer_branch
      %13 = sbr.rel target = $region3
    $region8: #{channel_attention_forward.1} parent=1 // loop_exit
      _
    %5956 = vsyncpa [#allocation4], 1
    %s5957 = scalar_lea.sflag [#allocation4], 1
    %5958 = vsyncpa %s5957, 1
    %5959 = vsyncpa [#allocation7], 1
    %s5960 = scalar_lea.sflag [#allocation7], 1
    %5961 = vsyncpa %s5960, 1
    %5962 = vsyncpa [#allocation5], 1
    %s5963 = scalar_lea.sflag [#allocation5], 1
    %5964 = vsyncpa %s5963, 1

</llo_original>
